<compile_context>
chip_gen: v6e
topology: v6e:2x2x1
jax: 0.10.0
libtpu: 0.0.40
codegen_flags: <defaults>
</compile_context>

<pallas_src>
import jax
import jax.numpy as jnp
from jax.experimental import pallas as pl
from jax.experimental.pallas import tpu as pltpu


def _round_up(x: int, m: int) -> int:
    return ((x + m - 1) // m) * m


def _num_tensorcores() -> int:
    """2 on v7x-class (megacore) chips, 1 on v5e/v6e.  Defaults to 1."""
    try:
        kind = jax.devices()[0].device_kind.lower()
    except Exception:
        return 1
    return 2 if "v7" in kind else 1


def _pick_tk(d_pad: int, cols: int, budget_bytes: int) -> int:
    """Largest multiple of 128 dividing `cols` whose double-buffered
    (d_pad, tk) bf16 sigma_inv tile stays under `budget_bytes`."""
    best = 128
    t = 128
    while t <= cols:
        if cols % t == 0 and 2 * d_pad * t * 2 <= budget_bytes:
            best = t
        t += 128
    return min(best, cols)


def _make_maha_kernel(tk: int, n_k: int, n_split: int):
    single_step = (n_k == 1 and n_split == 1)

    def kernel(x_ref, mu_ref, sinv_ref, out_ref, xc_ref, acc_ref):
        k = pl.program_id(1)

        @pl.when(k == 0)
        def _():
            acc_ref[...] = jnp.zeros_like(acc_ref)
            # Full-width centered latent: computed once per split, reused for
            # every column tile; bf16 LHS for the MXU dot.
            xc_ref[...] = (x_ref[...] - mu_ref[...]).astype(xc_ref.dtype)

        # (B, D) bf16 @ (D, tk) bf16 -> (B, tk); f32 accumulation on the MXU.
        t = jnp.dot(xc_ref[...], sinv_ref[...],
                    preferred_element_type=jnp.float32)

        # f32 column slice of the centered latent, read from the already
        # resident x/mu blocks (no extra input pipelines / DMA streams).
        if single_step:
            xc_col = x_ref[...] - mu_ref[...]
        else:
            col0 = pl.multiple_of((pl.program_id(0) * n_k + k) * tk, 128)
            xc_col = x_ref[:, pl.ds(col0, tk)] - mu_ref[:, pl.ds(col0, tk)]

        acc_ref[...] += jnp.sum(t * xc_col, axis=-1, keepdims=True)   # (B, 1)

        # Write the lane-width-1 output block only once per split.
        @pl.when(k == n_k - 1)
        def _():
            out_ref[...] = acc_ref[...][None, :, :]

    return kernel


def mahalanobis_distance(latent_flat: jax.Array,
                         mu: jax.Array,
                         sigma_inv_bf16: jax.Array,
                         *,
                         n_split: int | None = None) -> jax.Array:
    """latent_flat: (B, D) f32; mu: (1, D) f32; sigma_inv_bf16: (D, D) bf16.
    Returns (B, 1, 1) squared Mahalanobis distances (matches PyTorch output)."""
    B, D = latent_flat.shape

    # Pad to TPU tile alignment: lanes (128) on D, sublanes (8) on B.  Zero
    # padding is exact here: padded xc entries are 0 and contribute nothing.
    D_pad = _round_up(D, 128)
    B_pad = _round_up(B, 8)
    if D_pad != D:
        latent_flat = jnp.pad(latent_flat, ((0, 0), (0, D_pad - D)))
        mu = jnp.pad(mu, ((0, 0), (0, D_pad - D)))
        sigma_inv_bf16 = jnp.pad(sigma_inv_bf16,
                                 ((0, D_pad - D), (0, D_pad - D)))
    if B_pad != B:
        latent_flat = jnp.pad(latent_flat, ((0, B_pad - B), (0, 0)))

    # Generation-aware column split: 2 only on 2-TensorCore (v7x) chips and
    # only when each half stays lane-aligned and large enough to matter; on
    # single-core v5e/v6e the grid collapses and the wrapper sum disappears.
    if n_split is None:
        n_split = _num_tensorcores()
    if n_split != 1 and not (D_pad >= 2048 and (D_pad // n_split) % 128 == 0):
        n_split = 1
    cols_per_split = D_pad // n_split

    # Column tile as large as a v7x-safe VMEM budget allows, so n_k stays at
    # 1 for small D and the sinv DMAs stay big when D grows.
    sinv_budget = 24 * 1024 * 1024            # double-buffered sinv tiles
    tk = _pick_tk(D_pad, cols_per_split, sinv_budget)
    n_k = cols_per_split // tk
    # TODO(synk): for very large D (>= ~16K) also tile the reduction (row) dim
    #             of sigma_inv instead of keeping full-D-row blocks.

    # Explicit scoped-VMEM limit covering every resident buffer (v7x: 64 MiB
    # physical / 32 MiB scoped default).
    sinv_bytes = 2 * D_pad * tk * 2           # double-buffered bf16 tiles
    x_bytes = 2 * B_pad * D_pad * 4           # (B, D) f32 input block
    mu_bytes = 2 * D_pad * 4
    xc_bytes = B_pad * D_pad * 2              # bf16 centered-latent scratch
    small_bytes = 4 * B_pad * 128 * 4         # acc scratch + out blocks (lane-padded)
    vmem_limit = sinv_bytes + x_bytes + mu_bytes + xc_bytes + small_bytes + (4 << 20)
    vmem_limit = int(min(max(vmem_limit, 8 << 20), 64 << 20))

    partials = pl.pallas_call(
        _make_maha_kernel(tk, n_k, n_split),
        out_shape=jax.ShapeDtypeStruct((n_split, B_pad, 1), jnp.float32),
        grid_spec=pltpu.PrefetchScalarGridSpec(
            num_scalar_prefetch=0,
            grid=(n_split, n_k),
            in_specs=[
                # full latent / mu (for the one-time centered-latent scratch
                # and the in-kernel lane-aligned column slices)
                pl.BlockSpec((B_pad, D_pad), lambda s, k: (0, 0)),
                pl.BlockSpec((1, D_pad), lambda s, k: (0, 0)),
                # bf16 column tile of sigma_inv (the only large stream)
                pl.BlockSpec((D_pad, tk), lambda s, k: (0, s * n_k + k)),
            ],
            out_specs=pl.BlockSpec((1, B_pad, 1), lambda s, k: (s, 0, 0)),
            scratch_shapes=[
                pltpu.VMEM((B_pad, D_pad), jnp.bfloat16),   # centered latent
                pltpu.VMEM((B_pad, 1), jnp.float32),        # per-split accumulator
            ],
        ),
        compiler_params=pltpu.CompilerParams(
            # leading axis shards the sigma_inv stream across TensorCores on
            # v7x; inner axis is the column-tile reduction.
            dimension_semantics=("parallel", "arbitrary"),
            vmem_limit_bytes=vmem_limit,
        ),
    )(latent_flat, mu, sigma_inv_bf16)

    dist = partials[0] if n_split == 1 else jnp.sum(partials, axis=0)
    return dist[:B].reshape(B, 1, 1)


class AEMahalabonisDetectorJAX:
    """Minimal JAX port of the detector's forward() scoring hot path."""

    def __init__(self, train_latents_flat: jax.Array):
        # _fit_gaussian_to_latents (deterministic, synthetic): mean + inverse
        # of (regularized) empirical covariance stands in for LedoitWolf.
        n, d = train_latents_flat.shape
        self.mu = jnp.mean(train_latents_flat, axis=0, keepdims=True)       # (1, D)
        xc = train_latents_flat - self.mu                                   # (N, D)
        sigma = (xc.T @ xc) / n + 0.5 * jnp.eye(d, dtype=jnp.float32)       # (D, D)
        self.sigma_inv = jnp.linalg.inv(sigma).astype(jnp.float32)          # f32 reference
        # Streamed kernel operand in bf16 — the kernel is bandwidth-bound on
        # this array; accumulation stays in f32 inside the kernel.
        self.sigma_inv_bf16 = self.sigma_inv.astype(jnp.bfloat16)

    def forward(self, input_nchw: jax.Array) -> jax.Array:
        # get_latent == identity flatten of the NCHW activation per sample.
        # Score the whole batch in one pallas_call to amortize the (D, D)
        # sigma_inv stream over all samples.
        b = input_nchw.shape[0]
        latent_flat = input_nchw.reshape(b, -1).astype(jnp.float32)          # (B, D)
        return mahalanobis_distance(latent_flat, self.mu, self.sigma_inv_bf16)


if __name__ == "__main__":
    key = jax.random.PRNGKey(0)
    k_train, k_test = jax.random.split(key)

    # NCHW conv activation: B=8 (batched per review), C=4, H=W=16 -> D=1024.
    B, C, H, W = 8, 4, 16, 16
    D = C * H * W

    # Synthetic "training latents" used to fit the Gaussian (deterministic).
    train_latents = jax.random.normal(k_train, (32, D), dtype=jnp.float32)
    detector = AEMahalabonisDetectorJAX(train_latents)

    # Test input (stands in for the hooked layer's pre-activation).
    x = jax.random.normal(k_test, (B, C, H, W), dtype=jnp.float32)

    dist = detector.forward(x)
    dist = jax.block_until_ready(dist)

    # Reference check in plain JAX f32 (same math as the PyTorch forward()).
    xc = x.reshape(B, 1, -1) - detector.mu[None, ...]            # (B, 1, D)
    ref = xc @ detector.sigma_inv[None, ...] @ jnp.transpose(xc, (0, 2, 1))
    assert dist.shape == (B, 1, 1)
    # Tolerance accounts for sigma_inv / dot-LHS streamed in bf16 (f32 acc).
    assert jnp.allclose(dist, ref, rtol=1e-2, atol=0.5), (dist, ref)

    print("KERNEL_OK")
</pallas_src>

<mosaic_0001>
module attributes {stable_mosaic.version = 11 : i64} {
  func.func @kernel(%arg0: i32, %arg1: i32, %arg2: memref<8x1024xf32, #tpu.memory_space<vmem>>, %arg3: memref<1x1024xf32, #tpu.memory_space<vmem>>, %arg4: memref<1024x1024xbf16, #tpu.memory_space<vmem>>, %arg5: memref<1x8x1xf32, #tpu.memory_space<vmem>>, %arg6: memref<8x1024xbf16, #tpu.memory_space<vmem>>, %arg7: memref<8x1xf32, #tpu.memory_space<vmem>>) attributes {dimension_semantics = [#tpu.dimension_semantics<parallel>, #tpu.dimension_semantics<arbitrary>], iteration_bounds = array<i64: 1, 1>, scalar_prefetch = 0 : i64, scratch_operands = 2 : i64, tpu.core_type = #tpu.core_type<tc>, window_params = [{pipeline_mode = #tpu.pipeline_mode<synchronous>, transform_indices = @transform_0, window_bounds = array<i64: 8, 1024>}, {pipeline_mode = #tpu.pipeline_mode<synchronous>, transform_indices = @transform_1, window_bounds = array<i64: 1, 1024>}, {transform_indices = @transform_2, window_bounds = array<i64: 1024, 1024>}, {transform_indices = @transform_3, window_bounds = array<i64: 1, 8, 1>}]} {
    %c0_i32 = arith.constant 0 : i32
    %0 = arith.cmpi eq, %arg1, %c0_i32 : i32
    %1 = arith.extui %0 : i1 to i32
    %c0_i32_0 = arith.constant 0 : i32
    %2 = arith.cmpi ne, %1, %c0_i32_0 : i32
    scf.if %2 {
      %cst_15 = arith.constant 0.000000e+00 : f32
      %19 = vector.broadcast %cst_15 : f32 to vector<8x1xf32>
      %c0_16 = arith.constant 0 : index
      %c0_17 = arith.constant 0 : index
      %20 = vector.load %arg7[%c0_16, %c0_17] : memref<8x1xf32, #tpu.memory_space<vmem>>, vector<8x1xf32>
      tpu.vector_store %arg7[%c0_16, %c0_17], %19 {strides = array<i32>} : memref<8x1xf32, #tpu.memory_space<vmem>>, vector<8x1xf32>,
      %c0_18 = arith.constant 0 : index
      %c0_19 = arith.constant 0 : index
      %21 = vector.load %arg2[%c0_18, %c0_19] : memref<8x1024xf32, #tpu.memory_space<vmem>>, vector<8x1024xf32>
      %c0_20 = arith.constant 0 : index
      %c0_21 = arith.constant 0 : index
      %22 = vector.load %arg3[%c0_20, %c0_21] : memref<1x1024xf32, #tpu.memory_space<vmem>>, vector<1x1024xf32>
      %23 = vector.broadcast %22 : vector<1x1024xf32> to vector<8x1024xf32>
      %24 = arith.subf %21, %23 : vector<8x1024xf32>
      %25 = arith.truncf %24 : vector<8x1024xf32> to vector<8x1024xbf16>
      %c0_22 = arith.constant 0 : index
      %c0_23 = arith.constant 0 : index
      %26 = vector.load %arg6[%c0_22, %c0_23] : memref<8x1024xbf16, #tpu.memory_space<vmem>>, vector<8x1024xbf16>
      tpu.vector_store %arg6[%c0_22, %c0_23], %25 {strides = array<i32>} : memref<8x1024xbf16, #tpu.memory_space<vmem>>, vector<8x1024xbf16>,
    } else {
    }
    %c0 = arith.constant 0 : index
    %c0_1 = arith.constant 0 : index
    %3 = vector.load %arg6[%c0, %c0_1] : memref<8x1024xbf16, #tpu.memory_space<vmem>>, vector<8x1024xbf16>
    %c0_2 = arith.constant 0 : index
    %c0_3 = arith.constant 0 : index
    %4 = vector.load %arg4[%c0_2, %c0_3] : memref<1024x1024xbf16, #tpu.memory_space<vmem>>, vector<1024x1024xbf16>
    %cst = arith.constant dense<0.000000e+00> : vector<8x1024xf32>
    %5 = tpu.matmul %3, %4, %cst {dimension_numbers = #tpu.dot_dimension_numbers<[1], [0], [0], [1], [0, 0, 1, 1], [], []>} : vector<8x1024xbf16>, vector<1024x1024xbf16>, vector<8x1024xf32> -> vector<8x1024xf32>
    %c0_4 = arith.constant 0 : index
    %c0_5 = arith.constant 0 : index
    %6 = vector.load %arg2[%c0_4, %c0_5] : memref<8x1024xf32, #tpu.memory_space<vmem>>, vector<8x1024xf32>
    %c0_6 = arith.constant 0 : index
    %c0_7 = arith.constant 0 : index
    %7 = vector.load %arg3[%c0_6, %c0_7] : memref<1x1024xf32, #tpu.memory_space<vmem>>, vector<1x1024xf32>
    %8 = vector.broadcast %7 : vector<1x1024xf32> to vector<8x1024xf32>
    %9 = arith.subf %6, %8 : vector<8x1024xf32>
    %c0_8 = arith.constant 0 : index
    %c0_9 = arith.constant 0 : index
    %10 = vector.load %arg7[%c0_8, %c0_9] : memref<8x1xf32, #tpu.memory_space<vmem>>, vector<8x1xf32>
    %11 = arith.mulf %5, %9 : vector<8x1024xf32>
    %cst_10 = arith.constant dense<0.000000e+00> : vector<8xf32>
    %12 = vector.multi_reduction <add>, %11, %cst_10 [1] : vector<8x1024xf32> to vector<8xf32>
    %13 = vector.shape_cast %12 : vector<8xf32> to vector<8x1xf32>
    %14 = arith.addf %10, %13 : vector<8x1xf32>
    %c0_11 = arith.constant 0 : index
    %c0_12 = arith.constant 0 : index
    %15 = vector.load %arg7[%c0_11, %c0_12] : memref<8x1xf32, #tpu.memory_space<vmem>>, vector<8x1xf32>
    tpu.vector_store %arg7[%c0_11, %c0_12], %14 {strides = array<i32>} : memref<8x1xf32, #tpu.memory_space<vmem>>, vector<8x1xf32>,
    %c0_i32_13 = arith.constant 0 : i32
    %16 = arith.cmpi eq, %arg1, %c0_i32_13 : i32
    %17 = arith.extui %16 : i1 to i32
    %c0_i32_14 = arith.constant 0 : i32
    %18 = arith.cmpi ne, %17, %c0_i32_14 : i32
    scf.if %18 {
      %c0_15 = arith.constant 0 : index
      %c0_16 = arith.constant 0 : index
      %19 = vector.load %arg7[%c0_15, %c0_16] : memref<8x1xf32, #tpu.memory_space<vmem>>, vector<8x1xf32>
      %20 = vector.shape_cast %19 : vector<8x1xf32> to vector<1x8x1xf32>
      %c0_17 = arith.constant 0 : index
      %c0_18 = arith.constant 0 : index
      %c0_19 = arith.constant 0 : index
      %21 = vector.load %arg5[%c0_17, %c0_18, %c0_19] : memref<1x8x1xf32, #tpu.memory_space<vmem>>, vector<1x8x1xf32>
      tpu.vector_store %arg5[%c0_17, %c0_18, %c0_19], %20 {strides = array<i32>} : memref<1x8x1xf32, #tpu.memory_space<vmem>>, vector<1x8x1xf32>,
    } else {
    }
    return
  }
  func.func @transform_0(%arg0: i32, %arg1: i32) -> (i32, i32) {
    %c0_i32 = arith.constant 0 : i32
    %c0_i32_0 = arith.constant 0 : i32
    %c0_i32_1 = arith.constant 0 : i32
    return %c0_i32, %c0_i32_0 : i32, i32
  }
  func.func @transform_1(%arg0: i32, %arg1: i32) -> (i32, i32) {
    %c0_i32 = arith.constant 0 : i32
    %c0_i32_0 = arith.constant 0 : i32
    %c0_i32_1 = arith.constant 0 : i32
    return %c0_i32, %c0_i32_0 : i32, i32
  }
  func.func @transform_2(%arg0: i32, %arg1: i32) -> (i32, i32) {
    %c1_i32 = arith.constant 1 : i32
    %0 = arith.muli %arg0, %c1_i32 : i32
    %1 = arith.addi %0, %arg1 : i32
    %c0_i32 = arith.constant 0 : i32
    %c0_i32_0 = arith.constant 0 : i32
    return %c0_i32, %1 : i32, i32
  }
  func.func @transform_3(%arg0: i32, %arg1: i32) -> (i32, i32, i32) {
    %c0_i32 = arith.constant 0 : i32
    %c0_i32_0 = arith.constant 0 : i32
    %c0_i32_1 = arith.constant 0 : i32
    return %arg0, %c0_i32, %c0_i32_0 : i32, i32, i32
  }
}

</mosaic_0001>

<llo_original>
// kernel: tpu_custom_call.1
$region0: #{tpu_custom_call.1}
  #allocation0 [shape = 'u32[]', space=smem, size = 0x4, offset = 0x4, fixed_abs, tag = 'smem constant byte address 0x4 - core index']
  #allocation1 [shape = 'u32[144,128]{1,0:T(1,128)}', space=vmem, size = 0x12000, scoped, tag = 'internal scratch']
  #allocation2 [shape = 'bf16[8,1024]{1,0:T(8,128)(2,1)}', space=vmem, size = 0x4000, scoped, tag = 'scratch operand']
  #allocation3 [shape = 'f32[8,1]{1,0:T(8,128)}', space=vmem, size = 0x1000, scoped, tag = 'scratch operand']
  %s0 = inlined_call_operand.hbm [shape: f32[8,1024], index: 0, kind: input, shape index: {}]
  %s1 = inlined_call_operand.hbm [shape: f32[1,1024], index: 1, kind: input, shape index: {}]
  %s2 = inlined_call_operand.hbm [shape: bf16[1024,1024], index: 2, kind: input, shape index: {}]
  %s3 = inlined_call_operand.vmem [shape: f32[1,8,1], index: 3, kind: output, shape index: {}]
  %s4 = sld [smem:[#allocation0]]
  $region42: #{tpu_custom_call.1} parent=0
    _
  %s6 = ssub.s32 1, %s4
  %s7 = scalar_select 0, %s6, %s4
  $region1: #{tpu_custom_call.1} parent=0
    #allocation4 [shape = 'u8[32768]{0}', space=vmem, size = 0x8000, scoped, tag = 'input window, operand 0, single buffered']
    #allocation5 [shape = 's32[1]{0}', space=sflag, size = 0x4, scoped, tag = 'scoped memory for tpu_custom_call.1']
    #allocation6 [shape = 'u8[4096]{0}', space=vmem, size = 0x1000, scoped, tag = 'input window, operand 1, single buffered']
    #allocation7 [shape = 's32[1]{0}', space=sflag, size = 0x4, scoped, tag = 'scoped memory for tpu_custom_call.1']
    #allocation8 [shape = 'u8[2097152]{0}', space=vmem, size = 0x200000, scoped, tag = 'input window, operand 2, single buffered']
    %8 = vsyncpa [#allocation5], 0
    %9 = vsyncpa [#allocation7], 0
    // Predicated region
    $region2: #{tpu_custom_call.1} parent=1 // pred_check
      _
    $region3: #{tpu_custom_call.1} parent=1 // pred_check_branch
      %11 = sbr.rel (0) target = $region5
    $region4: #{tpu_custom_call.1} parent=1 // pred_region
      %s13 = ssub.s32 1024, 1024
      %14 = vsyncadd [#allocation5], %s13
      %s16 = sshll.u32 [#allocation4], 4
      %s17 = int_to_ptr.vmem [resolvable:$true] %s16
      %19 = dma.hbm_to_vmem [thread:$0]  %s0, 1024, %s17, [#allocation5]
    $region5: #{tpu_custom_call.1} parent=1 // pred_fallthru
      _
    // Predicated region
    $region6: #{tpu_custom_call.1} parent=1 // pred_check
      _
    $region7: #{tpu_custom_call.1} parent=1 // pred_check_branch
      %21 = sbr.rel (0) target = $region9
    $region8: #{tpu_custom_call.1} parent=1 // pred_region
      %s23 = ssub.s32 128, 128
      %24 = vsyncadd [#allocation7], %s23
      %s26 = sshll.u32 [#allocation6], 4
      %s27 = int_to_ptr.vmem [resolvable:$true] %s26
      %29 = dma.hbm_to_vmem [thread:$0]  %s1, 128, %s27, [#allocation7]
    $region9: #{tpu_custom_call.1} parent=1 // pred_fallthru
      _
    // Predicated region
    $region10: #{tpu_custom_call.1} parent=1 // pred_check
      _
    $region11: #{tpu_custom_call.1} parent=1 // pred_check_branch
      %31 = sbr.rel (0) target = $region13
    $region12: #{tpu_custom_call.1} parent=1 // pred_region
      %s32 = sadd.s32 0, 0
      %s33 = smul.u32 8, %s32
      %s35 = ssub.s32 65536, 65536
      %36 = vsyncadd [#allocation7], %s35
      %s37 = smul.addr %s33, 64
      %s38 = scalar_lea.hbm %s2, %s37
      %s39 = sshll.u32 [#allocation8], 4
      %s40 = int_to_ptr.vmem [resolvable:$true] %s39
      %45 = dma.hbm_to_vmem [thread:$0]  %s38, 65536, %s40, [#allocation7], 512, 512, 32
    $region13: #{tpu_custom_call.1} parent=1 // pred_fallthru
      _
    // Predicated region
    $region14: #{tpu_custom_call.1} parent=1 // pred_check
      _
    $region15: #{tpu_custom_call.1} parent=1 // pred_check_branch
      %47 = sbr.rel (0) target = $region17
    $region16: #{tpu_custom_call.1} parent=1 // pred_region
      %48 = dma.done [#allocation5], 1024
    $region17: #{tpu_custom_call.1} parent=1 // pred_fallthru
      _
    // Predicated region
    $region18: #{tpu_custom_call.1} parent=1 // pred_check
      _
    $region19: #{tpu_custom_call.1} parent=1 // pred_check_branch
      %50 = sbr.rel (0) target = $region21
    $region20: #{tpu_custom_call.1} parent=1 // pred_region
      %51 = dma.done [#allocation7], 128
    $region21: #{tpu_custom_call.1} parent=1 // pred_fallthru
      _
    // Predicated region
    $region22: #{tpu_custom_call.1} parent=1 // pred_check
      _
    $region23: #{tpu_custom_call.1} parent=1 // pred_check_branch
      %53 = sbr.rel (0) target = $region25
    $region24: #{tpu_custom_call.1} parent=1 // pred_region
      %54 = dma.done [#allocation7], 65536
    $region25: #{tpu_custom_call.1} parent=1 // pred_fallthru
      _
    %s55 = sadd.s32 0, 0
    %s56 = smul.u32 8, %s55
    %p57 = scmp.eq.s32.totalorder 0, 0
    // Predicated region
    $region26: #{tpu_custom_call.1} parent=1 // pred_check
      %p58 = pneg %p57
    $region27: #{tpu_custom_call.1} parent=1 // pred_check_branch
      %60 = sbr.rel (%p58) target = $region29
    $region28: #{tpu_custom_call.1} parent=1 // pred_region
      %vm61 = vcmask 7168
      %62 = vst.msk [vmem:[#allocation3] sm:$0xff] %vm61, 0.0
      %v63 = vld [vmem:[#allocation4] sm:$0xff]
      %v64 = vld [vmem:[#allocation4 + $0x8] sm:$0xff]
      %v65 = vld [vmem:[#allocation4 + $0x10] sm:$0xff]
      %v66 = vld [vmem:[#allocation4 + $0x18] sm:$0xff]
      %v67 = vld [vmem:[#allocation4 + $0x20] sm:$0xff]
      %v68 = vld [vmem:[#allocation4 + $0x28] sm:$0xff]
      %v69 = vld [vmem:[#allocation4 + $0x30] sm:$0xff]
      %v70 = vld [vmem:[#allocation4 + $0x38] sm:$0xff]
      %v71 = vld [vmem:[#allocation6] sm:$0xff]
      %v73 = vlaneseq
      %v74 = vshrl.u32 %v73, 7
      %v75 = vsub.s32 0, %v74
      %v76 = vrot.slane %v71, %v75
      %v77 = vlaneseq
      %v78 = vshrl.u32 %v77, 7
      %v79 = vsub.s32 1, %v78
      %v80 = vrot.slane %v71, %v79
      %v81 = vlaneseq
      %v82 = vshrl.u32 %v81, 7
      %v83 = vsub.s32 2, %v82
      %v84 = vrot.slane %v71, %v83
      %v85 = vlaneseq
      %v86 = vshrl.u32 %v85, 7
      %v87 = vsub.s32 3, %v86
      %v88 = vrot.slane %v71, %v87
      %v89 = vlaneseq
      %v90 = vshrl.u32 %v89, 7
      %v91 = vsub.s32 4, %v90
      %v92 = vrot.slane %v71, %v91
      %v93 = vlaneseq
      %v94 = vshrl.u32 %v93, 7
      %v95 = vsub.s32 5, %v94
      %v96 = vrot.slane %v71, %v95
      %v97 = vlaneseq
      %v98 = vshrl.u32 %v97, 7
      %v99 = vsub.s32 6, %v98
      %v100 = vrot.slane %v71, %v99
      %v101 = vlaneseq
      %v102 = vshrl.u32 %v101, 7
      %v103 = vsub.s32 7, %v102
      %v104 = vrot.slane %v71, %v103
      %v113 = vsub.f32 %v63, %v76
      %v114 = vsub.f32 %v64, %v80
      %v115 = vsub.f32 %v65, %v84
      %v116 = vsub.f32 %v66, %v88
      %v117 = vsub.f32 %v67, %v92
      %v118 = vsub.f32 %v68, %v96
      %v119 = vsub.f32 %v69, %v100
      %v120 = vsub.f32 %v70, %v104
      %v121 = vpack.c.bf16 %v113, %v113
      %v122 = vpack.c.bf16 %v114, %v114
      %v123 = vpack.c.bf16 %v115, %v115
      %v124 = vpack.c.bf16 %v116, %v116
      %v125 = vpack.c.bf16 %v117, %v117
      %v126 = vpack.c.bf16 %v118, %v118
      %v127 = vpack.c.bf16 %v119, %v119
      %v128 = vpack.c.bf16 %v120, %v120
      %v137 = vunpack.c.l.b16 %v121
      %v138 = vunpack.c.l.b16 %v122
      %v139 = vunpack.c.l.b16 %v123
      %v140 = vunpack.c.l.b16 %v124
      %v141 = vunpack.c.l.b16 %v125
      %v142 = vunpack.c.l.b16 %v126
      %v143 = vunpack.c.l.b16 %v127
      %v144 = vunpack.c.l.b16 %v128
      %v145 = vpack.c.b16 %v138, %v137
      %v146 = vpack.c.b16 %v140, %v139
      %v147 = vpack.c.b16 %v142, %v141
      %v148 = vpack.c.b16 %v144, %v143
      %153 = vst [vmem:[#allocation2] sm:$0xff] %v145
      %154 = vst [vmem:[#allocation2 + $0x8] sm:$0xff] %v146
      %155 = vst [vmem:[#allocation2 + $0x10] sm:$0xff] %v147
      %156 = vst [vmem:[#allocation2 + $0x18] sm:$0xff] %v148
    $region29: #{tpu_custom_call.1} parent=1 // pred_fallthru
      _
    %v157 = vld [vmem:[#allocation2] sm:$0xff]
    %v158 = vld [vmem:[#allocation2 + $0x8] sm:$0xff]
    %v159 = vld [vmem:[#allocation2 + $0x10] sm:$0xff]
    %v160 = vld [vmem:[#allocation2 + $0x18] sm:$0xff]
    %v161 = vld [vmem:[#allocation8] sm:$0xff]
    %v162 = vld [vmem:[#allocation8 + $0x8] sm:$0xff]
    %v163 = vld [vmem:[#allocation8 + $0x10] sm:$0xff]
    %v164 = vld [vmem:[#allocation8 + $0x18] sm:$0xff]
    %v165 = vld [vmem:[#allocation8 + $0x20] sm:$0xff]
    %v166 = vld [vmem:[#allocation8 + $0x28] sm:$0xff]
    %v167 = vld [vmem:[#allocation8 + $0x30] sm:$0xff]
    %v168 = vld [vmem:[#allocation8 + $0x38] sm:$0xff]
    %v169 = vld [vmem:[#allocation8 + $0x40] sm:$0xff]
    %v170 = vld [vmem:[#allocation8 + $0x48] sm:$0xff]
    %v171 = vld [vmem:[#allocation8 + $0x50] sm:$0xff]
    %v172 = vld [vmem:[#allocation8 + $0x58] sm:$0xff]
    %v173 = vld [vmem:[#allocation8 + $0x60] sm:$0xff]
    %v174 = vld [vmem:[#allocation8 + $0x68] sm:$0xff]
    %v175 = vld [vmem:[#allocation8 + $0x70] sm:$0xff]
    %v176 = vld [vmem:[#allocation8 + $0x78] sm:$0xff]
    %v177 = vld [vmem:[#allocation8 + $0x80] sm:$0xff]
    %v178 = vld [vmem:[#allocation8 + $0x88] sm:$0xff]
    %v179 = vld [vmem:[#allocation8 + $0x90] sm:$0xff]
    %v180 = vld [vmem:[#allocation8 + $0x98] sm:$0xff]
    %v181 = vld [vmem:[#allocation8 + $0xa0] sm:$0xff]
    %v182 = vld [vmem:[#allocation8 + $0xa8] sm:$0xff]
    %v183 = vld [vmem:[#allocation8 + $0xb0] sm:$0xff]
    %v184 = vld [vmem:[#allocation8 + $0xb8] sm:$0xff]
    %v185 = vld [vmem:[#allocation8 + $0xc0] sm:$0xff]
    %v186 = vld [vmem:[#allocation8 + $0xc8] sm:$0xff]
    %v187 = vld [vmem:[#allocation8 + $0xd0] sm:$0xff]
    %v188 = vld [vmem:[#allocation8 + $0xd8] sm:$0xff]
    %v189 = vld [vmem:[#allocation8 + $0xe0] sm:$0xff]
    %v190 = vld [vmem:[#allocation8 + $0xe8] sm:$0xff]
    %v191 = vld [vmem:[#allocation8 + $0xf0] sm:$0xff]
    %v192 = vld [vmem:[#allocation8 + $0xf8] sm:$0xff]
    %v193 = vld [vmem:[#allocation8 + $0x100] sm:$0xff]
    %v194 = vld [vmem:[#allocation8 + $0x108] sm:$0xff]
    %v195 = vld [vmem:[#allocation8 + $0x110] sm:$0xff]
    %v196 = vld [vmem:[#allocation8 + $0x118] sm:$0xff]
    %v197 = vld [vmem:[#allocation8 + $0x120] sm:$0xff]
    %v198 = vld [vmem:[#allocation8 + $0x128] sm:$0xff]
    %v199 = vld [vmem:[#allocation8 + $0x130] sm:$0xff]
    %v200 = vld [vmem:[#allocation8 + $0x138] sm:$0xff]
    %v201 = vld [vmem:[#allocation8 + $0x140] sm:$0xff]
    %v202 = vld [vmem:[#allocation8 + $0x148] sm:$0xff]
    %v203 = vld [vmem:[#allocation8 + $0x150] sm:$0xff]
    %v204 = vld [vmem:[#allocation8 + $0x158] sm:$0xff]
    %v205 = vld [vmem:[#allocation8 + $0x160] sm:$0xff]
    %v206 = vld [vmem:[#allocation8 + $0x168] sm:$0xff]
    %v207 = vld [vmem:[#allocation8 + $0x170] sm:$0xff]
    %v208 = vld [vmem:[#allocation8 + $0x178] sm:$0xff]
    %v209 = vld [vmem:[#allocation8 + $0x180] sm:$0xff]
    %v210 = vld [vmem:[#allocation8 + $0x188] sm:$0xff]
    %v211 = vld [vmem:[#allocation8 + $0x190] sm:$0xff]
    %v212 = vld [vmem:[#allocation8 + $0x198] sm:$0xff]
    %v213 = vld [vmem:[#allocation8 + $0x1a0] sm:$0xff]
    %v214 = vld [vmem:[#allocation8 + $0x1a8] sm:$0xff]
    %v215 = vld [vmem:[#allocation8 + $0x1b0] sm:$0xff]
    %v216 = vld [vmem:[#allocation8 + $0x1b8] sm:$0xff]
    %v217 = vld [vmem:[#allocation8 + $0x1c0] sm:$0xff]
    %v218 = vld [vmem:[#allocation8 + $0x1c8] sm:$0xff]
    %v219 = vld [vmem:[#allocation8 + $0x1d0] sm:$0xff]
    %v220 = vld [vmem:[#allocation8 + $0x1d8] sm:$0xff]
    %v221 = vld [vmem:[#allocation8 + $0x1e0] sm:$0xff]
    %v222 = vld [vmem:[#allocation8 + $0x1e8] sm:$0xff]
    %v223 = vld [vmem:[#allocation8 + $0x1f0] sm:$0xff]
    %v224 = vld [vmem:[#allocation8 + $0x1f8] sm:$0xff]
    %v225 = vld [vmem:[#allocation8 + $0x200] sm:$0xff]
    %v226 = vld [vmem:[#allocation8 + $0x208] sm:$0xff]
    %v227 = vld [vmem:[#allocation8 + $0x210] sm:$0xff]
    %v228 = vld [vmem:[#allocation8 + $0x218] sm:$0xff]
    %v229 = vld [vmem:[#allocation8 + $0x220] sm:$0xff]
    %v230 = vld [vmem:[#allocation8 + $0x228] sm:$0xff]
    %v231 = vld [vmem:[#allocation8 + $0x230] sm:$0xff]
    %v232 = vld [vmem:[#allocation8 + $0x238] sm:$0xff]
    %v233 = vld [vmem:[#allocation8 + $0x240] sm:$0xff]
    %v234 = vld [vmem:[#allocation8 + $0x248] sm:$0xff]
    %v235 = vld [vmem:[#allocation8 + $0x250] sm:$0xff]
    %v236 = vld [vmem:[#allocation8 + $0x258] sm:$0xff]
    %v237 = vld [vmem:[#allocation8 + $0x260] sm:$0xff]
    %v238 = vld [vmem:[#allocation8 + $0x268] sm:$0xff]
    %v239 = vld [vmem:[#allocation8 + $0x270] sm:$0xff]
    %v240 = vld [vmem:[#allocation8 + $0x278] sm:$0xff]
    %v241 = vld [vmem:[#allocation8 + $0x280] sm:$0xff]
    %v242 = vld [vmem:[#allocation8 + $0x288] sm:$0xff]
    %v243 = vld [vmem:[#allocation8 + $0x290] sm:$0xff]
    %v244 = vld [vmem:[#allocation8 + $0x298] sm:$0xff]
    %v245 = vld [vmem:[#allocation8 + $0x2a0] sm:$0xff]
    %v246 = vld [vmem:[#allocation8 + $0x2a8] sm:$0xff]
    %v247 = vld [vmem:[#allocation8 + $0x2b0] sm:$0xff]
    %v248 = vld [vmem:[#allocation8 + $0x2b8] sm:$0xff]
    %v249 = vld [vmem:[#allocation8 + $0x2c0] sm:$0xff]
    %v250 = vld [vmem:[#allocation8 + $0x2c8] sm:$0xff]
    %v251 = vld [vmem:[#allocation8 + $0x2d0] sm:$0xff]
    %v252 = vld [vmem:[#allocation8 + $0x2d8] sm:$0xff]
    %v253 = vld [vmem:[#allocation8 + $0x2e0] sm:$0xff]
    %v254 = vld [vmem:[#allocation8 + $0x2e8] sm:$0xff]
    %v255 = vld [vmem:[#allocation8 + $0x2f0] sm:$0xff]
    %v256 = vld [vmem:[#allocation8 + $0x2f8] sm:$0xff]
    %v257 = vld [vmem:[#allocation8 + $0x300] sm:$0xff]
    %v258 = vld [vmem:[#allocation8 + $0x308] sm:$0xff]
    %v259 = vld [vmem:[#allocation8 + $0x310] sm:$0xff]
    %v260 = vld [vmem:[#allocation8 + $0x318] sm:$0xff]
    %v261 = vld [vmem:[#allocation8 + $0x320] sm:$0xff]
    %v262 = vld [vmem:[#allocation8 + $0x328] sm:$0xff]
    %v263 = vld [vmem:[#allocation8 + $0x330] sm:$0xff]
    %v264 = vld [vmem:[#allocation8 + $0x338] sm:$0xff]
    %v265 = vld [vmem:[#allocation8 + $0x340] sm:$0xff]
    %v266 = vld [vmem:[#allocation8 + $0x348] sm:$0xff]
    %v267 = vld [vmem:[#allocation8 + $0x350] sm:$0xff]
    %v268 = vld [vmem:[#allocation8 + $0x358] sm:$0xff]
    %v269 = vld [vmem:[#allocation8 + $0x360] sm:$0xff]
    %v270 = vld [vmem:[#allocation8 + $0x368] sm:$0xff]
    %v271 = vld [vmem:[#allocation8 + $0x370] sm:$0xff]
    %v272 = vld [vmem:[#allocation8 + $0x378] sm:$0xff]
    %v273 = vld [vmem:[#allocation8 + $0x380] sm:$0xff]
    %v274 = vld [vmem:[#allocation8 + $0x388] sm:$0xff]
    %v275 = vld [vmem:[#allocation8 + $0x390] sm:$0xff]
    %v276 = vld [vmem:[#allocation8 + $0x398] sm:$0xff]
    %v277 = vld [vmem:[#allocation8 + $0x3a0] sm:$0xff]
    %v278 = vld [vmem:[#allocation8 + $0x3a8] sm:$0xff]
    %v279 = vld [vmem:[#allocation8 + $0x3b0] sm:$0xff]
    %v280 = vld [vmem:[#allocation8 + $0x3b8] sm:$0xff]
    %v281 = vld [vmem:[#allocation8 + $0x3c0] sm:$0xff]
    %v282 = vld [vmem:[#allocation8 + $0x3c8] sm:$0xff]
    %v283 = vld [vmem:[#allocation8 + $0x3d0] sm:$0xff]
    %v284 = vld [vmem:[#allocation8 + $0x3d8] sm:$0xff]
    %v285 = vld [vmem:[#allocation8 + $0x3e0] sm:$0xff]
    %v286 = vld [vmem:[#allocation8 + $0x3e8] sm:$0xff]
    %v287 = vld [vmem:[#allocation8 + $0x3f0] sm:$0xff]
    %v288 = vld [vmem:[#allocation8 + $0x3f8] sm:$0xff]
    %v289 = vld [vmem:[#allocation8 + $0x400] sm:$0xff]
    %v290 = vld [vmem:[#allocation8 + $0x408] sm:$0xff]
    %v291 = vld [vmem:[#allocation8 + $0x410] sm:$0xff]
    %v292 = vld [vmem:[#allocation8 + $0x418] sm:$0xff]
    %v293 = vld [vmem:[#allocation8 + $0x420] sm:$0xff]
    %v294 = vld [vmem:[#allocation8 + $0x428] sm:$0xff]
    %v295 = vld [vmem:[#allocation8 + $0x430] sm:$0xff]
    %v296 = vld [vmem:[#allocation8 + $0x438] sm:$0xff]
    %v297 = vld [vmem:[#allocation8 + $0x440] sm:$0xff]
    %v298 = vld [vmem:[#allocation8 + $0x448] sm:$0xff]
    %v299 = vld [vmem:[#allocation8 + $0x450] sm:$0xff]
    %v300 = vld [vmem:[#allocation8 + $0x458] sm:$0xff]
    %v301 = vld [vmem:[#allocation8 + $0x460] sm:$0xff]
    %v302 = vld [vmem:[#allocation8 + $0x468] sm:$0xff]
    %v303 = vld [vmem:[#allocation8 + $0x470] sm:$0xff]
    %v304 = vld [vmem:[#allocation8 + $0x478] sm:$0xff]
    %v305 = vld [vmem:[#allocation8 + $0x480] sm:$0xff]
    %v306 = vld [vmem:[#allocation8 + $0x488] sm:$0xff]
    %v307 = vld [vmem:[#allocation8 + $0x490] sm:$0xff]
    %v308 = vld [vmem:[#allocation8 + $0x498] sm:$0xff]
    %v309 = vld [vmem:[#allocation8 + $0x4a0] sm:$0xff]
    %v310 = vld [vmem:[#allocation8 + $0x4a8] sm:$0xff]
    %v311 = vld [vmem:[#allocation8 + $0x4b0] sm:$0xff]
    %v312 = vld [vmem:[#allocation8 + $0x4b8] sm:$0xff]
    %v313 = vld [vmem:[#allocation8 + $0x4c0] sm:$0xff]
    %v314 = vld [vmem:[#allocation8 + $0x4c8] sm:$0xff]
    %v315 = vld [vmem:[#allocation8 + $0x4d0] sm:$0xff]
    %v316 = vld [vmem:[#allocation8 + $0x4d8] sm:$0xff]
    %v317 = vld [vmem:[#allocation8 + $0x4e0] sm:$0xff]
    %v318 = vld [vmem:[#allocation8 + $0x4e8] sm:$0xff]
    %v319 = vld [vmem:[#allocation8 + $0x4f0] sm:$0xff]
    %v320 = vld [vmem:[#allocation8 + $0x4f8] sm:$0xff]
    %v321 = vld [vmem:[#allocation8 + $0x500] sm:$0xff]
    %v322 = vld [vmem:[#allocation8 + $0x508] sm:$0xff]
    %v323 = vld [vmem:[#allocation8 + $0x510] sm:$0xff]
    %v324 = vld [vmem:[#allocation8 + $0x518] sm:$0xff]
    %v325 = vld [vmem:[#allocation8 + $0x520] sm:$0xff]
    %v326 = vld [vmem:[#allocation8 + $0x528] sm:$0xff]
    %v327 = vld [vmem:[#allocation8 + $0x530] sm:$0xff]
    %v328 = vld [vmem:[#allocation8 + $0x538] sm:$0xff]
    %v329 = vld [vmem:[#allocation8 + $0x540] sm:$0xff]
    %v330 = vld [vmem:[#allocation8 + $0x548] sm:$0xff]
    %v331 = vld [vmem:[#allocation8 + $0x550] sm:$0xff]
    %v332 = vld [vmem:[#allocation8 + $0x558] sm:$0xff]
    %v333 = vld [vmem:[#allocation8 + $0x560] sm:$0xff]
    %v334 = vld [vmem:[#allocation8 + $0x568] sm:$0xff]
    %v335 = vld [vmem:[#allocation8 + $0x570] sm:$0xff]
    %v336 = vld [vmem:[#allocation8 + $0x578] sm:$0xff]
    %v337 = vld [vmem:[#allocation8 + $0x580] sm:$0xff]
    %v338 = vld [vmem:[#allocation8 + $0x588] sm:$0xff]
    %v339 = vld [vmem:[#allocation8 + $0x590] sm:$0xff]
    %v340 = vld [vmem:[#allocation8 + $0x598] sm:$0xff]
    %v341 = vld [vmem:[#allocation8 + $0x5a0] sm:$0xff]
    %v342 = vld [vmem:[#allocation8 + $0x5a8] sm:$0xff]
    %v343 = vld [vmem:[#allocation8 + $0x5b0] sm:$0xff]
    %v344 = vld [vmem:[#allocation8 + $0x5b8] sm:$0xff]
    %v345 = vld [vmem:[#allocation8 + $0x5c0] sm:$0xff]
    %v346 = vld [vmem:[#allocation8 + $0x5c8] sm:$0xff]
    %v347 = vld [vmem:[#allocation8 + $0x5d0] sm:$0xff]
    %v348 = vld [vmem:[#allocation8 + $0x5d8] sm:$0xff]
    %v349 = vld [vmem:[#allocation8 + $0x5e0] sm:$0xff]
    %v350 = vld [vmem:[#allocation8 + $0x5e8] sm:$0xff]
    %v351 = vld [vmem:[#allocation8 + $0x5f0] sm:$0xff]
    %v352 = vld [vmem:[#allocation8 + $0x5f8] sm:$0xff]
    %v353 = vld [vmem:[#allocation8 + $0x600] sm:$0xff]
    %v354 = vld [vmem:[#allocation8 + $0x608] sm:$0xff]
    %v355 = vld [vmem:[#allocation8 + $0x610] sm:$0xff]
    %v356 = vld [vmem:[#allocation8 + $0x618] sm:$0xff]
    %v357 = vld [vmem:[#allocation8 + $0x620] sm:$0xff]
    %v358 = vld [vmem:[#allocation8 + $0x628] sm:$0xff]
    %v359 = vld [vmem:[#allocation8 + $0x630] sm:$0xff]
    %v360 = vld [vmem:[#allocation8 + $0x638] sm:$0xff]
    %v361 = vld [vmem:[#allocation8 + $0x640] sm:$0xff]
    %v362 = vld [vmem:[#allocation8 + $0x648] sm:$0xff]
    %v363 = vld [vmem:[#allocation8 + $0x650] sm:$0xff]
    %v364 = vld [vmem:[#allocation8 + $0x658] sm:$0xff]
    %v365 = vld [vmem:[#allocation8 + $0x660] sm:$0xff]
    %v366 = vld [vmem:[#allocation8 + $0x668] sm:$0xff]
    %v367 = vld [vmem:[#allocation8 + $0x670] sm:$0xff]
    %v368 = vld [vmem:[#allocation8 + $0x678] sm:$0xff]
    %v369 = vld [vmem:[#allocation8 + $0x680] sm:$0xff]
    %v370 = vld [vmem:[#allocation8 + $0x688] sm:$0xff]
    %v371 = vld [vmem:[#allocation8 + $0x690] sm:$0xff]
    %v372 = vld [vmem:[#allocation8 + $0x698] sm:$0xff]
    %v373 = vld [vmem:[#allocation8 + $0x6a0] sm:$0xff]
    %v374 = vld [vmem:[#allocation8 + $0x6a8] sm:$0xff]
    %v375 = vld [vmem:[#allocation8 + $0x6b0] sm:$0xff]
    %v376 = vld [vmem:[#allocation8 + $0x6b8] sm:$0xff]
    %v377 = vld [vmem:[#allocation8 + $0x6c0] sm:$0xff]
    %v378 = vld [vmem:[#allocation8 + $0x6c8] sm:$0xff]
    %v379 = vld [vmem:[#allocation8 + $0x6d0] sm:$0xff]
    %v380 = vld [vmem:[#allocation8 + $0x6d8] sm:$0xff]
    %v381 = vld [vmem:[#allocation8 + $0x6e0] sm:$0xff]
    %v382 = vld [vmem:[#allocation8 + $0x6e8] sm:$0xff]
    %v383 = vld [vmem:[#allocation8 + $0x6f0] sm:$0xff]
    %v384 = vld [vmem:[#allocation8 + $0x6f8] sm:$0xff]
    %v385 = vld [vmem:[#allocation8 + $0x700] sm:$0xff]
    %v386 = vld [vmem:[#allocation8 + $0x708] sm:$0xff]
    %v387 = vld [vmem:[#allocation8 + $0x710] sm:$0xff]
    %v388 = vld [vmem:[#allocation8 + $0x718] sm:$0xff]
    %v389 = vld [vmem:[#allocation8 + $0x720] sm:$0xff]
    %v390 = vld [vmem:[#allocation8 + $0x728] sm:$0xff]
    %v391 = vld [vmem:[#allocation8 + $0x730] sm:$0xff]
    %v392 = vld [vmem:[#allocation8 + $0x738] sm:$0xff]
    %v393 = vld [vmem:[#allocation8 + $0x740] sm:$0xff]
    %v394 = vld [vmem:[#allocation8 + $0x748] sm:$0xff]
    %v395 = vld [vmem:[#allocation8 + $0x750] sm:$0xff]
    %v396 = vld [vmem:[#allocation8 + $0x758] sm:$0xff]
    %v397 = vld [vmem:[#allocation8 + $0x760] sm:$0xff]
    %v398 = vld [vmem:[#allocation8 + $0x768] sm:$0xff]
    %v399 = vld [vmem:[#allocation8 + $0x770] sm:$0xff]
    %v400 = vld [vmem:[#allocation8 + $0x778] sm:$0xff]
    %v401 = vld [vmem:[#allocation8 + $0x780] sm:$0xff]
    %v402 = vld [vmem:[#allocation8 + $0x788] sm:$0xff]
    %v403 = vld [vmem:[#allocation8 + $0x790] sm:$0xff]
    %v404 = vld [vmem:[#allocation8 + $0x798] sm:$0xff]
    %v405 = vld [vmem:[#allocation8 + $0x7a0] sm:$0xff]
    %v406 = vld [vmem:[#allocation8 + $0x7a8] sm:$0xff]
    %v407 = vld [vmem:[#allocation8 + $0x7b0] sm:$0xff]
    %v408 = vld [vmem:[#allocation8 + $0x7b8] sm:$0xff]
    %v409 = vld [vmem:[#allocation8 + $0x7c0] sm:$0xff]
    %v410 = vld [vmem:[#allocation8 + $0x7c8] sm:$0xff]
    %v411 = vld [vmem:[#allocation8 + $0x7d0] sm:$0xff]
    %v412 = vld [vmem:[#allocation8 + $0x7d8] sm:$0xff]
    %v413 = vld [vmem:[#allocation8 + $0x7e0] sm:$0xff]
    %v414 = vld [vmem:[#allocation8 + $0x7e8] sm:$0xff]
    %v415 = vld [vmem:[#allocation8 + $0x7f0] sm:$0xff]
    %v416 = vld [vmem:[#allocation8 + $0x7f8] sm:$0xff]
    %v417 = vld [vmem:[#allocation8 + $0x800] sm:$0xff]
    %v418 = vld [vmem:[#allocation8 + $0x808] sm:$0xff]
    %v419 = vld [vmem:[#allocation8 + $0x810] sm:$0xff]
    %v420 = vld [vmem:[#allocation8 + $0x818] sm:$0xff]
    %v421 = vld [vmem:[#allocation8 + $0x820] sm:$0xff]
    %v422 = vld [vmem:[#allocation8 + $0x828] sm:$0xff]
    %v423 = vld [vmem:[#allocation8 + $0x830] sm:$0xff]
    %v424 = vld [vmem:[#allocation8 + $0x838] sm:$0xff]
    %v425 = vld [vmem:[#allocation8 + $0x840] sm:$0xff]
    %v426 = vld [vmem:[#allocation8 + $0x848] sm:$0xff]
    %v427 = vld [vmem:[#allocation8 + $0x850] sm:$0xff]
    %v428 = vld [vmem:[#allocation8 + $0x858] sm:$0xff]
    %v429 = vld [vmem:[#allocation8 + $0x860] sm:$0xff]
    %v430 = vld [vmem:[#allocation8 + $0x868] sm:$0xff]
    %v431 = vld [vmem:[#allocation8 + $0x870] sm:$0xff]
    %v432 = vld [vmem:[#allocation8 + $0x878] sm:$0xff]
    %v433 = vld [vmem:[#allocation8 + $0x880] sm:$0xff]
    %v434 = vld [vmem:[#allocation8 + $0x888] sm:$0xff]
    %v435 = vld [vmem:[#allocation8 + $0x890] sm:$0xff]
    %v436 = vld [vmem:[#allocation8 + $0x898] sm:$0xff]
    %v437 = vld [vmem:[#allocation8 + $0x8a0] sm:$0xff]
    %v438 = vld [vmem:[#allocation8 + $0x8a8] sm:$0xff]
    %v439 = vld [vmem:[#allocation8 + $0x8b0] sm:$0xff]
    %v440 = vld [vmem:[#allocation8 + $0x8b8] sm:$0xff]
    %v441 = vld [vmem:[#allocation8 + $0x8c0] sm:$0xff]
    %v442 = vld [vmem:[#allocation8 + $0x8c8] sm:$0xff]
    %v443 = vld [vmem:[#allocation8 + $0x8d0] sm:$0xff]
    %v444 = vld [vmem:[#allocation8 + $0x8d8] sm:$0xff]
    %v445 = vld [vmem:[#allocation8 + $0x8e0] sm:$0xff]
    %v446 = vld [vmem:[#allocation8 + $0x8e8] sm:$0xff]
    %v447 = vld [vmem:[#allocation8 + $0x8f0] sm:$0xff]
    %v448 = vld [vmem:[#allocation8 + $0x8f8] sm:$0xff]
    %v449 = vld [vmem:[#allocation8 + $0x900] sm:$0xff]
    %v450 = vld [vmem:[#allocation8 + $0x908] sm:$0xff]
    %v451 = vld [vmem:[#allocation8 + $0x910] sm:$0xff]
    %v452 = vld [vmem:[#allocation8 + $0x918] sm:$0xff]
    %v453 = vld [vmem:[#allocation8 + $0x920] sm:$0xff]
    %v454 = vld [vmem:[#allocation8 + $0x928] sm:$0xff]
    %v455 = vld [vmem:[#allocation8 + $0x930] sm:$0xff]
    %v456 = vld [vmem:[#allocation8 + $0x938] sm:$0xff]
    %v457 = vld [vmem:[#allocation8 + $0x940] sm:$0xff]
    %v458 = vld [vmem:[#allocation8 + $0x948] sm:$0xff]
    %v459 = vld [vmem:[#allocation8 + $0x950] sm:$0xff]
    %v460 = vld [vmem:[#allocation8 + $0x958] sm:$0xff]
    %v461 = vld [vmem:[#allocation8 + $0x960] sm:$0xff]
    %v462 = vld [vmem:[#allocation8 + $0x968] sm:$0xff]
    %v463 = vld [vmem:[#allocation8 + $0x970] sm:$0xff]
    %v464 = vld [vmem:[#allocation8 + $0x978] sm:$0xff]
    %v465 = vld [vmem:[#allocation8 + $0x980] sm:$0xff]
    %v466 = vld [vmem:[#allocation8 + $0x988] sm:$0xff]
    %v467 = vld [vmem:[#allocation8 + $0x990] sm:$0xff]
    %v468 = vld [vmem:[#allocation8 + $0x998] sm:$0xff]
    %v469 = vld [vmem:[#allocation8 + $0x9a0] sm:$0xff]
    %v470 = vld [vmem:[#allocation8 + $0x9a8] sm:$0xff]
    %v471 = vld [vmem:[#allocation8 + $0x9b0] sm:$0xff]
    %v472 = vld [vmem:[#allocation8 + $0x9b8] sm:$0xff]
    %v473 = vld [vmem:[#allocation8 + $0x9c0] sm:$0xff]
    %v474 = vld [vmem:[#allocation8 + $0x9c8] sm:$0xff]
    %v475 = vld [vmem:[#allocation8 + $0x9d0] sm:$0xff]
    %v476 = vld [vmem:[#allocation8 + $0x9d8] sm:$0xff]
    %v477 = vld [vmem:[#allocation8 + $0x9e0] sm:$0xff]
    %v478 = vld [vmem:[#allocation8 + $0x9e8] sm:$0xff]
    %v479 = vld [vmem:[#allocation8 + $0x9f0] sm:$0xff]
    %v480 = vld [vmem:[#allocation8 + $0x9f8] sm:$0xff]
    %v481 = vld [vmem:[#allocation8 + $0xa00] sm:$0xff]
    %v482 = vld [vmem:[#allocation8 + $0xa08] sm:$0xff]
    %v483 = vld [vmem:[#allocation8 + $0xa10] sm:$0xff]
    %v484 = vld [vmem:[#allocation8 + $0xa18] sm:$0xff]
    %v485 = vld [vmem:[#allocation8 + $0xa20] sm:$0xff]
    %v486 = vld [vmem:[#allocation8 + $0xa28] sm:$0xff]
    %v487 = vld [vmem:[#allocation8 + $0xa30] sm:$0xff]
    %v488 = vld [vmem:[#allocation8 + $0xa38] sm:$0xff]
    %v489 = vld [vmem:[#allocation8 + $0xa40] sm:$0xff]
    %v490 = vld [vmem:[#allocation8 + $0xa48] sm:$0xff]
    %v491 = vld [vmem:[#allocation8 + $0xa50] sm:$0xff]
    %v492 = vld [vmem:[#allocation8 + $0xa58] sm:$0xff]
    %v493 = vld [vmem:[#allocation8 + $0xa60] sm:$0xff]
    %v494 = vld [vmem:[#allocation8 + $0xa68] sm:$0xff]
    %v495 = vld [vmem:[#allocation8 + $0xa70] sm:$0xff]
    %v496 = vld [vmem:[#allocation8 + $0xa78] sm:$0xff]
    %v497 = vld [vmem:[#allocation8 + $0xa80] sm:$0xff]
    %v498 = vld [vmem:[#allocation8 + $0xa88] sm:$0xff]
    %v499 = vld [vmem:[#allocation8 + $0xa90] sm:$0xff]
    %v500 = vld [vmem:[#allocation8 + $0xa98] sm:$0xff]
    %v501 = vld [vmem:[#allocation8 + $0xaa0] sm:$0xff]
    %v502 = vld [vmem:[#allocation8 + $0xaa8] sm:$0xff]
    %v503 = vld [vmem:[#allocation8 + $0xab0] sm:$0xff]
    %v504 = vld [vmem:[#allocation8 + $0xab8] sm:$0xff]
    %v505 = vld [vmem:[#allocation8 + $0xac0] sm:$0xff]
    %v506 = vld [vmem:[#allocation8 + $0xac8] sm:$0xff]
    %v507 = vld [vmem:[#allocation8 + $0xad0] sm:$0xff]
    %v508 = vld [vmem:[#allocation8 + $0xad8] sm:$0xff]
    %v509 = vld [vmem:[#allocation8 + $0xae0] sm:$0xff]
    %v510 = vld [vmem:[#allocation8 + $0xae8] sm:$0xff]
    %v511 = vld [vmem:[#allocation8 + $0xaf0] sm:$0xff]
    %v512 = vld [vmem:[#allocation8 + $0xaf8] sm:$0xff]
    %v513 = vld [vmem:[#allocation8 + $0xb00] sm:$0xff]
    %v514 = vld [vmem:[#allocation8 + $0xb08] sm:$0xff]
    %v515 = vld [vmem:[#allocation8 + $0xb10] sm:$0xff]
    %v516 = vld [vmem:[#allocation8 + $0xb18] sm:$0xff]
    %v517 = vld [vmem:[#allocation8 + $0xb20] sm:$0xff]
    %v518 = vld [vmem:[#allocation8 + $0xb28] sm:$0xff]
    %v519 = vld [vmem:[#allocation8 + $0xb30] sm:$0xff]
    %v520 = vld [vmem:[#allocation8 + $0xb38] sm:$0xff]
    %v521 = vld [vmem:[#allocation8 + $0xb40] sm:$0xff]
    %v522 = vld [vmem:[#allocation8 + $0xb48] sm:$0xff]
    %v523 = vld [vmem:[#allocation8 + $0xb50] sm:$0xff]
    %v524 = vld [vmem:[#allocation8 + $0xb58] sm:$0xff]
    %v525 = vld [vmem:[#allocation8 + $0xb60] sm:$0xff]
    %v526 = vld [vmem:[#allocation8 + $0xb68] sm:$0xff]
    %v527 = vld [vmem:[#allocation8 + $0xb70] sm:$0xff]
    %v528 = vld [vmem:[#allocation8 + $0xb78] sm:$0xff]
    %v529 = vld [vmem:[#allocation8 + $0xb80] sm:$0xff]
    %v530 = vld [vmem:[#allocation8 + $0xb88] sm:$0xff]
    %v531 = vld [vmem:[#allocation8 + $0xb90] sm:$0xff]
    %v532 = vld [vmem:[#allocation8 + $0xb98] sm:$0xff]
    %v533 = vld [vmem:[#allocation8 + $0xba0] sm:$0xff]
    %v534 = vld [vmem:[#allocation8 + $0xba8] sm:$0xff]
    %v535 = vld [vmem:[#allocation8 + $0xbb0] sm:$0xff]
    %v536 = vld [vmem:[#allocation8 + $0xbb8] sm:$0xff]
    %v537 = vld [vmem:[#allocation8 + $0xbc0] sm:$0xff]
    %v538 = vld [vmem:[#allocation8 + $0xbc8] sm:$0xff]
    %v539 = vld [vmem:[#allocation8 + $0xbd0] sm:$0xff]
    %v540 = vld [vmem:[#allocation8 + $0xbd8] sm:$0xff]
    %v541 = vld [vmem:[#allocation8 + $0xbe0] sm:$0xff]
    %v542 = vld [vmem:[#allocation8 + $0xbe8] sm:$0xff]
    %v543 = vld [vmem:[#allocation8 + $0xbf0] sm:$0xff]
    %v544 = vld [vmem:[#allocation8 + $0xbf8] sm:$0xff]
    %v545 = vld [vmem:[#allocation8 + $0xc00] sm:$0xff]
    %v546 = vld [vmem:[#allocation8 + $0xc08] sm:$0xff]
    %v547 = vld [vmem:[#allocation8 + $0xc10] sm:$0xff]
    %v548 = vld [vmem:[#allocation8 + $0xc18] sm:$0xff]
    %v549 = vld [vmem:[#allocation8 + $0xc20] sm:$0xff]
    %v550 = vld [vmem:[#allocation8 + $0xc28] sm:$0xff]
    %v551 = vld [vmem:[#allocation8 + $0xc30] sm:$0xff]
    %v552 = vld [vmem:[#allocation8 + $0xc38] sm:$0xff]
    %v553 = vld [vmem:[#allocation8 + $0xc40] sm:$0xff]
    %v554 = vld [vmem:[#allocation8 + $0xc48] sm:$0xff]
    %v555 = vld [vmem:[#allocation8 + $0xc50] sm:$0xff]
    %v556 = vld [vmem:[#allocation8 + $0xc58] sm:$0xff]
    %v557 = vld [vmem:[#allocation8 + $0xc60] sm:$0xff]
    %v558 = vld [vmem:[#allocation8 + $0xc68] sm:$0xff]
    %v559 = vld [vmem:[#allocation8 + $0xc70] sm:$0xff]
    %v560 = vld [vmem:[#allocation8 + $0xc78] sm:$0xff]
    %v561 = vld [vmem:[#allocation8 + $0xc80] sm:$0xff]
    %v562 = vld [vmem:[#allocation8 + $0xc88] sm:$0xff]
    %v563 = vld [vmem:[#allocation8 + $0xc90] sm:$0xff]
    %v564 = vld [vmem:[#allocation8 + $0xc98] sm:$0xff]
    %v565 = vld [vmem:[#allocation8 + $0xca0] sm:$0xff]
    %v566 = vld [vmem:[#allocation8 + $0xca8] sm:$0xff]
    %v567 = vld [vmem:[#allocation8 + $0xcb0] sm:$0xff]
    %v568 = vld [vmem:[#allocation8 + $0xcb8] sm:$0xff]
    %v569 = vld [vmem:[#allocation8 + $0xcc0] sm:$0xff]
    %v570 = vld [vmem:[#allocation8 + $0xcc8] sm:$0xff]
    %v571 = vld [vmem:[#allocation8 + $0xcd0] sm:$0xff]
    %v572 = vld [vmem:[#allocation8 + $0xcd8] sm:$0xff]
    %v573 = vld [vmem:[#allocation8 + $0xce0] sm:$0xff]
    %v574 = vld [vmem:[#allocation8 + $0xce8] sm:$0xff]
    %v575 = vld [vmem:[#allocation8 + $0xcf0] sm:$0xff]
    %v576 = vld [vmem:[#allocation8 + $0xcf8] sm:$0xff]
    %v577 = vld [vmem:[#allocation8 + $0xd00] sm:$0xff]
    %v578 = vld [vmem:[#allocation8 + $0xd08] sm:$0xff]
    %v579 = vld [vmem:[#allocation8 + $0xd10] sm:$0xff]
    %v580 = vld [vmem:[#allocation8 + $0xd18] sm:$0xff]
    %v581 = vld [vmem:[#allocation8 + $0xd20] sm:$0xff]
    %v582 = vld [vmem:[#allocation8 + $0xd28] sm:$0xff]
    %v583 = vld [vmem:[#allocation8 + $0xd30] sm:$0xff]
    %v584 = vld [vmem:[#allocation8 + $0xd38] sm:$0xff]
    %v585 = vld [vmem:[#allocation8 + $0xd40] sm:$0xff]
    %v586 = vld [vmem:[#allocation8 + $0xd48] sm:$0xff]
    %v587 = vld [vmem:[#allocation8 + $0xd50] sm:$0xff]
    %v588 = vld [vmem:[#allocation8 + $0xd58] sm:$0xff]
    %v589 = vld [vmem:[#allocation8 + $0xd60] sm:$0xff]
    %v590 = vld [vmem:[#allocation8 + $0xd68] sm:$0xff]
    %v591 = vld [vmem:[#allocation8 + $0xd70] sm:$0xff]
    %v592 = vld [vmem:[#allocation8 + $0xd78] sm:$0xff]
    %v593 = vld [vmem:[#allocation8 + $0xd80] sm:$0xff]
    %v594 = vld [vmem:[#allocation8 + $0xd88] sm:$0xff]
    %v595 = vld [vmem:[#allocation8 + $0xd90] sm:$0xff]
    %v596 = vld [vmem:[#allocation8 + $0xd98] sm:$0xff]
    %v597 = vld [vmem:[#allocation8 + $0xda0] sm:$0xff]
    %v598 = vld [vmem:[#allocation8 + $0xda8] sm:$0xff]
    %v599 = vld [vmem:[#allocation8 + $0xdb0] sm:$0xff]
    %v600 = vld [vmem:[#allocation8 + $0xdb8] sm:$0xff]
    %v601 = vld [vmem:[#allocation8 + $0xdc0] sm:$0xff]
    %v602 = vld [vmem:[#allocation8 + $0xdc8] sm:$0xff]
    %v603 = vld [vmem:[#allocation8 + $0xdd0] sm:$0xff]
    %v604 = vld [vmem:[#allocation8 + $0xdd8] sm:$0xff]
    %v605 = vld [vmem:[#allocation8 + $0xde0] sm:$0xff]
    %v606 = vld [vmem:[#allocation8 + $0xde8] sm:$0xff]
    %v607 = vld [vmem:[#allocation8 + $0xdf0] sm:$0xff]
    %v608 = vld [vmem:[#allocation8 + $0xdf8] sm:$0xff]
    %v609 = vld [vmem:[#allocation8 + $0xe00] sm:$0xff]
    %v610 = vld [vmem:[#allocation8 + $0xe08] sm:$0xff]
    %v611 = vld [vmem:[#allocation8 + $0xe10] sm:$0xff]
    %v612 = vld [vmem:[#allocation8 + $0xe18] sm:$0xff]
    %v613 = vld [vmem:[#allocation8 + $0xe20] sm:$0xff]
    %v614 = vld [vmem:[#allocation8 + $0xe28] sm:$0xff]
    %v615 = vld [vmem:[#allocation8 + $0xe30] sm:$0xff]
    %v616 = vld [vmem:[#allocation8 + $0xe38] sm:$0xff]
    %v617 = vld [vmem:[#allocation8 + $0xe40] sm:$0xff]
    %v618 = vld [vmem:[#allocation8 + $0xe48] sm:$0xff]
    %v619 = vld [vmem:[#allocation8 + $0xe50] sm:$0xff]
    %v620 = vld [vmem:[#allocation8 + $0xe58] sm:$0xff]
    %v621 = vld [vmem:[#allocation8 + $0xe60] sm:$0xff]
    %v622 = vld [vmem:[#allocation8 + $0xe68] sm:$0xff]
    %v623 = vld [vmem:[#allocation8 + $0xe70] sm:$0xff]
    %v624 = vld [vmem:[#allocation8 + $0xe78] sm:$0xff]
    %v625 = vld [vmem:[#allocation8 + $0xe80] sm:$0xff]
    %v626 = vld [vmem:[#allocation8 + $0xe88] sm:$0xff]
    %v627 = vld [vmem:[#allocation8 + $0xe90] sm:$0xff]
    %v628 = vld [vmem:[#allocation8 + $0xe98] sm:$0xff]
    %v629 = vld [vmem:[#allocation8 + $0xea0] sm:$0xff]
    %v630 = vld [vmem:[#allocation8 + $0xea8] sm:$0xff]
    %v631 = vld [vmem:[#allocation8 + $0xeb0] sm:$0xff]
    %v632 = vld [vmem:[#allocation8 + $0xeb8] sm:$0xff]
    %v633 = vld [vmem:[#allocation8 + $0xec0] sm:$0xff]
    %v634 = vld [vmem:[#allocation8 + $0xec8] sm:$0xff]
    %v635 = vld [vmem:[#allocation8 + $0xed0] sm:$0xff]
    %v636 = vld [vmem:[#allocation8 + $0xed8] sm:$0xff]
    %v637 = vld [vmem:[#allocation8 + $0xee0] sm:$0xff]
    %v638 = vld [vmem:[#allocation8 + $0xee8] sm:$0xff]
    %v639 = vld [vmem:[#allocation8 + $0xef0] sm:$0xff]
    %v640 = vld [vmem:[#allocation8 + $0xef8] sm:$0xff]
    %v641 = vld [vmem:[#allocation8 + $0xf00] sm:$0xff]
    %v642 = vld [vmem:[#allocation8 + $0xf08] sm:$0xff]
    %v643 = vld [vmem:[#allocation8 + $0xf10] sm:$0xff]
    %v644 = vld [vmem:[#allocation8 + $0xf18] sm:$0xff]
    %v645 = vld [vmem:[#allocation8 + $0xf20] sm:$0xff]
    %v646 = vld [vmem:[#allocation8 + $0xf28] sm:$0xff]
    %v647 = vld [vmem:[#allocation8 + $0xf30] sm:$0xff]
    %v648 = vld [vmem:[#allocation8 + $0xf38] sm:$0xff]
    %v649 = vld [vmem:[#allocation8 + $0xf40] sm:$0xff]
    %v650 = vld [vmem:[#allocation8 + $0xf48] sm:$0xff]
    %v651 = vld [vmem:[#allocation8 + $0xf50] sm:$0xff]
    %v652 = vld [vmem:[#allocation8 + $0xf58] sm:$0xff]
    %v653 = vld [vmem:[#allocation8 + $0xf60] sm:$0xff]
    %v654 = vld [vmem:[#allocation8 + $0xf68] sm:$0xff]
    %v655 = vld [vmem:[#allocation8 + $0xf70] sm:$0xff]
    %v656 = vld [vmem:[#allocation8 + $0xf78] sm:$0xff]
    %v657 = vld [vmem:[#allocation8 + $0xf80] sm:$0xff]
    %v658 = vld [vmem:[#allocation8 + $0xf88] sm:$0xff]
    %v659 = vld [vmem:[#allocation8 + $0xf90] sm:$0xff]
    %v660 = vld [vmem:[#allocation8 + $0xf98] sm:$0xff]
    %v661 = vld [vmem:[#allocation8 + $0xfa0] sm:$0xff]
    %v662 = vld [vmem:[#allocation8 + $0xfa8] sm:$0xff]
    %v663 = vld [vmem:[#allocation8 + $0xfb0] sm:$0xff]
    %v664 = vld [vmem:[#allocation8 + $0xfb8] sm:$0xff]
    %v665 = vld [vmem:[#allocation8 + $0xfc0] sm:$0xff]
    %v666 = vld [vmem:[#allocation8 + $0xfc8] sm:$0xff]
    %v667 = vld [vmem:[#allocation8 + $0xfd0] sm:$0xff]
    %v668 = vld [vmem:[#allocation8 + $0xfd8] sm:$0xff]
    %v669 = vld [vmem:[#allocation8 + $0xfe0] sm:$0xff]
    %v670 = vld [vmem:[#allocation8 + $0xfe8] sm:$0xff]
    %v671 = vld [vmem:[#allocation8 + $0xff0] sm:$0xff]
    %v672 = vld [vmem:[#allocation8 + $0xff8] sm:$0xff]
    %v677 = vunpack.c.l.b16 %v157
    %v678 = vunpack.c.h.b16 %v157
    %v679 = vunpack.c.l.b16 %v158
    %v680 = vunpack.c.h.b16 %v158
    %v681 = vunpack.c.l.b16 %v159
    %v682 = vunpack.c.h.b16 %v159
    %v683 = vunpack.c.l.b16 %v160
    %v684 = vunpack.c.h.b16 %v160
    %v685 = vpack.c.b16 %v677, %v677
    %v686 = vpack.c.b16 %v678, %v678
    %v687 = vpack.c.b16 %v679, %v679
    %v688 = vpack.c.b16 %v680, %v680
    %v689 = vpack.c.b16 %v681, %v681
    %v690 = vpack.c.b16 %v682, %v682
    %v691 = vpack.c.b16 %v683, %v683
    %v692 = vpack.c.b16 %v684, %v684
    %v1213 = vunpack.c.l.b16 %v161
    %v1214 = vunpack.c.h.b16 %v161
    %v1215 = vunpack.c.l.b16 %v162
    %v1216 = vunpack.c.h.b16 %v162
    %v1217 = vunpack.c.l.b16 %v163
    %v1218 = vunpack.c.h.b16 %v163
    %v1219 = vunpack.c.l.b16 %v164
    %v1220 = vunpack.c.h.b16 %v164
    %v1221 = vunpack.c.l.b16 %v165
    %v1222 = vunpack.c.h.b16 %v165
    %v1223 = vunpack.c.l.b16 %v166
    %v1224 = vunpack.c.h.b16 %v166
    %v1225 = vunpack.c.l.b16 %v167
    %v1226 = vunpack.c.h.b16 %v167
    %v1227 = vunpack.c.l.b16 %v168
    %v1228 = vunpack.c.h.b16 %v168
    %v1229 = vunpack.c.l.b16 %v169
    %v1230 = vunpack.c.h.b16 %v169
    %v1231 = vunpack.c.l.b16 %v170
    %v1232 = vunpack.c.h.b16 %v170
    %v1233 = vunpack.c.l.b16 %v171
    %v1234 = vunpack.c.h.b16 %v171
    %v1235 = vunpack.c.l.b16 %v172
    %v1236 = vunpack.c.h.b16 %v172
    %v1237 = vunpack.c.l.b16 %v173
    %v1238 = vunpack.c.h.b16 %v173
    %v1239 = vunpack.c.l.b16 %v174
    %v1240 = vunpack.c.h.b16 %v174
    %v1241 = vunpack.c.l.b16 %v175
    %v1242 = vunpack.c.h.b16 %v175
    %v1243 = vunpack.c.l.b16 %v176
    %v1244 = vunpack.c.h.b16 %v176
    %v1245 = vunpack.c.l.b16 %v177
    %v1246 = vunpack.c.h.b16 %v177
    %v1247 = vunpack.c.l.b16 %v178
    %v1248 = vunpack.c.h.b16 %v178
    %v1249 = vunpack.c.l.b16 %v179
    %v1250 = vunpack.c.h.b16 %v179
    %v1251 = vunpack.c.l.b16 %v180
    %v1252 = vunpack.c.h.b16 %v180
    %v1253 = vunpack.c.l.b16 %v181
    %v1254 = vunpack.c.h.b16 %v181
    %v1255 = vunpack.c.l.b16 %v182
    %v1256 = vunpack.c.h.b16 %v182
    %v1257 = vunpack.c.l.b16 %v183
    %v1258 = vunpack.c.h.b16 %v183
    %v1259 = vunpack.c.l.b16 %v184
    %v1260 = vunpack.c.h.b16 %v184
    %v1261 = vunpack.c.l.b16 %v185
    %v1262 = vunpack.c.h.b16 %v185
    %v1263 = vunpack.c.l.b16 %v186
    %v1264 = vunpack.c.h.b16 %v186
    %v1265 = vunpack.c.l.b16 %v187
    %v1266 = vunpack.c.h.b16 %v187
    %v1267 = vunpack.c.l.b16 %v188
    %v1268 = vunpack.c.h.b16 %v188
    %v1269 = vunpack.c.l.b16 %v189
    %v1270 = vunpack.c.h.b16 %v189
    %v1271 = vunpack.c.l.b16 %v190
    %v1272 = vunpack.c.h.b16 %v190
    %v1273 = vunpack.c.l.b16 %v191
    %v1274 = vunpack.c.h.b16 %v191
    %v1275 = vunpack.c.l.b16 %v192
    %v1276 = vunpack.c.h.b16 %v192
    %v1277 = vunpack.c.l.b16 %v193
    %v1278 = vunpack.c.h.b16 %v193
    %v1279 = vunpack.c.l.b16 %v194
    %v1280 = vunpack.c.h.b16 %v194
    %v1281 = vunpack.c.l.b16 %v195
    %v1282 = vunpack.c.h.b16 %v195
    %v1283 = vunpack.c.l.b16 %v196
    %v1284 = vunpack.c.h.b16 %v196
    %v1285 = vunpack.c.l.b16 %v197
    %v1286 = vunpack.c.h.b16 %v197
    %v1287 = vunpack.c.l.b16 %v198
    %v1288 = vunpack.c.h.b16 %v198
    %v1289 = vunpack.c.l.b16 %v199
    %v1290 = vunpack.c.h.b16 %v199
    %v1291 = vunpack.c.l.b16 %v200
    %v1292 = vunpack.c.h.b16 %v200
    %v1293 = vunpack.c.l.b16 %v201
    %v1294 = vunpack.c.h.b16 %v201
    %v1295 = vunpack.c.l.b16 %v202
    %v1296 = vunpack.c.h.b16 %v202
    %v1297 = vunpack.c.l.b16 %v203
    %v1298 = vunpack.c.h.b16 %v203
    %v1299 = vunpack.c.l.b16 %v204
    %v1300 = vunpack.c.h.b16 %v204
    %v1301 = vunpack.c.l.b16 %v205
    %v1302 = vunpack.c.h.b16 %v205
    %v1303 = vunpack.c.l.b16 %v206
    %v1304 = vunpack.c.h.b16 %v206
    %v1305 = vunpack.c.l.b16 %v207
    %v1306 = vunpack.c.h.b16 %v207
    %v1307 = vunpack.c.l.b16 %v208
    %v1308 = vunpack.c.h.b16 %v208
    %v1309 = vunpack.c.l.b16 %v209
    %v1310 = vunpack.c.h.b16 %v209
    %v1311 = vunpack.c.l.b16 %v210
    %v1312 = vunpack.c.h.b16 %v210
    %v1313 = vunpack.c.l.b16 %v211
    %v1314 = vunpack.c.h.b16 %v211
    %v1315 = vunpack.c.l.b16 %v212
    %v1316 = vunpack.c.h.b16 %v212
    %v1317 = vunpack.c.l.b16 %v213
    %v1318 = vunpack.c.h.b16 %v213
    %v1319 = vunpack.c.l.b16 %v214
    %v1320 = vunpack.c.h.b16 %v214
    %v1321 = vunpack.c.l.b16 %v215
    %v1322 = vunpack.c.h.b16 %v215
    %v1323 = vunpack.c.l.b16 %v216
    %v1324 = vunpack.c.h.b16 %v216
    %v1325 = vunpack.c.l.b16 %v217
    %v1326 = vunpack.c.h.b16 %v217
    %v1327 = vunpack.c.l.b16 %v218
    %v1328 = vunpack.c.h.b16 %v218
    %v1329 = vunpack.c.l.b16 %v219
    %v1330 = vunpack.c.h.b16 %v219
    %v1331 = vunpack.c.l.b16 %v220
    %v1332 = vunpack.c.h.b16 %v220
    %v1333 = vunpack.c.l.b16 %v221
    %v1334 = vunpack.c.h.b16 %v221
    %v1335 = vunpack.c.l.b16 %v222
    %v1336 = vunpack.c.h.b16 %v222
    %v1337 = vunpack.c.l.b16 %v223
    %v1338 = vunpack.c.h.b16 %v223
    %v1339 = vunpack.c.l.b16 %v224
    %v1340 = vunpack.c.h.b16 %v224
    %v1341 = vunpack.c.l.b16 %v225
    %v1342 = vunpack.c.h.b16 %v225
    %v1343 = vunpack.c.l.b16 %v226
    %v1344 = vunpack.c.h.b16 %v226
    %v1345 = vunpack.c.l.b16 %v227
    %v1346 = vunpack.c.h.b16 %v227
    %v1347 = vunpack.c.l.b16 %v228
    %v1348 = vunpack.c.h.b16 %v228
    %v1349 = vunpack.c.l.b16 %v229
    %v1350 = vunpack.c.h.b16 %v229
    %v1351 = vunpack.c.l.b16 %v230
    %v1352 = vunpack.c.h.b16 %v230
    %v1353 = vunpack.c.l.b16 %v231
    %v1354 = vunpack.c.h.b16 %v231
    %v1355 = vunpack.c.l.b16 %v232
    %v1356 = vunpack.c.h.b16 %v232
    %v1357 = vunpack.c.l.b16 %v233
    %v1358 = vunpack.c.h.b16 %v233
    %v1359 = vunpack.c.l.b16 %v234
    %v1360 = vunpack.c.h.b16 %v234
    %v1361 = vunpack.c.l.b16 %v235
    %v1362 = vunpack.c.h.b16 %v235
    %v1363 = vunpack.c.l.b16 %v236
    %v1364 = vunpack.c.h.b16 %v236
    %v1365 = vunpack.c.l.b16 %v237
    %v1366 = vunpack.c.h.b16 %v237
    %v1367 = vunpack.c.l.b16 %v238
    %v1368 = vunpack.c.h.b16 %v238
    %v1369 = vunpack.c.l.b16 %v239
    %v1370 = vunpack.c.h.b16 %v239
    %v1371 = vunpack.c.l.b16 %v240
    %v1372 = vunpack.c.h.b16 %v240
    %v1373 = vunpack.c.l.b16 %v241
    %v1374 = vunpack.c.h.b16 %v241
    %v1375 = vunpack.c.l.b16 %v242
    %v1376 = vunpack.c.h.b16 %v242
    %v1377 = vunpack.c.l.b16 %v243
    %v1378 = vunpack.c.h.b16 %v243
    %v1379 = vunpack.c.l.b16 %v244
    %v1380 = vunpack.c.h.b16 %v244
    %v1381 = vunpack.c.l.b16 %v245
    %v1382 = vunpack.c.h.b16 %v245
    %v1383 = vunpack.c.l.b16 %v246
    %v1384 = vunpack.c.h.b16 %v246
    %v1385 = vunpack.c.l.b16 %v247
    %v1386 = vunpack.c.h.b16 %v247
    %v1387 = vunpack.c.l.b16 %v248
    %v1388 = vunpack.c.h.b16 %v248
    %v1389 = vunpack.c.l.b16 %v249
    %v1390 = vunpack.c.h.b16 %v249
    %v1391 = vunpack.c.l.b16 %v250
    %v1392 = vunpack.c.h.b16 %v250
    %v1393 = vunpack.c.l.b16 %v251
    %v1394 = vunpack.c.h.b16 %v251
    %v1395 = vunpack.c.l.b16 %v252
    %v1396 = vunpack.c.h.b16 %v252
    %v1397 = vunpack.c.l.b16 %v253
    %v1398 = vunpack.c.h.b16 %v253
    %v1399 = vunpack.c.l.b16 %v254
    %v1400 = vunpack.c.h.b16 %v254
    %v1401 = vunpack.c.l.b16 %v255
    %v1402 = vunpack.c.h.b16 %v255
    %v1403 = vunpack.c.l.b16 %v256
    %v1404 = vunpack.c.h.b16 %v256
    %v1405 = vunpack.c.l.b16 %v257
    %v1406 = vunpack.c.h.b16 %v257
    %v1407 = vunpack.c.l.b16 %v258
    %v1408 = vunpack.c.h.b16 %v258
    %v1409 = vunpack.c.l.b16 %v259
    %v1410 = vunpack.c.h.b16 %v259
    %v1411 = vunpack.c.l.b16 %v260
    %v1412 = vunpack.c.h.b16 %v260
    %v1413 = vunpack.c.l.b16 %v261
    %v1414 = vunpack.c.h.b16 %v261
    %v1415 = vunpack.c.l.b16 %v262
    %v1416 = vunpack.c.h.b16 %v262
    %v1417 = vunpack.c.l.b16 %v263
    %v1418 = vunpack.c.h.b16 %v263
    %v1419 = vunpack.c.l.b16 %v264
    %v1420 = vunpack.c.h.b16 %v264
    %v1421 = vunpack.c.l.b16 %v265
    %v1422 = vunpack.c.h.b16 %v265
    %v1423 = vunpack.c.l.b16 %v266
    %v1424 = vunpack.c.h.b16 %v266
    %v1425 = vunpack.c.l.b16 %v267
    %v1426 = vunpack.c.h.b16 %v267
    %v1427 = vunpack.c.l.b16 %v268
    %v1428 = vunpack.c.h.b16 %v268
    %v1429 = vunpack.c.l.b16 %v269
    %v1430 = vunpack.c.h.b16 %v269
    %v1431 = vunpack.c.l.b16 %v270
    %v1432 = vunpack.c.h.b16 %v270
    %v1433 = vunpack.c.l.b16 %v271
    %v1434 = vunpack.c.h.b16 %v271
    %v1435 = vunpack.c.l.b16 %v272
    %v1436 = vunpack.c.h.b16 %v272
    %v1437 = vunpack.c.l.b16 %v273
    %v1438 = vunpack.c.h.b16 %v273
    %v1439 = vunpack.c.l.b16 %v274
    %v1440 = vunpack.c.h.b16 %v274
    %v1441 = vunpack.c.l.b16 %v275
    %v1442 = vunpack.c.h.b16 %v275
    %v1443 = vunpack.c.l.b16 %v276
    %v1444 = vunpack.c.h.b16 %v276
    %v1445 = vunpack.c.l.b16 %v277
    %v1446 = vunpack.c.h.b16 %v277
    %v1447 = vunpack.c.l.b16 %v278
    %v1448 = vunpack.c.h.b16 %v278
    %v1449 = vunpack.c.l.b16 %v279
    %v1450 = vunpack.c.h.b16 %v279
    %v1451 = vunpack.c.l.b16 %v280
    %v1452 = vunpack.c.h.b16 %v280
    %v1453 = vunpack.c.l.b16 %v281
    %v1454 = vunpack.c.h.b16 %v281
    %v1455 = vunpack.c.l.b16 %v282
    %v1456 = vunpack.c.h.b16 %v282
    %v1457 = vunpack.c.l.b16 %v283
    %v1458 = vunpack.c.h.b16 %v283
    %v1459 = vunpack.c.l.b16 %v284
    %v1460 = vunpack.c.h.b16 %v284
    %v1461 = vunpack.c.l.b16 %v285
    %v1462 = vunpack.c.h.b16 %v285
    %v1463 = vunpack.c.l.b16 %v286
    %v1464 = vunpack.c.h.b16 %v286
    %v1465 = vunpack.c.l.b16 %v287
    %v1466 = vunpack.c.h.b16 %v287
    %v1467 = vunpack.c.l.b16 %v288
    %v1468 = vunpack.c.h.b16 %v288
    %v1469 = vunpack.c.l.b16 %v289
    %v1470 = vunpack.c.h.b16 %v289
    %v1471 = vunpack.c.l.b16 %v290
    %v1472 = vunpack.c.h.b16 %v290
    %v1473 = vunpack.c.l.b16 %v291
    %v1474 = vunpack.c.h.b16 %v291
    %v1475 = vunpack.c.l.b16 %v292
    %v1476 = vunpack.c.h.b16 %v292
    %v1477 = vunpack.c.l.b16 %v293
    %v1478 = vunpack.c.h.b16 %v293
    %v1479 = vunpack.c.l.b16 %v294
    %v1480 = vunpack.c.h.b16 %v294
    %v1481 = vunpack.c.l.b16 %v295
    %v1482 = vunpack.c.h.b16 %v295
    %v1483 = vunpack.c.l.b16 %v296
    %v1484 = vunpack.c.h.b16 %v296
    %v1485 = vunpack.c.l.b16 %v297
    %v1486 = vunpack.c.h.b16 %v297
    %v1487 = vunpack.c.l.b16 %v298
    %v1488 = vunpack.c.h.b16 %v298
    %v1489 = vunpack.c.l.b16 %v299
    %v1490 = vunpack.c.h.b16 %v299
    %v1491 = vunpack.c.l.b16 %v300
    %v1492 = vunpack.c.h.b16 %v300
    %v1493 = vunpack.c.l.b16 %v301
    %v1494 = vunpack.c.h.b16 %v301
    %v1495 = vunpack.c.l.b16 %v302
    %v1496 = vunpack.c.h.b16 %v302
    %v1497 = vunpack.c.l.b16 %v303
    %v1498 = vunpack.c.h.b16 %v303
    %v1499 = vunpack.c.l.b16 %v304
    %v1500 = vunpack.c.h.b16 %v304
    %v1501 = vunpack.c.l.b16 %v305
    %v1502 = vunpack.c.h.b16 %v305
    %v1503 = vunpack.c.l.b16 %v306
    %v1504 = vunpack.c.h.b16 %v306
    %v1505 = vunpack.c.l.b16 %v307
    %v1506 = vunpack.c.h.b16 %v307
    %v1507 = vunpack.c.l.b16 %v308
    %v1508 = vunpack.c.h.b16 %v308
    %v1509 = vunpack.c.l.b16 %v309
    %v1510 = vunpack.c.h.b16 %v309
    %v1511 = vunpack.c.l.b16 %v310
    %v1512 = vunpack.c.h.b16 %v310
    %v1513 = vunpack.c.l.b16 %v311
    %v1514 = vunpack.c.h.b16 %v311
    %v1515 = vunpack.c.l.b16 %v312
    %v1516 = vunpack.c.h.b16 %v312
    %v1517 = vunpack.c.l.b16 %v313
    %v1518 = vunpack.c.h.b16 %v313
    %v1519 = vunpack.c.l.b16 %v314
    %v1520 = vunpack.c.h.b16 %v314
    %v1521 = vunpack.c.l.b16 %v315
    %v1522 = vunpack.c.h.b16 %v315
    %v1523 = vunpack.c.l.b16 %v316
    %v1524 = vunpack.c.h.b16 %v316
    %v1525 = vunpack.c.l.b16 %v317
    %v1526 = vunpack.c.h.b16 %v317
    %v1527 = vunpack.c.l.b16 %v318
    %v1528 = vunpack.c.h.b16 %v318
    %v1529 = vunpack.c.l.b16 %v319
    %v1530 = vunpack.c.h.b16 %v319
    %v1531 = vunpack.c.l.b16 %v320
    %v1532 = vunpack.c.h.b16 %v320
    %v1533 = vunpack.c.l.b16 %v321
    %v1534 = vunpack.c.h.b16 %v321
    %v1535 = vunpack.c.l.b16 %v322
    %v1536 = vunpack.c.h.b16 %v322
    %v1537 = vunpack.c.l.b16 %v323
    %v1538 = vunpack.c.h.b16 %v323
    %v1539 = vunpack.c.l.b16 %v324
    %v1540 = vunpack.c.h.b16 %v324
    %v1541 = vunpack.c.l.b16 %v325
    %v1542 = vunpack.c.h.b16 %v325
    %v1543 = vunpack.c.l.b16 %v326
    %v1544 = vunpack.c.h.b16 %v326
    %v1545 = vunpack.c.l.b16 %v327
    %v1546 = vunpack.c.h.b16 %v327
    %v1547 = vunpack.c.l.b16 %v328
    %v1548 = vunpack.c.h.b16 %v328
    %v1549 = vunpack.c.l.b16 %v329
    %v1550 = vunpack.c.h.b16 %v329
    %v1551 = vunpack.c.l.b16 %v330
    %v1552 = vunpack.c.h.b16 %v330
    %v1553 = vunpack.c.l.b16 %v331
    %v1554 = vunpack.c.h.b16 %v331
    %v1555 = vunpack.c.l.b16 %v332
    %v1556 = vunpack.c.h.b16 %v332
    %v1557 = vunpack.c.l.b16 %v333
    %v1558 = vunpack.c.h.b16 %v333
    %v1559 = vunpack.c.l.b16 %v334
    %v1560 = vunpack.c.h.b16 %v334
    %v1561 = vunpack.c.l.b16 %v335
    %v1562 = vunpack.c.h.b16 %v335
    %v1563 = vunpack.c.l.b16 %v336
    %v1564 = vunpack.c.h.b16 %v336
    %v1565 = vunpack.c.l.b16 %v337
    %v1566 = vunpack.c.h.b16 %v337
    %v1567 = vunpack.c.l.b16 %v338
    %v1568 = vunpack.c.h.b16 %v338
    %v1569 = vunpack.c.l.b16 %v339
    %v1570 = vunpack.c.h.b16 %v339
    %v1571 = vunpack.c.l.b16 %v340
    %v1572 = vunpack.c.h.b16 %v340
    %v1573 = vunpack.c.l.b16 %v341
    %v1574 = vunpack.c.h.b16 %v341
    %v1575 = vunpack.c.l.b16 %v342
    %v1576 = vunpack.c.h.b16 %v342
    %v1577 = vunpack.c.l.b16 %v343
    %v1578 = vunpack.c.h.b16 %v343
    %v1579 = vunpack.c.l.b16 %v344
    %v1580 = vunpack.c.h.b16 %v344
    %v1581 = vunpack.c.l.b16 %v345
    %v1582 = vunpack.c.h.b16 %v345
    %v1583 = vunpack.c.l.b16 %v346
    %v1584 = vunpack.c.h.b16 %v346
    %v1585 = vunpack.c.l.b16 %v347
    %v1586 = vunpack.c.h.b16 %v347
    %v1587 = vunpack.c.l.b16 %v348
    %v1588 = vunpack.c.h.b16 %v348
    %v1589 = vunpack.c.l.b16 %v349
    %v1590 = vunpack.c.h.b16 %v349
    %v1591 = vunpack.c.l.b16 %v350
    %v1592 = vunpack.c.h.b16 %v350
    %v1593 = vunpack.c.l.b16 %v351
    %v1594 = vunpack.c.h.b16 %v351
    %v1595 = vunpack.c.l.b16 %v352
    %v1596 = vunpack.c.h.b16 %v352
    %v1597 = vunpack.c.l.b16 %v353
    %v1598 = vunpack.c.h.b16 %v353
    %v1599 = vunpack.c.l.b16 %v354
    %v1600 = vunpack.c.h.b16 %v354
    %v1601 = vunpack.c.l.b16 %v355
    %v1602 = vunpack.c.h.b16 %v355
    %v1603 = vunpack.c.l.b16 %v356
    %v1604 = vunpack.c.h.b16 %v356
    %v1605 = vunpack.c.l.b16 %v357
    %v1606 = vunpack.c.h.b16 %v357
    %v1607 = vunpack.c.l.b16 %v358
    %v1608 = vunpack.c.h.b16 %v358
    %v1609 = vunpack.c.l.b16 %v359
    %v1610 = vunpack.c.h.b16 %v359
    %v1611 = vunpack.c.l.b16 %v360
    %v1612 = vunpack.c.h.b16 %v360
    %v1613 = vunpack.c.l.b16 %v361
    %v1614 = vunpack.c.h.b16 %v361
    %v1615 = vunpack.c.l.b16 %v362
    %v1616 = vunpack.c.h.b16 %v362
    %v1617 = vunpack.c.l.b16 %v363
    %v1618 = vunpack.c.h.b16 %v363
    %v1619 = vunpack.c.l.b16 %v364
    %v1620 = vunpack.c.h.b16 %v364
    %v1621 = vunpack.c.l.b16 %v365
    %v1622 = vunpack.c.h.b16 %v365
    %v1623 = vunpack.c.l.b16 %v366
    %v1624 = vunpack.c.h.b16 %v366
    %v1625 = vunpack.c.l.b16 %v367
    %v1626 = vunpack.c.h.b16 %v367
    %v1627 = vunpack.c.l.b16 %v368
    %v1628 = vunpack.c.h.b16 %v368
    %v1629 = vunpack.c.l.b16 %v369
    %v1630 = vunpack.c.h.b16 %v369
    %v1631 = vunpack.c.l.b16 %v370
    %v1632 = vunpack.c.h.b16 %v370
    %v1633 = vunpack.c.l.b16 %v371
    %v1634 = vunpack.c.h.b16 %v371
    %v1635 = vunpack.c.l.b16 %v372
    %v1636 = vunpack.c.h.b16 %v372
    %v1637 = vunpack.c.l.b16 %v373
    %v1638 = vunpack.c.h.b16 %v373
    %v1639 = vunpack.c.l.b16 %v374
    %v1640 = vunpack.c.h.b16 %v374
    %v1641 = vunpack.c.l.b16 %v375
    %v1642 = vunpack.c.h.b16 %v375
    %v1643 = vunpack.c.l.b16 %v376
    %v1644 = vunpack.c.h.b16 %v376
    %v1645 = vunpack.c.l.b16 %v377
    %v1646 = vunpack.c.h.b16 %v377
    %v1647 = vunpack.c.l.b16 %v378
    %v1648 = vunpack.c.h.b16 %v378
    %v1649 = vunpack.c.l.b16 %v379
    %v1650 = vunpack.c.h.b16 %v379
    %v1651 = vunpack.c.l.b16 %v380
    %v1652 = vunpack.c.h.b16 %v380
    %v1653 = vunpack.c.l.b16 %v381
    %v1654 = vunpack.c.h.b16 %v381
    %v1655 = vunpack.c.l.b16 %v382
    %v1656 = vunpack.c.h.b16 %v382
    %v1657 = vunpack.c.l.b16 %v383
    %v1658 = vunpack.c.h.b16 %v383
    %v1659 = vunpack.c.l.b16 %v384
    %v1660 = vunpack.c.h.b16 %v384
    %v1661 = vunpack.c.l.b16 %v385
    %v1662 = vunpack.c.h.b16 %v385
    %v1663 = vunpack.c.l.b16 %v386
    %v1664 = vunpack.c.h.b16 %v386
    %v1665 = vunpack.c.l.b16 %v387
    %v1666 = vunpack.c.h.b16 %v387
    %v1667 = vunpack.c.l.b16 %v388
    %v1668 = vunpack.c.h.b16 %v388
    %v1669 = vunpack.c.l.b16 %v389
    %v1670 = vunpack.c.h.b16 %v389
    %v1671 = vunpack.c.l.b16 %v390
    %v1672 = vunpack.c.h.b16 %v390
    %v1673 = vunpack.c.l.b16 %v391
    %v1674 = vunpack.c.h.b16 %v391
    %v1675 = vunpack.c.l.b16 %v392
    %v1676 = vunpack.c.h.b16 %v392
    %v1677 = vunpack.c.l.b16 %v393
    %v1678 = vunpack.c.h.b16 %v393
    %v1679 = vunpack.c.l.b16 %v394
    %v1680 = vunpack.c.h.b16 %v394
    %v1681 = vunpack.c.l.b16 %v395
    %v1682 = vunpack.c.h.b16 %v395
    %v1683 = vunpack.c.l.b16 %v396
    %v1684 = vunpack.c.h.b16 %v396
    %v1685 = vunpack.c.l.b16 %v397
    %v1686 = vunpack.c.h.b16 %v397
    %v1687 = vunpack.c.l.b16 %v398
    %v1688 = vunpack.c.h.b16 %v398
    %v1689 = vunpack.c.l.b16 %v399
    %v1690 = vunpack.c.h.b16 %v399
    %v1691 = vunpack.c.l.b16 %v400
    %v1692 = vunpack.c.h.b16 %v400
    %v1693 = vunpack.c.l.b16 %v401
    %v1694 = vunpack.c.h.b16 %v401
    %v1695 = vunpack.c.l.b16 %v402
    %v1696 = vunpack.c.h.b16 %v402
    %v1697 = vunpack.c.l.b16 %v403
    %v1698 = vunpack.c.h.b16 %v403
    %v1699 = vunpack.c.l.b16 %v404
    %v1700 = vunpack.c.h.b16 %v404
    %v1701 = vunpack.c.l.b16 %v405
    %v1702 = vunpack.c.h.b16 %v405
    %v1703 = vunpack.c.l.b16 %v406
    %v1704 = vunpack.c.h.b16 %v406
    %v1705 = vunpack.c.l.b16 %v407
    %v1706 = vunpack.c.h.b16 %v407
    %v1707 = vunpack.c.l.b16 %v408
    %v1708 = vunpack.c.h.b16 %v408
    %v1709 = vunpack.c.l.b16 %v409
    %v1710 = vunpack.c.h.b16 %v409
    %v1711 = vunpack.c.l.b16 %v410
    %v1712 = vunpack.c.h.b16 %v410
    %v1713 = vunpack.c.l.b16 %v411
    %v1714 = vunpack.c.h.b16 %v411
    %v1715 = vunpack.c.l.b16 %v412
    %v1716 = vunpack.c.h.b16 %v412
    %v1717 = vunpack.c.l.b16 %v413
    %v1718 = vunpack.c.h.b16 %v413
    %v1719 = vunpack.c.l.b16 %v414
    %v1720 = vunpack.c.h.b16 %v414
    %v1721 = vunpack.c.l.b16 %v415
    %v1722 = vunpack.c.h.b16 %v415
    %v1723 = vunpack.c.l.b16 %v416
    %v1724 = vunpack.c.h.b16 %v416
    %v1725 = vunpack.c.l.b16 %v417
    %v1726 = vunpack.c.h.b16 %v417
    %v1727 = vunpack.c.l.b16 %v418
    %v1728 = vunpack.c.h.b16 %v418
    %v1729 = vunpack.c.l.b16 %v419
    %v1730 = vunpack.c.h.b16 %v419
    %v1731 = vunpack.c.l.b16 %v420
    %v1732 = vunpack.c.h.b16 %v420
    %v1733 = vunpack.c.l.b16 %v421
    %v1734 = vunpack.c.h.b16 %v421
    %v1735 = vunpack.c.l.b16 %v422
    %v1736 = vunpack.c.h.b16 %v422
    %v1737 = vunpack.c.l.b16 %v423
    %v1738 = vunpack.c.h.b16 %v423
    %v1739 = vunpack.c.l.b16 %v424
    %v1740 = vunpack.c.h.b16 %v424
    %v1741 = vunpack.c.l.b16 %v425
    %v1742 = vunpack.c.h.b16 %v425
    %v1743 = vunpack.c.l.b16 %v426
    %v1744 = vunpack.c.h.b16 %v426
    %v1745 = vunpack.c.l.b16 %v427
    %v1746 = vunpack.c.h.b16 %v427
    %v1747 = vunpack.c.l.b16 %v428
    %v1748 = vunpack.c.h.b16 %v428
    %v1749 = vunpack.c.l.b16 %v429
    %v1750 = vunpack.c.h.b16 %v429
    %v1751 = vunpack.c.l.b16 %v430
    %v1752 = vunpack.c.h.b16 %v430
    %v1753 = vunpack.c.l.b16 %v431
    %v1754 = vunpack.c.h.b16 %v431
    %v1755 = vunpack.c.l.b16 %v432
    %v1756 = vunpack.c.h.b16 %v432
    %v1757 = vunpack.c.l.b16 %v433
    %v1758 = vunpack.c.h.b16 %v433
    %v1759 = vunpack.c.l.b16 %v434
    %v1760 = vunpack.c.h.b16 %v434
    %v1761 = vunpack.c.l.b16 %v435
    %v1762 = vunpack.c.h.b16 %v435
    %v1763 = vunpack.c.l.b16 %v436
    %v1764 = vunpack.c.h.b16 %v436
    %v1765 = vunpack.c.l.b16 %v437
    %v1766 = vunpack.c.h.b16 %v437
    %v1767 = vunpack.c.l.b16 %v438
    %v1768 = vunpack.c.h.b16 %v438
    %v1769 = vunpack.c.l.b16 %v439
    %v1770 = vunpack.c.h.b16 %v439
    %v1771 = vunpack.c.l.b16 %v440
    %v1772 = vunpack.c.h.b16 %v440
    %v1773 = vunpack.c.l.b16 %v441
    %v1774 = vunpack.c.h.b16 %v441
    %v1775 = vunpack.c.l.b16 %v442
    %v1776 = vunpack.c.h.b16 %v442
    %v1777 = vunpack.c.l.b16 %v443
    %v1778 = vunpack.c.h.b16 %v443
    %v1779 = vunpack.c.l.b16 %v444
    %v1780 = vunpack.c.h.b16 %v444
    %v1781 = vunpack.c.l.b16 %v445
    %v1782 = vunpack.c.h.b16 %v445
    %v1783 = vunpack.c.l.b16 %v446
    %v1784 = vunpack.c.h.b16 %v446
    %v1785 = vunpack.c.l.b16 %v447
    %v1786 = vunpack.c.h.b16 %v447
    %v1787 = vunpack.c.l.b16 %v448
    %v1788 = vunpack.c.h.b16 %v448
    %v1789 = vunpack.c.l.b16 %v449
    %v1790 = vunpack.c.h.b16 %v449
    %v1791 = vunpack.c.l.b16 %v450
    %v1792 = vunpack.c.h.b16 %v450
    %v1793 = vunpack.c.l.b16 %v451
    %v1794 = vunpack.c.h.b16 %v451
    %v1795 = vunpack.c.l.b16 %v452
    %v1796 = vunpack.c.h.b16 %v452
    %v1797 = vunpack.c.l.b16 %v453
    %v1798 = vunpack.c.h.b16 %v453
    %v1799 = vunpack.c.l.b16 %v454
    %v1800 = vunpack.c.h.b16 %v454
    %v1801 = vunpack.c.l.b16 %v455
    %v1802 = vunpack.c.h.b16 %v455
    %v1803 = vunpack.c.l.b16 %v456
    %v1804 = vunpack.c.h.b16 %v456
    %v1805 = vunpack.c.l.b16 %v457
    %v1806 = vunpack.c.h.b16 %v457
    %v1807 = vunpack.c.l.b16 %v458
    %v1808 = vunpack.c.h.b16 %v458
    %v1809 = vunpack.c.l.b16 %v459
    %v1810 = vunpack.c.h.b16 %v459
    %v1811 = vunpack.c.l.b16 %v460
    %v1812 = vunpack.c.h.b16 %v460
    %v1813 = vunpack.c.l.b16 %v461
    %v1814 = vunpack.c.h.b16 %v461
    %v1815 = vunpack.c.l.b16 %v462
    %v1816 = vunpack.c.h.b16 %v462
    %v1817 = vunpack.c.l.b16 %v463
    %v1818 = vunpack.c.h.b16 %v463
    %v1819 = vunpack.c.l.b16 %v464
    %v1820 = vunpack.c.h.b16 %v464
    %v1821 = vunpack.c.l.b16 %v465
    %v1822 = vunpack.c.h.b16 %v465
    %v1823 = vunpack.c.l.b16 %v466
    %v1824 = vunpack.c.h.b16 %v466
    %v1825 = vunpack.c.l.b16 %v467
    %v1826 = vunpack.c.h.b16 %v467
    %v1827 = vunpack.c.l.b16 %v468
    %v1828 = vunpack.c.h.b16 %v468
    %v1829 = vunpack.c.l.b16 %v469
    %v1830 = vunpack.c.h.b16 %v469
    %v1831 = vunpack.c.l.b16 %v470
    %v1832 = vunpack.c.h.b16 %v470
    %v1833 = vunpack.c.l.b16 %v471
    %v1834 = vunpack.c.h.b16 %v471
    %v1835 = vunpack.c.l.b16 %v472
    %v1836 = vunpack.c.h.b16 %v472
    %v1837 = vunpack.c.l.b16 %v473
    %v1838 = vunpack.c.h.b16 %v473
    %v1839 = vunpack.c.l.b16 %v474
    %v1840 = vunpack.c.h.b16 %v474
    %v1841 = vunpack.c.l.b16 %v475
    %v1842 = vunpack.c.h.b16 %v475
    %v1843 = vunpack.c.l.b16 %v476
    %v1844 = vunpack.c.h.b16 %v476
    %v1845 = vunpack.c.l.b16 %v477
    %v1846 = vunpack.c.h.b16 %v477
    %v1847 = vunpack.c.l.b16 %v478
    %v1848 = vunpack.c.h.b16 %v478
    %v1849 = vunpack.c.l.b16 %v479
    %v1850 = vunpack.c.h.b16 %v479
    %v1851 = vunpack.c.l.b16 %v480
    %v1852 = vunpack.c.h.b16 %v480
    %v1853 = vunpack.c.l.b16 %v481
    %v1854 = vunpack.c.h.b16 %v481
    %v1855 = vunpack.c.l.b16 %v482
    %v1856 = vunpack.c.h.b16 %v482
    %v1857 = vunpack.c.l.b16 %v483
    %v1858 = vunpack.c.h.b16 %v483
    %v1859 = vunpack.c.l.b16 %v484
    %v1860 = vunpack.c.h.b16 %v484
    %v1861 = vunpack.c.l.b16 %v485
    %v1862 = vunpack.c.h.b16 %v485
    %v1863 = vunpack.c.l.b16 %v486
    %v1864 = vunpack.c.h.b16 %v486
    %v1865 = vunpack.c.l.b16 %v487
    %v1866 = vunpack.c.h.b16 %v487
    %v1867 = vunpack.c.l.b16 %v488
    %v1868 = vunpack.c.h.b16 %v488
    %v1869 = vunpack.c.l.b16 %v489
    %v1870 = vunpack.c.h.b16 %v489
    %v1871 = vunpack.c.l.b16 %v490
    %v1872 = vunpack.c.h.b16 %v490
    %v1873 = vunpack.c.l.b16 %v491
    %v1874 = vunpack.c.h.b16 %v491
    %v1875 = vunpack.c.l.b16 %v492
    %v1876 = vunpack.c.h.b16 %v492
    %v1877 = vunpack.c.l.b16 %v493
    %v1878 = vunpack.c.h.b16 %v493
    %v1879 = vunpack.c.l.b16 %v494
    %v1880 = vunpack.c.h.b16 %v494
    %v1881 = vunpack.c.l.b16 %v495
    %v1882 = vunpack.c.h.b16 %v495
    %v1883 = vunpack.c.l.b16 %v496
    %v1884 = vunpack.c.h.b16 %v496
    %v1885 = vunpack.c.l.b16 %v497
    %v1886 = vunpack.c.h.b16 %v497
    %v1887 = vunpack.c.l.b16 %v498
    %v1888 = vunpack.c.h.b16 %v498
    %v1889 = vunpack.c.l.b16 %v499
    %v1890 = vunpack.c.h.b16 %v499
    %v1891 = vunpack.c.l.b16 %v500
    %v1892 = vunpack.c.h.b16 %v500
    %v1893 = vunpack.c.l.b16 %v501
    %v1894 = vunpack.c.h.b16 %v501
    %v1895 = vunpack.c.l.b16 %v502
    %v1896 = vunpack.c.h.b16 %v502
    %v1897 = vunpack.c.l.b16 %v503
    %v1898 = vunpack.c.h.b16 %v503
    %v1899 = vunpack.c.l.b16 %v504
    %v1900 = vunpack.c.h.b16 %v504
    %v1901 = vunpack.c.l.b16 %v505
    %v1902 = vunpack.c.h.b16 %v505
    %v1903 = vunpack.c.l.b16 %v506
    %v1904 = vunpack.c.h.b16 %v506
    %v1905 = vunpack.c.l.b16 %v507
    %v1906 = vunpack.c.h.b16 %v507
    %v1907 = vunpack.c.l.b16 %v508
    %v1908 = vunpack.c.h.b16 %v508
    %v1909 = vunpack.c.l.b16 %v509
    %v1910 = vunpack.c.h.b16 %v509
    %v1911 = vunpack.c.l.b16 %v510
    %v1912 = vunpack.c.h.b16 %v510
    %v1913 = vunpack.c.l.b16 %v511
    %v1914 = vunpack.c.h.b16 %v511
    %v1915 = vunpack.c.l.b16 %v512
    %v1916 = vunpack.c.h.b16 %v512
    %v1917 = vunpack.c.l.b16 %v513
    %v1918 = vunpack.c.h.b16 %v513
    %v1919 = vunpack.c.l.b16 %v514
    %v1920 = vunpack.c.h.b16 %v514
    %v1921 = vunpack.c.l.b16 %v515
    %v1922 = vunpack.c.h.b16 %v515
    %v1923 = vunpack.c.l.b16 %v516
    %v1924 = vunpack.c.h.b16 %v516
    %v1925 = vunpack.c.l.b16 %v517
    %v1926 = vunpack.c.h.b16 %v517
    %v1927 = vunpack.c.l.b16 %v518
    %v1928 = vunpack.c.h.b16 %v518
    %v1929 = vunpack.c.l.b16 %v519
    %v1930 = vunpack.c.h.b16 %v519
    %v1931 = vunpack.c.l.b16 %v520
    %v1932 = vunpack.c.h.b16 %v520
    %v1933 = vunpack.c.l.b16 %v521
    %v1934 = vunpack.c.h.b16 %v521
    %v1935 = vunpack.c.l.b16 %v522
    %v1936 = vunpack.c.h.b16 %v522
    %v1937 = vunpack.c.l.b16 %v523
    %v1938 = vunpack.c.h.b16 %v523
    %v1939 = vunpack.c.l.b16 %v524
    %v1940 = vunpack.c.h.b16 %v524
    %v1941 = vunpack.c.l.b16 %v525
    %v1942 = vunpack.c.h.b16 %v525
    %v1943 = vunpack.c.l.b16 %v526
    %v1944 = vunpack.c.h.b16 %v526
    %v1945 = vunpack.c.l.b16 %v527
    %v1946 = vunpack.c.h.b16 %v527
    %v1947 = vunpack.c.l.b16 %v528
    %v1948 = vunpack.c.h.b16 %v528
    %v1949 = vunpack.c.l.b16 %v529
    %v1950 = vunpack.c.h.b16 %v529
    %v1951 = vunpack.c.l.b16 %v530
    %v1952 = vunpack.c.h.b16 %v530
    %v1953 = vunpack.c.l.b16 %v531
    %v1954 = vunpack.c.h.b16 %v531
    %v1955 = vunpack.c.l.b16 %v532
    %v1956 = vunpack.c.h.b16 %v532
    %v1957 = vunpack.c.l.b16 %v533
    %v1958 = vunpack.c.h.b16 %v533
    %v1959 = vunpack.c.l.b16 %v534
    %v1960 = vunpack.c.h.b16 %v534
    %v1961 = vunpack.c.l.b16 %v535
    %v1962 = vunpack.c.h.b16 %v535
    %v1963 = vunpack.c.l.b16 %v536
    %v1964 = vunpack.c.h.b16 %v536
    %v1965 = vunpack.c.l.b16 %v537
    %v1966 = vunpack.c.h.b16 %v537
    %v1967 = vunpack.c.l.b16 %v538
    %v1968 = vunpack.c.h.b16 %v538
    %v1969 = vunpack.c.l.b16 %v539
    %v1970 = vunpack.c.h.b16 %v539
    %v1971 = vunpack.c.l.b16 %v540
    %v1972 = vunpack.c.h.b16 %v540
    %v1973 = vunpack.c.l.b16 %v541
    %v1974 = vunpack.c.h.b16 %v541
    %v1975 = vunpack.c.l.b16 %v542
    %v1976 = vunpack.c.h.b16 %v542
    %v1977 = vunpack.c.l.b16 %v543
    %v1978 = vunpack.c.h.b16 %v543
    %v1979 = vunpack.c.l.b16 %v544
    %v1980 = vunpack.c.h.b16 %v544
    %v1981 = vunpack.c.l.b16 %v545
    %v1982 = vunpack.c.h.b16 %v545
    %v1983 = vunpack.c.l.b16 %v546
    %v1984 = vunpack.c.h.b16 %v546
    %v1985 = vunpack.c.l.b16 %v547
    %v1986 = vunpack.c.h.b16 %v547
    %v1987 = vunpack.c.l.b16 %v548
    %v1988 = vunpack.c.h.b16 %v548
    %v1989 = vunpack.c.l.b16 %v549
    %v1990 = vunpack.c.h.b16 %v549
    %v1991 = vunpack.c.l.b16 %v550
    %v1992 = vunpack.c.h.b16 %v550
    %v1993 = vunpack.c.l.b16 %v551
    %v1994 = vunpack.c.h.b16 %v551
    %v1995 = vunpack.c.l.b16 %v552
    %v1996 = vunpack.c.h.b16 %v552
    %v1997 = vunpack.c.l.b16 %v553
    %v1998 = vunpack.c.h.b16 %v553
    %v1999 = vunpack.c.l.b16 %v554
    %v2000 = vunpack.c.h.b16 %v554
    %v2001 = vunpack.c.l.b16 %v555
    %v2002 = vunpack.c.h.b16 %v555
    %v2003 = vunpack.c.l.b16 %v556
    %v2004 = vunpack.c.h.b16 %v556
    %v2005 = vunpack.c.l.b16 %v557
    %v2006 = vunpack.c.h.b16 %v557
    %v2007 = vunpack.c.l.b16 %v558
    %v2008 = vunpack.c.h.b16 %v558
    %v2009 = vunpack.c.l.b16 %v559
    %v2010 = vunpack.c.h.b16 %v559
    %v2011 = vunpack.c.l.b16 %v560
    %v2012 = vunpack.c.h.b16 %v560
    %v2013 = vunpack.c.l.b16 %v561
    %v2014 = vunpack.c.h.b16 %v561
    %v2015 = vunpack.c.l.b16 %v562
    %v2016 = vunpack.c.h.b16 %v562
    %v2017 = vunpack.c.l.b16 %v563
    %v2018 = vunpack.c.h.b16 %v563
    %v2019 = vunpack.c.l.b16 %v564
    %v2020 = vunpack.c.h.b16 %v564
    %v2021 = vunpack.c.l.b16 %v565
    %v2022 = vunpack.c.h.b16 %v565
    %v2023 = vunpack.c.l.b16 %v566
    %v2024 = vunpack.c.h.b16 %v566
    %v2025 = vunpack.c.l.b16 %v567
    %v2026 = vunpack.c.h.b16 %v567
    %v2027 = vunpack.c.l.b16 %v568
    %v2028 = vunpack.c.h.b16 %v568
    %v2029 = vunpack.c.l.b16 %v569
    %v2030 = vunpack.c.h.b16 %v569
    %v2031 = vunpack.c.l.b16 %v570
    %v2032 = vunpack.c.h.b16 %v570
    %v2033 = vunpack.c.l.b16 %v571
    %v2034 = vunpack.c.h.b16 %v571
    %v2035 = vunpack.c.l.b16 %v572
    %v2036 = vunpack.c.h.b16 %v572
    %v2037 = vunpack.c.l.b16 %v573
    %v2038 = vunpack.c.h.b16 %v573
    %v2039 = vunpack.c.l.b16 %v574
    %v2040 = vunpack.c.h.b16 %v574
    %v2041 = vunpack.c.l.b16 %v575
    %v2042 = vunpack.c.h.b16 %v575
    %v2043 = vunpack.c.l.b16 %v576
    %v2044 = vunpack.c.h.b16 %v576
    %v2045 = vunpack.c.l.b16 %v577
    %v2046 = vunpack.c.h.b16 %v577
    %v2047 = vunpack.c.l.b16 %v578
    %v2048 = vunpack.c.h.b16 %v578
    %v2049 = vunpack.c.l.b16 %v579
    %v2050 = vunpack.c.h.b16 %v579
    %v2051 = vunpack.c.l.b16 %v580
    %v2052 = vunpack.c.h.b16 %v580
    %v2053 = vunpack.c.l.b16 %v581
    %v2054 = vunpack.c.h.b16 %v581
    %v2055 = vunpack.c.l.b16 %v582
    %v2056 = vunpack.c.h.b16 %v582
    %v2057 = vunpack.c.l.b16 %v583
    %v2058 = vunpack.c.h.b16 %v583
    %v2059 = vunpack.c.l.b16 %v584
    %v2060 = vunpack.c.h.b16 %v584
    %v2061 = vunpack.c.l.b16 %v585
    %v2062 = vunpack.c.h.b16 %v585
    %v2063 = vunpack.c.l.b16 %v586
    %v2064 = vunpack.c.h.b16 %v586
    %v2065 = vunpack.c.l.b16 %v587
    %v2066 = vunpack.c.h.b16 %v587
    %v2067 = vunpack.c.l.b16 %v588
    %v2068 = vunpack.c.h.b16 %v588
    %v2069 = vunpack.c.l.b16 %v589
    %v2070 = vunpack.c.h.b16 %v589
    %v2071 = vunpack.c.l.b16 %v590
    %v2072 = vunpack.c.h.b16 %v590
    %v2073 = vunpack.c.l.b16 %v591
    %v2074 = vunpack.c.h.b16 %v591
    %v2075 = vunpack.c.l.b16 %v592
    %v2076 = vunpack.c.h.b16 %v592
    %v2077 = vunpack.c.l.b16 %v593
    %v2078 = vunpack.c.h.b16 %v593
    %v2079 = vunpack.c.l.b16 %v594
    %v2080 = vunpack.c.h.b16 %v594
    %v2081 = vunpack.c.l.b16 %v595
    %v2082 = vunpack.c.h.b16 %v595
    %v2083 = vunpack.c.l.b16 %v596
    %v2084 = vunpack.c.h.b16 %v596
    %v2085 = vunpack.c.l.b16 %v597
    %v2086 = vunpack.c.h.b16 %v597
    %v2087 = vunpack.c.l.b16 %v598
    %v2088 = vunpack.c.h.b16 %v598
    %v2089 = vunpack.c.l.b16 %v599
    %v2090 = vunpack.c.h.b16 %v599
    %v2091 = vunpack.c.l.b16 %v600
    %v2092 = vunpack.c.h.b16 %v600
    %v2093 = vunpack.c.l.b16 %v601
    %v2094 = vunpack.c.h.b16 %v601
    %v2095 = vunpack.c.l.b16 %v602
    %v2096 = vunpack.c.h.b16 %v602
    %v2097 = vunpack.c.l.b16 %v603
    %v2098 = vunpack.c.h.b16 %v603
    %v2099 = vunpack.c.l.b16 %v604
    %v2100 = vunpack.c.h.b16 %v604
    %v2101 = vunpack.c.l.b16 %v605
    %v2102 = vunpack.c.h.b16 %v605
    %v2103 = vunpack.c.l.b16 %v606
    %v2104 = vunpack.c.h.b16 %v606
    %v2105 = vunpack.c.l.b16 %v607
    %v2106 = vunpack.c.h.b16 %v607
    %v2107 = vunpack.c.l.b16 %v608
    %v2108 = vunpack.c.h.b16 %v608
    %v2109 = vunpack.c.l.b16 %v609
    %v2110 = vunpack.c.h.b16 %v609
    %v2111 = vunpack.c.l.b16 %v610
    %v2112 = vunpack.c.h.b16 %v610
    %v2113 = vunpack.c.l.b16 %v611
    %v2114 = vunpack.c.h.b16 %v611
    %v2115 = vunpack.c.l.b16 %v612
    %v2116 = vunpack.c.h.b16 %v612
    %v2117 = vunpack.c.l.b16 %v613
    %v2118 = vunpack.c.h.b16 %v613
    %v2119 = vunpack.c.l.b16 %v614
    %v2120 = vunpack.c.h.b16 %v614
    %v2121 = vunpack.c.l.b16 %v615
    %v2122 = vunpack.c.h.b16 %v615
    %v2123 = vunpack.c.l.b16 %v616
    %v2124 = vunpack.c.h.b16 %v616
    %v2125 = vunpack.c.l.b16 %v617
    %v2126 = vunpack.c.h.b16 %v617
    %v2127 = vunpack.c.l.b16 %v618
    %v2128 = vunpack.c.h.b16 %v618
    %v2129 = vunpack.c.l.b16 %v619
    %v2130 = vunpack.c.h.b16 %v619
    %v2131 = vunpack.c.l.b16 %v620
    %v2132 = vunpack.c.h.b16 %v620
    %v2133 = vunpack.c.l.b16 %v621
    %v2134 = vunpack.c.h.b16 %v621
    %v2135 = vunpack.c.l.b16 %v622
    %v2136 = vunpack.c.h.b16 %v622
    %v2137 = vunpack.c.l.b16 %v623
    %v2138 = vunpack.c.h.b16 %v623
    %v2139 = vunpack.c.l.b16 %v624
    %v2140 = vunpack.c.h.b16 %v624
    %v2141 = vunpack.c.l.b16 %v625
    %v2142 = vunpack.c.h.b16 %v625
    %v2143 = vunpack.c.l.b16 %v626
    %v2144 = vunpack.c.h.b16 %v626
    %v2145 = vunpack.c.l.b16 %v627
    %v2146 = vunpack.c.h.b16 %v627
    %v2147 = vunpack.c.l.b16 %v628
    %v2148 = vunpack.c.h.b16 %v628
    %v2149 = vunpack.c.l.b16 %v629
    %v2150 = vunpack.c.h.b16 %v629
    %v2151 = vunpack.c.l.b16 %v630
    %v2152 = vunpack.c.h.b16 %v630
    %v2153 = vunpack.c.l.b16 %v631
    %v2154 = vunpack.c.h.b16 %v631
    %v2155 = vunpack.c.l.b16 %v632
    %v2156 = vunpack.c.h.b16 %v632
    %v2157 = vunpack.c.l.b16 %v633
    %v2158 = vunpack.c.h.b16 %v633
    %v2159 = vunpack.c.l.b16 %v634
    %v2160 = vunpack.c.h.b16 %v634
    %v2161 = vunpack.c.l.b16 %v635
    %v2162 = vunpack.c.h.b16 %v635
    %v2163 = vunpack.c.l.b16 %v636
    %v2164 = vunpack.c.h.b16 %v636
    %v2165 = vunpack.c.l.b16 %v637
    %v2166 = vunpack.c.h.b16 %v637
    %v2167 = vunpack.c.l.b16 %v638
    %v2168 = vunpack.c.h.b16 %v638
    %v2169 = vunpack.c.l.b16 %v639
    %v2170 = vunpack.c.h.b16 %v639
    %v2171 = vunpack.c.l.b16 %v640
    %v2172 = vunpack.c.h.b16 %v640
    %v2173 = vunpack.c.l.b16 %v641
    %v2174 = vunpack.c.h.b16 %v641
    %v2175 = vunpack.c.l.b16 %v642
    %v2176 = vunpack.c.h.b16 %v642
    %v2177 = vunpack.c.l.b16 %v643
    %v2178 = vunpack.c.h.b16 %v643
    %v2179 = vunpack.c.l.b16 %v644
    %v2180 = vunpack.c.h.b16 %v644
    %v2181 = vunpack.c.l.b16 %v645
    %v2182 = vunpack.c.h.b16 %v645
    %v2183 = vunpack.c.l.b16 %v646
    %v2184 = vunpack.c.h.b16 %v646
    %v2185 = vunpack.c.l.b16 %v647
    %v2186 = vunpack.c.h.b16 %v647
    %v2187 = vunpack.c.l.b16 %v648
    %v2188 = vunpack.c.h.b16 %v648
    %v2189 = vunpack.c.l.b16 %v649
    %v2190 = vunpack.c.h.b16 %v649
    %v2191 = vunpack.c.l.b16 %v650
    %v2192 = vunpack.c.h.b16 %v650
    %v2193 = vunpack.c.l.b16 %v651
    %v2194 = vunpack.c.h.b16 %v651
    %v2195 = vunpack.c.l.b16 %v652
    %v2196 = vunpack.c.h.b16 %v652
    %v2197 = vunpack.c.l.b16 %v653
    %v2198 = vunpack.c.h.b16 %v653
    %v2199 = vunpack.c.l.b16 %v654
    %v2200 = vunpack.c.h.b16 %v654
    %v2201 = vunpack.c.l.b16 %v655
    %v2202 = vunpack.c.h.b16 %v655
    %v2203 = vunpack.c.l.b16 %v656
    %v2204 = vunpack.c.h.b16 %v656
    %v2205 = vunpack.c.l.b16 %v657
    %v2206 = vunpack.c.h.b16 %v657
    %v2207 = vunpack.c.l.b16 %v658
    %v2208 = vunpack.c.h.b16 %v658
    %v2209 = vunpack.c.l.b16 %v659
    %v2210 = vunpack.c.h.b16 %v659
    %v2211 = vunpack.c.l.b16 %v660
    %v2212 = vunpack.c.h.b16 %v660
    %v2213 = vunpack.c.l.b16 %v661
    %v2214 = vunpack.c.h.b16 %v661
    %v2215 = vunpack.c.l.b16 %v662
    %v2216 = vunpack.c.h.b16 %v662
    %v2217 = vunpack.c.l.b16 %v663
    %v2218 = vunpack.c.h.b16 %v663
    %v2219 = vunpack.c.l.b16 %v664
    %v2220 = vunpack.c.h.b16 %v664
    %v2221 = vunpack.c.l.b16 %v665
    %v2222 = vunpack.c.h.b16 %v665
    %v2223 = vunpack.c.l.b16 %v666
    %v2224 = vunpack.c.h.b16 %v666
    %v2225 = vunpack.c.l.b16 %v667
    %v2226 = vunpack.c.h.b16 %v667
    %v2227 = vunpack.c.l.b16 %v668
    %v2228 = vunpack.c.h.b16 %v668
    %v2229 = vunpack.c.l.b16 %v669
    %v2230 = vunpack.c.h.b16 %v669
    %v2231 = vunpack.c.l.b16 %v670
    %v2232 = vunpack.c.h.b16 %v670
    %v2233 = vunpack.c.l.b16 %v671
    %v2234 = vunpack.c.h.b16 %v671
    %v2235 = vunpack.c.l.b16 %v672
    %v2236 = vunpack.c.h.b16 %v672
    %v2237 = vpack.c.b16 %v1221, %v1213
    %v2238 = vpack.c.b16 %v1222, %v1214
    %v2239 = vpack.c.b16 %v1223, %v1215
    %v2240 = vpack.c.b16 %v1224, %v1216
    %v2241 = vpack.c.b16 %v1225, %v1217
    %v2242 = vpack.c.b16 %v1226, %v1218
    %v2243 = vpack.c.b16 %v1227, %v1219
    %v2244 = vpack.c.b16 %v1228, %v1220
    %v2245 = vpack.c.b16 %v1237, %v1229
    %v2246 = vpack.c.b16 %v1238, %v1230
    %v2247 = vpack.c.b16 %v1239, %v1231
    %v2248 = vpack.c.b16 %v1240, %v1232
    %v2249 = vpack.c.b16 %v1241, %v1233
    %v2250 = vpack.c.b16 %v1242, %v1234
    %v2251 = vpack.c.b16 %v1243, %v1235
    %v2252 = vpack.c.b16 %v1244, %v1236
    %v2253 = vpack.c.b16 %v1253, %v1245
    %v2254 = vpack.c.b16 %v1254, %v1246
    %v2255 = vpack.c.b16 %v1255, %v1247
    %v2256 = vpack.c.b16 %v1256, %v1248
    %v2257 = vpack.c.b16 %v1257, %v1249
    %v2258 = vpack.c.b16 %v1258, %v1250
    %v2259 = vpack.c.b16 %v1259, %v1251
    %v2260 = vpack.c.b16 %v1260, %v1252
    %v2261 = vpack.c.b16 %v1269, %v1261
    %v2262 = vpack.c.b16 %v1270, %v1262
    %v2263 = vpack.c.b16 %v1271, %v1263
    %v2264 = vpack.c.b16 %v1272, %v1264
    %v2265 = vpack.c.b16 %v1273, %v1265
    %v2266 = vpack.c.b16 %v1274, %v1266
    %v2267 = vpack.c.b16 %v1275, %v1267
    %v2268 = vpack.c.b16 %v1276, %v1268
    %v2269 = vpack.c.b16 %v1285, %v1277
    %v2270 = vpack.c.b16 %v1286, %v1278
    %v2271 = vpack.c.b16 %v1287, %v1279
    %v2272 = vpack.c.b16 %v1288, %v1280
    %v2273 = vpack.c.b16 %v1289, %v1281
    %v2274 = vpack.c.b16 %v1290, %v1282
    %v2275 = vpack.c.b16 %v1291, %v1283
    %v2276 = vpack.c.b16 %v1292, %v1284
    %v2277 = vpack.c.b16 %v1301, %v1293
    %v2278 = vpack.c.b16 %v1302, %v1294
    %v2279 = vpack.c.b16 %v1303, %v1295
    %v2280 = vpack.c.b16 %v1304, %v1296
    %v2281 = vpack.c.b16 %v1305, %v1297
    %v2282 = vpack.c.b16 %v1306, %v1298
    %v2283 = vpack.c.b16 %v1307, %v1299
    %v2284 = vpack.c.b16 %v1308, %v1300
    %v2285 = vpack.c.b16 %v1317, %v1309
    %v2286 = vpack.c.b16 %v1318, %v1310
    %v2287 = vpack.c.b16 %v1319, %v1311
    %v2288 = vpack.c.b16 %v1320, %v1312
    %v2289 = vpack.c.b16 %v1321, %v1313
    %v2290 = vpack.c.b16 %v1322, %v1314
    %v2291 = vpack.c.b16 %v1323, %v1315
    %v2292 = vpack.c.b16 %v1324, %v1316
    %v2293 = vpack.c.b16 %v1333, %v1325
    %v2294 = vpack.c.b16 %v1334, %v1326
    %v2295 = vpack.c.b16 %v1335, %v1327
    %v2296 = vpack.c.b16 %v1336, %v1328
    %v2297 = vpack.c.b16 %v1337, %v1329
    %v2298 = vpack.c.b16 %v1338, %v1330
    %v2299 = vpack.c.b16 %v1339, %v1331
    %v2300 = vpack.c.b16 %v1340, %v1332
    %v2301 = vpack.c.b16 %v1349, %v1341
    %v2302 = vpack.c.b16 %v1350, %v1342
    %v2303 = vpack.c.b16 %v1351, %v1343
    %v2304 = vpack.c.b16 %v1352, %v1344
    %v2305 = vpack.c.b16 %v1353, %v1345
    %v2306 = vpack.c.b16 %v1354, %v1346
    %v2307 = vpack.c.b16 %v1355, %v1347
    %v2308 = vpack.c.b16 %v1356, %v1348
    %v2309 = vpack.c.b16 %v1365, %v1357
    %v2310 = vpack.c.b16 %v1366, %v1358
    %v2311 = vpack.c.b16 %v1367, %v1359
    %v2312 = vpack.c.b16 %v1368, %v1360
    %v2313 = vpack.c.b16 %v1369, %v1361
    %v2314 = vpack.c.b16 %v1370, %v1362
    %v2315 = vpack.c.b16 %v1371, %v1363
    %v2316 = vpack.c.b16 %v1372, %v1364
    %v2317 = vpack.c.b16 %v1381, %v1373
    %v2318 = vpack.c.b16 %v1382, %v1374
    %v2319 = vpack.c.b16 %v1383, %v1375
    %v2320 = vpack.c.b16 %v1384, %v1376
    %v2321 = vpack.c.b16 %v1385, %v1377
    %v2322 = vpack.c.b16 %v1386, %v1378
    %v2323 = vpack.c.b16 %v1387, %v1379
    %v2324 = vpack.c.b16 %v1388, %v1380
    %v2325 = vpack.c.b16 %v1397, %v1389
    %v2326 = vpack.c.b16 %v1398, %v1390
    %v2327 = vpack.c.b16 %v1399, %v1391
    %v2328 = vpack.c.b16 %v1400, %v1392
    %v2329 = vpack.c.b16 %v1401, %v1393
    %v2330 = vpack.c.b16 %v1402, %v1394
    %v2331 = vpack.c.b16 %v1403, %v1395
    %v2332 = vpack.c.b16 %v1404, %v1396
    %v2333 = vpack.c.b16 %v1413, %v1405
    %v2334 = vpack.c.b16 %v1414, %v1406
    %v2335 = vpack.c.b16 %v1415, %v1407
    %v2336 = vpack.c.b16 %v1416, %v1408
    %v2337 = vpack.c.b16 %v1417, %v1409
    %v2338 = vpack.c.b16 %v1418, %v1410
    %v2339 = vpack.c.b16 %v1419, %v1411
    %v2340 = vpack.c.b16 %v1420, %v1412
    %v2341 = vpack.c.b16 %v1429, %v1421
    %v2342 = vpack.c.b16 %v1430, %v1422
    %v2343 = vpack.c.b16 %v1431, %v1423
    %v2344 = vpack.c.b16 %v1432, %v1424
    %v2345 = vpack.c.b16 %v1433, %v1425
    %v2346 = vpack.c.b16 %v1434, %v1426
    %v2347 = vpack.c.b16 %v1435, %v1427
    %v2348 = vpack.c.b16 %v1436, %v1428
    %v2349 = vpack.c.b16 %v1445, %v1437
    %v2350 = vpack.c.b16 %v1446, %v1438
    %v2351 = vpack.c.b16 %v1447, %v1439
    %v2352 = vpack.c.b16 %v1448, %v1440
    %v2353 = vpack.c.b16 %v1449, %v1441
    %v2354 = vpack.c.b16 %v1450, %v1442
    %v2355 = vpack.c.b16 %v1451, %v1443
    %v2356 = vpack.c.b16 %v1452, %v1444
    %v2357 = vpack.c.b16 %v1461, %v1453
    %v2358 = vpack.c.b16 %v1462, %v1454
    %v2359 = vpack.c.b16 %v1463, %v1455
    %v2360 = vpack.c.b16 %v1464, %v1456
    %v2361 = vpack.c.b16 %v1465, %v1457
    %v2362 = vpack.c.b16 %v1466, %v1458
    %v2363 = vpack.c.b16 %v1467, %v1459
    %v2364 = vpack.c.b16 %v1468, %v1460
    %v2365 = vpack.c.b16 %v1477, %v1469
    %v2366 = vpack.c.b16 %v1478, %v1470
    %v2367 = vpack.c.b16 %v1479, %v1471
    %v2368 = vpack.c.b16 %v1480, %v1472
    %v2369 = vpack.c.b16 %v1481, %v1473
    %v2370 = vpack.c.b16 %v1482, %v1474
    %v2371 = vpack.c.b16 %v1483, %v1475
    %v2372 = vpack.c.b16 %v1484, %v1476
    %v2373 = vpack.c.b16 %v1493, %v1485
    %v2374 = vpack.c.b16 %v1494, %v1486
    %v2375 = vpack.c.b16 %v1495, %v1487
    %v2376 = vpack.c.b16 %v1496, %v1488
    %v2377 = vpack.c.b16 %v1497, %v1489
    %v2378 = vpack.c.b16 %v1498, %v1490
    %v2379 = vpack.c.b16 %v1499, %v1491
    %v2380 = vpack.c.b16 %v1500, %v1492
    %v2381 = vpack.c.b16 %v1509, %v1501
    %v2382 = vpack.c.b16 %v1510, %v1502
    %v2383 = vpack.c.b16 %v1511, %v1503
    %v2384 = vpack.c.b16 %v1512, %v1504
    %v2385 = vpack.c.b16 %v1513, %v1505
    %v2386 = vpack.c.b16 %v1514, %v1506
    %v2387 = vpack.c.b16 %v1515, %v1507
    %v2388 = vpack.c.b16 %v1516, %v1508
    %v2389 = vpack.c.b16 %v1525, %v1517
    %v2390 = vpack.c.b16 %v1526, %v1518
    %v2391 = vpack.c.b16 %v1527, %v1519
    %v2392 = vpack.c.b16 %v1528, %v1520
    %v2393 = vpack.c.b16 %v1529, %v1521
    %v2394 = vpack.c.b16 %v1530, %v1522
    %v2395 = vpack.c.b16 %v1531, %v1523
    %v2396 = vpack.c.b16 %v1532, %v1524
    %v2397 = vpack.c.b16 %v1541, %v1533
    %v2398 = vpack.c.b16 %v1542, %v1534
    %v2399 = vpack.c.b16 %v1543, %v1535
    %v2400 = vpack.c.b16 %v1544, %v1536
    %v2401 = vpack.c.b16 %v1545, %v1537
    %v2402 = vpack.c.b16 %v1546, %v1538
    %v2403 = vpack.c.b16 %v1547, %v1539
    %v2404 = vpack.c.b16 %v1548, %v1540
    %v2405 = vpack.c.b16 %v1557, %v1549
    %v2406 = vpack.c.b16 %v1558, %v1550
    %v2407 = vpack.c.b16 %v1559, %v1551
    %v2408 = vpack.c.b16 %v1560, %v1552
    %v2409 = vpack.c.b16 %v1561, %v1553
    %v2410 = vpack.c.b16 %v1562, %v1554
    %v2411 = vpack.c.b16 %v1563, %v1555
    %v2412 = vpack.c.b16 %v1564, %v1556
    %v2413 = vpack.c.b16 %v1573, %v1565
    %v2414 = vpack.c.b16 %v1574, %v1566
    %v2415 = vpack.c.b16 %v1575, %v1567
    %v2416 = vpack.c.b16 %v1576, %v1568
    %v2417 = vpack.c.b16 %v1577, %v1569
    %v2418 = vpack.c.b16 %v1578, %v1570
    %v2419 = vpack.c.b16 %v1579, %v1571
    %v2420 = vpack.c.b16 %v1580, %v1572
    %v2421 = vpack.c.b16 %v1589, %v1581
    %v2422 = vpack.c.b16 %v1590, %v1582
    %v2423 = vpack.c.b16 %v1591, %v1583
    %v2424 = vpack.c.b16 %v1592, %v1584
    %v2425 = vpack.c.b16 %v1593, %v1585
    %v2426 = vpack.c.b16 %v1594, %v1586
    %v2427 = vpack.c.b16 %v1595, %v1587
    %v2428 = vpack.c.b16 %v1596, %v1588
    %v2429 = vpack.c.b16 %v1605, %v1597
    %v2430 = vpack.c.b16 %v1606, %v1598
    %v2431 = vpack.c.b16 %v1607, %v1599
    %v2432 = vpack.c.b16 %v1608, %v1600
    %v2433 = vpack.c.b16 %v1609, %v1601
    %v2434 = vpack.c.b16 %v1610, %v1602
    %v2435 = vpack.c.b16 %v1611, %v1603
    %v2436 = vpack.c.b16 %v1612, %v1604
    %v2437 = vpack.c.b16 %v1621, %v1613
    %v2438 = vpack.c.b16 %v1622, %v1614
    %v2439 = vpack.c.b16 %v1623, %v1615
    %v2440 = vpack.c.b16 %v1624, %v1616
    %v2441 = vpack.c.b16 %v1625, %v1617
    %v2442 = vpack.c.b16 %v1626, %v1618
    %v2443 = vpack.c.b16 %v1627, %v1619
    %v2444 = vpack.c.b16 %v1628, %v1620
    %v2445 = vpack.c.b16 %v1637, %v1629
    %v2446 = vpack.c.b16 %v1638, %v1630
    %v2447 = vpack.c.b16 %v1639, %v1631
    %v2448 = vpack.c.b16 %v1640, %v1632
    %v2449 = vpack.c.b16 %v1641, %v1633
    %v2450 = vpack.c.b16 %v1642, %v1634
    %v2451 = vpack.c.b16 %v1643, %v1635
    %v2452 = vpack.c.b16 %v1644, %v1636
    %v2453 = vpack.c.b16 %v1653, %v1645
    %v2454 = vpack.c.b16 %v1654, %v1646
    %v2455 = vpack.c.b16 %v1655, %v1647
    %v2456 = vpack.c.b16 %v1656, %v1648
    %v2457 = vpack.c.b16 %v1657, %v1649
    %v2458 = vpack.c.b16 %v1658, %v1650
    %v2459 = vpack.c.b16 %v1659, %v1651
    %v2460 = vpack.c.b16 %v1660, %v1652
    %v2461 = vpack.c.b16 %v1669, %v1661
    %v2462 = vpack.c.b16 %v1670, %v1662
    %v2463 = vpack.c.b16 %v1671, %v1663
    %v2464 = vpack.c.b16 %v1672, %v1664
    %v2465 = vpack.c.b16 %v1673, %v1665
    %v2466 = vpack.c.b16 %v1674, %v1666
    %v2467 = vpack.c.b16 %v1675, %v1667
    %v2468 = vpack.c.b16 %v1676, %v1668
    %v2469 = vpack.c.b16 %v1685, %v1677
    %v2470 = vpack.c.b16 %v1686, %v1678
    %v2471 = vpack.c.b16 %v1687, %v1679
    %v2472 = vpack.c.b16 %v1688, %v1680
    %v2473 = vpack.c.b16 %v1689, %v1681
    %v2474 = vpack.c.b16 %v1690, %v1682
    %v2475 = vpack.c.b16 %v1691, %v1683
    %v2476 = vpack.c.b16 %v1692, %v1684
    %v2477 = vpack.c.b16 %v1701, %v1693
    %v2478 = vpack.c.b16 %v1702, %v1694
    %v2479 = vpack.c.b16 %v1703, %v1695
    %v2480 = vpack.c.b16 %v1704, %v1696
    %v2481 = vpack.c.b16 %v1705, %v1697
    %v2482 = vpack.c.b16 %v1706, %v1698
    %v2483 = vpack.c.b16 %v1707, %v1699
    %v2484 = vpack.c.b16 %v1708, %v1700
    %v2485 = vpack.c.b16 %v1717, %v1709
    %v2486 = vpack.c.b16 %v1718, %v1710
    %v2487 = vpack.c.b16 %v1719, %v1711
    %v2488 = vpack.c.b16 %v1720, %v1712
    %v2489 = vpack.c.b16 %v1721, %v1713
    %v2490 = vpack.c.b16 %v1722, %v1714
    %v2491 = vpack.c.b16 %v1723, %v1715
    %v2492 = vpack.c.b16 %v1724, %v1716
    %v2493 = vpack.c.b16 %v1733, %v1725
    %v2494 = vpack.c.b16 %v1734, %v1726
    %v2495 = vpack.c.b16 %v1735, %v1727
    %v2496 = vpack.c.b16 %v1736, %v1728
    %v2497 = vpack.c.b16 %v1737, %v1729
    %v2498 = vpack.c.b16 %v1738, %v1730
    %v2499 = vpack.c.b16 %v1739, %v1731
    %v2500 = vpack.c.b16 %v1740, %v1732
    %v2501 = vpack.c.b16 %v1749, %v1741
    %v2502 = vpack.c.b16 %v1750, %v1742
    %v2503 = vpack.c.b16 %v1751, %v1743
    %v2504 = vpack.c.b16 %v1752, %v1744
    %v2505 = vpack.c.b16 %v1753, %v1745
    %v2506 = vpack.c.b16 %v1754, %v1746
    %v2507 = vpack.c.b16 %v1755, %v1747
    %v2508 = vpack.c.b16 %v1756, %v1748
    %v2509 = vpack.c.b16 %v1765, %v1757
    %v2510 = vpack.c.b16 %v1766, %v1758
    %v2511 = vpack.c.b16 %v1767, %v1759
    %v2512 = vpack.c.b16 %v1768, %v1760
    %v2513 = vpack.c.b16 %v1769, %v1761
    %v2514 = vpack.c.b16 %v1770, %v1762
    %v2515 = vpack.c.b16 %v1771, %v1763
    %v2516 = vpack.c.b16 %v1772, %v1764
    %v2517 = vpack.c.b16 %v1781, %v1773
    %v2518 = vpack.c.b16 %v1782, %v1774
    %v2519 = vpack.c.b16 %v1783, %v1775
    %v2520 = vpack.c.b16 %v1784, %v1776
    %v2521 = vpack.c.b16 %v1785, %v1777
    %v2522 = vpack.c.b16 %v1786, %v1778
    %v2523 = vpack.c.b16 %v1787, %v1779
    %v2524 = vpack.c.b16 %v1788, %v1780
    %v2525 = vpack.c.b16 %v1797, %v1789
    %v2526 = vpack.c.b16 %v1798, %v1790
    %v2527 = vpack.c.b16 %v1799, %v1791
    %v2528 = vpack.c.b16 %v1800, %v1792
    %v2529 = vpack.c.b16 %v1801, %v1793
    %v2530 = vpack.c.b16 %v1802, %v1794
    %v2531 = vpack.c.b16 %v1803, %v1795
    %v2532 = vpack.c.b16 %v1804, %v1796
    %v2533 = vpack.c.b16 %v1813, %v1805
    %v2534 = vpack.c.b16 %v1814, %v1806
    %v2535 = vpack.c.b16 %v1815, %v1807
    %v2536 = vpack.c.b16 %v1816, %v1808
    %v2537 = vpack.c.b16 %v1817, %v1809
    %v2538 = vpack.c.b16 %v1818, %v1810
    %v2539 = vpack.c.b16 %v1819, %v1811
    %v2540 = vpack.c.b16 %v1820, %v1812
    %v2541 = vpack.c.b16 %v1829, %v1821
    %v2542 = vpack.c.b16 %v1830, %v1822
    %v2543 = vpack.c.b16 %v1831, %v1823
    %v2544 = vpack.c.b16 %v1832, %v1824
    %v2545 = vpack.c.b16 %v1833, %v1825
    %v2546 = vpack.c.b16 %v1834, %v1826
    %v2547 = vpack.c.b16 %v1835, %v1827
    %v2548 = vpack.c.b16 %v1836, %v1828
    %v2549 = vpack.c.b16 %v1845, %v1837
    %v2550 = vpack.c.b16 %v1846, %v1838
    %v2551 = vpack.c.b16 %v1847, %v1839
    %v2552 = vpack.c.b16 %v1848, %v1840
    %v2553 = vpack.c.b16 %v1849, %v1841
    %v2554 = vpack.c.b16 %v1850, %v1842
    %v2555 = vpack.c.b16 %v1851, %v1843
    %v2556 = vpack.c.b16 %v1852, %v1844
    %v2557 = vpack.c.b16 %v1861, %v1853
    %v2558 = vpack.c.b16 %v1862, %v1854
    %v2559 = vpack.c.b16 %v1863, %v1855
    %v2560 = vpack.c.b16 %v1864, %v1856
    %v2561 = vpack.c.b16 %v1865, %v1857
    %v2562 = vpack.c.b16 %v1866, %v1858
    %v2563 = vpack.c.b16 %v1867, %v1859
    %v2564 = vpack.c.b16 %v1868, %v1860
    %v2565 = vpack.c.b16 %v1877, %v1869
    %v2566 = vpack.c.b16 %v1878, %v1870
    %v2567 = vpack.c.b16 %v1879, %v1871
    %v2568 = vpack.c.b16 %v1880, %v1872
    %v2569 = vpack.c.b16 %v1881, %v1873
    %v2570 = vpack.c.b16 %v1882, %v1874
    %v2571 = vpack.c.b16 %v1883, %v1875
    %v2572 = vpack.c.b16 %v1884, %v1876
    %v2573 = vpack.c.b16 %v1893, %v1885
    %v2574 = vpack.c.b16 %v1894, %v1886
    %v2575 = vpack.c.b16 %v1895, %v1887
    %v2576 = vpack.c.b16 %v1896, %v1888
    %v2577 = vpack.c.b16 %v1897, %v1889
    %v2578 = vpack.c.b16 %v1898, %v1890
    %v2579 = vpack.c.b16 %v1899, %v1891
    %v2580 = vpack.c.b16 %v1900, %v1892
    %v2581 = vpack.c.b16 %v1909, %v1901
    %v2582 = vpack.c.b16 %v1910, %v1902
    %v2583 = vpack.c.b16 %v1911, %v1903
    %v2584 = vpack.c.b16 %v1912, %v1904
    %v2585 = vpack.c.b16 %v1913, %v1905
    %v2586 = vpack.c.b16 %v1914, %v1906
    %v2587 = vpack.c.b16 %v1915, %v1907
    %v2588 = vpack.c.b16 %v1916, %v1908
    %v2589 = vpack.c.b16 %v1925, %v1917
    %v2590 = vpack.c.b16 %v1926, %v1918
    %v2591 = vpack.c.b16 %v1927, %v1919
    %v2592 = vpack.c.b16 %v1928, %v1920
    %v2593 = vpack.c.b16 %v1929, %v1921
    %v2594 = vpack.c.b16 %v1930, %v1922
    %v2595 = vpack.c.b16 %v1931, %v1923
    %v2596 = vpack.c.b16 %v1932, %v1924
    %v2597 = vpack.c.b16 %v1941, %v1933
    %v2598 = vpack.c.b16 %v1942, %v1934
    %v2599 = vpack.c.b16 %v1943, %v1935
    %v2600 = vpack.c.b16 %v1944, %v1936
    %v2601 = vpack.c.b16 %v1945, %v1937
    %v2602 = vpack.c.b16 %v1946, %v1938
    %v2603 = vpack.c.b16 %v1947, %v1939
    %v2604 = vpack.c.b16 %v1948, %v1940
    %v2605 = vpack.c.b16 %v1957, %v1949
    %v2606 = vpack.c.b16 %v1958, %v1950
    %v2607 = vpack.c.b16 %v1959, %v1951
    %v2608 = vpack.c.b16 %v1960, %v1952
    %v2609 = vpack.c.b16 %v1961, %v1953
    %v2610 = vpack.c.b16 %v1962, %v1954
    %v2611 = vpack.c.b16 %v1963, %v1955
    %v2612 = vpack.c.b16 %v1964, %v1956
    %v2613 = vpack.c.b16 %v1973, %v1965
    %v2614 = vpack.c.b16 %v1974, %v1966
    %v2615 = vpack.c.b16 %v1975, %v1967
    %v2616 = vpack.c.b16 %v1976, %v1968
    %v2617 = vpack.c.b16 %v1977, %v1969
    %v2618 = vpack.c.b16 %v1978, %v1970
    %v2619 = vpack.c.b16 %v1979, %v1971
    %v2620 = vpack.c.b16 %v1980, %v1972
    %v2621 = vpack.c.b16 %v1989, %v1981
    %v2622 = vpack.c.b16 %v1990, %v1982
    %v2623 = vpack.c.b16 %v1991, %v1983
    %v2624 = vpack.c.b16 %v1992, %v1984
    %v2625 = vpack.c.b16 %v1993, %v1985
    %v2626 = vpack.c.b16 %v1994, %v1986
    %v2627 = vpack.c.b16 %v1995, %v1987
    %v2628 = vpack.c.b16 %v1996, %v1988
    %v2629 = vpack.c.b16 %v2005, %v1997
    %v2630 = vpack.c.b16 %v2006, %v1998
    %v2631 = vpack.c.b16 %v2007, %v1999
    %v2632 = vpack.c.b16 %v2008, %v2000
    %v2633 = vpack.c.b16 %v2009, %v2001
    %v2634 = vpack.c.b16 %v2010, %v2002
    %v2635 = vpack.c.b16 %v2011, %v2003
    %v2636 = vpack.c.b16 %v2012, %v2004
    %v2637 = vpack.c.b16 %v2021, %v2013
    %v2638 = vpack.c.b16 %v2022, %v2014
    %v2639 = vpack.c.b16 %v2023, %v2015
    %v2640 = vpack.c.b16 %v2024, %v2016
    %v2641 = vpack.c.b16 %v2025, %v2017
    %v2642 = vpack.c.b16 %v2026, %v2018
    %v2643 = vpack.c.b16 %v2027, %v2019
    %v2644 = vpack.c.b16 %v2028, %v2020
    %v2645 = vpack.c.b16 %v2037, %v2029
    %v2646 = vpack.c.b16 %v2038, %v2030
    %v2647 = vpack.c.b16 %v2039, %v2031
    %v2648 = vpack.c.b16 %v2040, %v2032
    %v2649 = vpack.c.b16 %v2041, %v2033
    %v2650 = vpack.c.b16 %v2042, %v2034
    %v2651 = vpack.c.b16 %v2043, %v2035
    %v2652 = vpack.c.b16 %v2044, %v2036
    %v2653 = vpack.c.b16 %v2053, %v2045
    %v2654 = vpack.c.b16 %v2054, %v2046
    %v2655 = vpack.c.b16 %v2055, %v2047
    %v2656 = vpack.c.b16 %v2056, %v2048
    %v2657 = vpack.c.b16 %v2057, %v2049
    %v2658 = vpack.c.b16 %v2058, %v2050
    %v2659 = vpack.c.b16 %v2059, %v2051
    %v2660 = vpack.c.b16 %v2060, %v2052
    %v2661 = vpack.c.b16 %v2069, %v2061
    %v2662 = vpack.c.b16 %v2070, %v2062
    %v2663 = vpack.c.b16 %v2071, %v2063
    %v2664 = vpack.c.b16 %v2072, %v2064
    %v2665 = vpack.c.b16 %v2073, %v2065
    %v2666 = vpack.c.b16 %v2074, %v2066
    %v2667 = vpack.c.b16 %v2075, %v2067
    %v2668 = vpack.c.b16 %v2076, %v2068
    %v2669 = vpack.c.b16 %v2085, %v2077
    %v2670 = vpack.c.b16 %v2086, %v2078
    %v2671 = vpack.c.b16 %v2087, %v2079
    %v2672 = vpack.c.b16 %v2088, %v2080
    %v2673 = vpack.c.b16 %v2089, %v2081
    %v2674 = vpack.c.b16 %v2090, %v2082
    %v2675 = vpack.c.b16 %v2091, %v2083
    %v2676 = vpack.c.b16 %v2092, %v2084
    %v2677 = vpack.c.b16 %v2101, %v2093
    %v2678 = vpack.c.b16 %v2102, %v2094
    %v2679 = vpack.c.b16 %v2103, %v2095
    %v2680 = vpack.c.b16 %v2104, %v2096
    %v2681 = vpack.c.b16 %v2105, %v2097
    %v2682 = vpack.c.b16 %v2106, %v2098
    %v2683 = vpack.c.b16 %v2107, %v2099
    %v2684 = vpack.c.b16 %v2108, %v2100
    %v2685 = vpack.c.b16 %v2117, %v2109
    %v2686 = vpack.c.b16 %v2118, %v2110
    %v2687 = vpack.c.b16 %v2119, %v2111
    %v2688 = vpack.c.b16 %v2120, %v2112
    %v2689 = vpack.c.b16 %v2121, %v2113
    %v2690 = vpack.c.b16 %v2122, %v2114
    %v2691 = vpack.c.b16 %v2123, %v2115
    %v2692 = vpack.c.b16 %v2124, %v2116
    %v2693 = vpack.c.b16 %v2133, %v2125
    %v2694 = vpack.c.b16 %v2134, %v2126
    %v2695 = vpack.c.b16 %v2135, %v2127
    %v2696 = vpack.c.b16 %v2136, %v2128
    %v2697 = vpack.c.b16 %v2137, %v2129
    %v2698 = vpack.c.b16 %v2138, %v2130
    %v2699 = vpack.c.b16 %v2139, %v2131
    %v2700 = vpack.c.b16 %v2140, %v2132
    %v2701 = vpack.c.b16 %v2149, %v2141
    %v2702 = vpack.c.b16 %v2150, %v2142
    %v2703 = vpack.c.b16 %v2151, %v2143
    %v2704 = vpack.c.b16 %v2152, %v2144
    %v2705 = vpack.c.b16 %v2153, %v2145
    %v2706 = vpack.c.b16 %v2154, %v2146
    %v2707 = vpack.c.b16 %v2155, %v2147
    %v2708 = vpack.c.b16 %v2156, %v2148
    %v2709 = vpack.c.b16 %v2165, %v2157
    %v2710 = vpack.c.b16 %v2166, %v2158
    %v2711 = vpack.c.b16 %v2167, %v2159
    %v2712 = vpack.c.b16 %v2168, %v2160
    %v2713 = vpack.c.b16 %v2169, %v2161
    %v2714 = vpack.c.b16 %v2170, %v2162
    %v2715 = vpack.c.b16 %v2171, %v2163
    %v2716 = vpack.c.b16 %v2172, %v2164
    %v2717 = vpack.c.b16 %v2181, %v2173
    %v2718 = vpack.c.b16 %v2182, %v2174
    %v2719 = vpack.c.b16 %v2183, %v2175
    %v2720 = vpack.c.b16 %v2184, %v2176
    %v2721 = vpack.c.b16 %v2185, %v2177
    %v2722 = vpack.c.b16 %v2186, %v2178
    %v2723 = vpack.c.b16 %v2187, %v2179
    %v2724 = vpack.c.b16 %v2188, %v2180
    %v2725 = vpack.c.b16 %v2197, %v2189
    %v2726 = vpack.c.b16 %v2198, %v2190
    %v2727 = vpack.c.b16 %v2199, %v2191
    %v2728 = vpack.c.b16 %v2200, %v2192
    %v2729 = vpack.c.b16 %v2201, %v2193
    %v2730 = vpack.c.b16 %v2202, %v2194
    %v2731 = vpack.c.b16 %v2203, %v2195
    %v2732 = vpack.c.b16 %v2204, %v2196
    %v2733 = vpack.c.b16 %v2213, %v2205
    %v2734 = vpack.c.b16 %v2214, %v2206
    %v2735 = vpack.c.b16 %v2215, %v2207
    %v2736 = vpack.c.b16 %v2216, %v2208
    %v2737 = vpack.c.b16 %v2217, %v2209
    %v2738 = vpack.c.b16 %v2218, %v2210
    %v2739 = vpack.c.b16 %v2219, %v2211
    %v2740 = vpack.c.b16 %v2220, %v2212
    %v2741 = vpack.c.b16 %v2229, %v2221
    %v2742 = vpack.c.b16 %v2230, %v2222
    %v2743 = vpack.c.b16 %v2231, %v2223
    %v2744 = vpack.c.b16 %v2232, %v2224
    %v2745 = vpack.c.b16 %v2233, %v2225
    %v2746 = vpack.c.b16 %v2234, %v2226
    %v2747 = vpack.c.b16 %v2235, %v2227
    %v2748 = vpack.c.b16 %v2236, %v2228
    %3261 = vmatprep.subr.bf16.mxu0 %v2294
    %3262 = vmatpush1.bf16.msra.mxu0 %v2293
    %3263 = vmatprep.subr.bf16.mxu0 %v2286
    %3264 = vmatpush1.bf16.msra.mxu0 %v2285
    %3265 = vmatprep.subr.bf16.mxu0 %v2278
    %3266 = vmatpush1.bf16.msra.mxu0 %v2277
    %3267 = vmatprep.subr.bf16.mxu0 %v2270
    %3268 = vmatpush1.bf16.msra.mxu0 %v2269
    %3269 = vmatprep.subr.bf16.mxu0 %v2262
    %3270 = vmatpush1.bf16.msra.mxu0 %v2261
    %3271 = vmatprep.subr.bf16.mxu0 %v2254
    %3272 = vmatpush1.bf16.msra.mxu0 %v2253
    %3273 = vmatprep.subr.bf16.mxu0 %v2246
    %3274 = vmatpush1.bf16.msra.mxu0 %v2245
    %3275 = vmatprep.subr.bf16.mxu0 %v2238
    %3276 = vmatpush1.bf16.msra.mxu0 %v2237
    %3277 = vmatprep.subr.bf16.mxu0 %v2358
    %3278 = vmatpush2.bf16.msra.mxu0 %v2357
    %3279 = vmatprep.subr.bf16.mxu0 %v2350
    %3280 = vmatpush2.bf16.msra.mxu0 %v2349
    %3281 = vmatprep.subr.bf16.mxu0 %v2342
    %3282 = vmatpush2.bf16.msra.mxu0 %v2341
    %3283 = vmatprep.subr.bf16.mxu0 %v2334
    %3284 = vmatpush2.bf16.msra.mxu0 %v2333
    %3285 = vmatprep.subr.bf16.mxu0 %v2326
    %3286 = vmatpush2.bf16.msra.mxu0 %v2325
    %3287 = vmatprep.subr.bf16.mxu0 %v2318
    %3288 = vmatpush2.bf16.msra.mxu0 %v2317
    %3289 = vmatprep.subr.bf16.mxu0 %v2310
    %3290 = vmatpush2.bf16.msra.mxu0 %v2309
    %3291 = vmatprep.subr.bf16.mxu0 %v2302
    %3292 = vmatpush2.bf16.msra.mxu0 %v2301
    %3293 = vmatprep.mubr.bf16.mxu0 %v686
    %3294 = vmatmul.mubr.bf16.gmra.mxu0 %v685
    %v3295 = vpop.f32.mrf.mxu0
    %v3296 = vadd.f32 0.0, %v3295
    %v3297 = vpop.f32.mrf.mxu0
    %v3298 = vadd.f32 0.0, %v3297
    %v3299 = vpop.f32.mrf.mxu0
    %v3300 = vpop.f32.mrf.mxu0
    %3301 = vdwg.mxu0
    %3302 = vmatprep.subr.bf16.mxu0 %v2422
    %3303 = vmatpush1.bf16.msra.mxu0 %v2421
    %3304 = vmatprep.subr.bf16.mxu0 %v2414
    %3305 = vmatpush1.bf16.msra.mxu0 %v2413
    %3306 = vmatprep.subr.bf16.mxu0 %v2406
    %3307 = vmatpush1.bf16.msra.mxu0 %v2405
    %3308 = vmatprep.subr.bf16.mxu0 %v2398
    %3309 = vmatpush1.bf16.msra.mxu0 %v2397
    %3310 = vmatprep.subr.bf16.mxu0 %v2390
    %3311 = vmatpush1.bf16.msra.mxu0 %v2389
    %3312 = vmatprep.subr.bf16.mxu0 %v2382
    %3313 = vmatpush1.bf16.msra.mxu0 %v2381
    %3314 = vmatprep.subr.bf16.mxu0 %v2374
    %3315 = vmatpush1.bf16.msra.mxu0 %v2373
    %3316 = vmatprep.subr.bf16.mxu0 %v2366
    %3317 = vmatpush1.bf16.msra.mxu0 %v2365
    %3318 = vmatprep.subr.bf16.mxu0 %v2486
    %3319 = vmatpush2.bf16.msra.mxu0 %v2485
    %3320 = vmatprep.subr.bf16.mxu0 %v2478
    %3321 = vmatpush2.bf16.msra.mxu0 %v2477
    %3322 = vmatprep.subr.bf16.mxu0 %v2470
    %3323 = vmatpush2.bf16.msra.mxu0 %v2469
    %3324 = vmatprep.subr.bf16.mxu0 %v2462
    %3325 = vmatpush2.bf16.msra.mxu0 %v2461
    %3326 = vmatprep.subr.bf16.mxu0 %v2454
    %3327 = vmatpush2.bf16.msra.mxu0 %v2453
    %3328 = vmatprep.subr.bf16.mxu0 %v2446
    %3329 = vmatpush2.bf16.msra.mxu0 %v2445
    %3330 = vmatprep.subr.bf16.mxu0 %v2438
    %3331 = vmatpush2.bf16.msra.mxu0 %v2437
    %3332 = vmatprep.subr.bf16.mxu0 %v2430
    %3333 = vmatpush2.bf16.msra.mxu0 %v2429
    %3334 = vmatprep.mubr.bf16.mxu0 %v688
    %3335 = vmatmul.mubr.bf16.gmra.mxu0 %v687
    %v3336 = vpop.f32.mrf.mxu0
    %v3337 = vadd.f32 %v3296, %v3336
    %v3338 = vpop.f32.mrf.mxu0
    %v3339 = vadd.f32 %v3298, %v3338
    %v3340 = vpop.f32.mrf.mxu0
    %v3341 = vpop.f32.mrf.mxu0
    %3342 = vdwg.mxu0
    %3343 = vmatprep.subr.bf16.mxu0 %v2550
    %3344 = vmatpush1.bf16.msra.mxu0 %v2549
    %3345 = vmatprep.subr.bf16.mxu0 %v2542
    %3346 = vmatpush1.bf16.msra.mxu0 %v2541
    %3347 = vmatprep.subr.bf16.mxu0 %v2534
    %3348 = vmatpush1.bf16.msra.mxu0 %v2533
    %3349 = vmatprep.subr.bf16.mxu0 %v2526
    %3350 = vmatpush1.bf16.msra.mxu0 %v2525
    %3351 = vmatprep.subr.bf16.mxu0 %v2518
    %3352 = vmatpush1.bf16.msra.mxu0 %v2517
    %3353 = vmatprep.subr.bf16.mxu0 %v2510
    %3354 = vmatpush1.bf16.msra.mxu0 %v2509
    %3355 = vmatprep.subr.bf16.mxu0 %v2502
    %3356 = vmatpush1.bf16.msra.mxu0 %v2501
    %3357 = vmatprep.subr.bf16.mxu0 %v2494
    %3358 = vmatpush1.bf16.msra.mxu0 %v2493
    %3359 = vmatprep.subr.bf16.mxu0 %v2614
    %3360 = vmatpush2.bf16.msra.mxu0 %v2613
    %3361 = vmatprep.subr.bf16.mxu0 %v2606
    %3362 = vmatpush2.bf16.msra.mxu0 %v2605
    %3363 = vmatprep.subr.bf16.mxu0 %v2598
    %3364 = vmatpush2.bf16.msra.mxu0 %v2597
    %3365 = vmatprep.subr.bf16.mxu0 %v2590
    %3366 = vmatpush2.bf16.msra.mxu0 %v2589
    %3367 = vmatprep.subr.bf16.mxu0 %v2582
    %3368 = vmatpush2.bf16.msra.mxu0 %v2581
    %3369 = vmatprep.subr.bf16.mxu0 %v2574
    %3370 = vmatpush2.bf16.msra.mxu0 %v2573
    %3371 = vmatprep.subr.bf16.mxu0 %v2566
    %3372 = vmatpush2.bf16.msra.mxu0 %v2565
    %3373 = vmatprep.subr.bf16.mxu0 %v2558
    %3374 = vmatpush2.bf16.msra.mxu0 %v2557
    %3375 = vmatprep.mubr.bf16.mxu0 %v690
    %3376 = vmatmul.mubr.bf16.gmra.mxu0 %v689
    %v3377 = vpop.f32.mrf.mxu0
    %v3378 = vadd.f32 %v3337, %v3377
    %v3379 = vpop.f32.mrf.mxu0
    %v3380 = vadd.f32 %v3339, %v3379
    %v3381 = vpop.f32.mrf.mxu0
    %v3382 = vpop.f32.mrf.mxu0
    %3383 = vdwg.mxu0
    %3384 = vmatprep.subr.bf16.mxu0 %v2678
    %3385 = vmatpush1.bf16.msra.mxu0 %v2677
    %3386 = vmatprep.subr.bf16.mxu0 %v2670
    %3387 = vmatpush1.bf16.msra.mxu0 %v2669
    %3388 = vmatprep.subr.bf16.mxu0 %v2662
    %3389 = vmatpush1.bf16.msra.mxu0 %v2661
    %3390 = vmatprep.subr.bf16.mxu0 %v2654
    %3391 = vmatpush1.bf16.msra.mxu0 %v2653
    %3392 = vmatprep.subr.bf16.mxu0 %v2646
    %3393 = vmatpush1.bf16.msra.mxu0 %v2645
    %3394 = vmatprep.subr.bf16.mxu0 %v2638
    %3395 = vmatpush1.bf16.msra.mxu0 %v2637
    %3396 = vmatprep.subr.bf16.mxu0 %v2630
    %3397 = vmatpush1.bf16.msra.mxu0 %v2629
    %3398 = vmatprep.subr.bf16.mxu0 %v2622
    %3399 = vmatpush1.bf16.msra.mxu0 %v2621
    %3400 = vmatprep.subr.bf16.mxu0 %v2742
    %3401 = vmatpush2.bf16.msra.mxu0 %v2741
    %3402 = vmatprep.subr.bf16.mxu0 %v2734
    %3403 = vmatpush2.bf16.msra.mxu0 %v2733
    %3404 = vmatprep.subr.bf16.mxu0 %v2726
    %3405 = vmatpush2.bf16.msra.mxu0 %v2725
    %3406 = vmatprep.subr.bf16.mxu0 %v2718
    %3407 = vmatpush2.bf16.msra.mxu0 %v2717
    %3408 = vmatprep.subr.bf16.mxu0 %v2710
    %3409 = vmatpush2.bf16.msra.mxu0 %v2709
    %3410 = vmatprep.subr.bf16.mxu0 %v2702
    %3411 = vmatpush2.bf16.msra.mxu0 %v2701
    %3412 = vmatprep.subr.bf16.mxu0 %v2694
    %3413 = vmatpush2.bf16.msra.mxu0 %v2693
    %3414 = vmatprep.subr.bf16.mxu0 %v2686
    %3415 = vmatpush2.bf16.msra.mxu0 %v2685
    %3416 = vmatprep.mubr.bf16.mxu0 %v692
    %3417 = vmatmul.mubr.bf16.gmra.mxu0 %v691
    %v3418 = vpop.f32.mrf.mxu0
    %v3419 = vadd.f32 %v3378, %v3418
    %v3420 = vpop.f32.mrf.mxu0
    %v3421 = vadd.f32 %v3380, %v3420
    %v3422 = vpop.f32.mrf.mxu0
    %v3423 = vpop.f32.mrf.mxu0
    %3424 = vdwg.mxu0
    %3425 = vmatprep.subr.bf16.mxu0 %v2296
    %3426 = vmatpush1.bf16.msra.mxu0 %v2295
    %3427 = vmatprep.subr.bf16.mxu0 %v2288
    %3428 = vmatpush1.bf16.msra.mxu0 %v2287
    %3429 = vmatprep.subr.bf16.mxu0 %v2280
    %3430 = vmatpush1.bf16.msra.mxu0 %v2279
    %3431 = vmatprep.subr.bf16.mxu0 %v2272
    %3432 = vmatpush1.bf16.msra.mxu0 %v2271
    %3433 = vmatprep.subr.bf16.mxu0 %v2264
    %3434 = vmatpush1.bf16.msra.mxu0 %v2263
    %3435 = vmatprep.subr.bf16.mxu0 %v2256
    %3436 = vmatpush1.bf16.msra.mxu0 %v2255
    %3437 = vmatprep.subr.bf16.mxu0 %v2248
    %3438 = vmatpush1.bf16.msra.mxu0 %v2247
    %3439 = vmatprep.subr.bf16.mxu0 %v2240
    %3440 = vmatpush1.bf16.msra.mxu0 %v2239
    %3441 = vmatprep.subr.bf16.mxu0 %v2360
    %3442 = vmatpush2.bf16.msra.mxu0 %v2359
    %3443 = vmatprep.subr.bf16.mxu0 %v2352
    %3444 = vmatpush2.bf16.msra.mxu0 %v2351
    %3445 = vmatprep.subr.bf16.mxu0 %v2344
    %3446 = vmatpush2.bf16.msra.mxu0 %v2343
    %3447 = vmatprep.subr.bf16.mxu0 %v2336
    %3448 = vmatpush2.bf16.msra.mxu0 %v2335
    %3449 = vmatprep.subr.bf16.mxu0 %v2328
    %3450 = vmatpush2.bf16.msra.mxu0 %v2327
    %3451 = vmatprep.subr.bf16.mxu0 %v2320
    %3452 = vmatpush2.bf16.msra.mxu0 %v2319
    %3453 = vmatprep.subr.bf16.mxu0 %v2312
    %3454 = vmatpush2.bf16.msra.mxu0 %v2311
    %3455 = vmatprep.subr.bf16.mxu0 %v2304
    %3456 = vmatpush2.bf16.msra.mxu0 %v2303
    %3457 = vmatprep.mubr.bf16.mxu0 %v686
    %3458 = vmatmul.mubr.bf16.gmra.mxu0 %v685
    %v3459 = vpop.f32.mrf.mxu0
    %v3460 = vadd.f32 0.0, %v3459
    %v3461 = vpop.f32.mrf.mxu0
    %v3462 = vadd.f32 0.0, %v3461
    %v3463 = vpop.f32.mrf.mxu0
    %v3464 = vpop.f32.mrf.mxu0
    %3465 = vdwg.mxu0
    %3466 = vmatprep.subr.bf16.mxu0 %v2424
    %3467 = vmatpush1.bf16.msra.mxu0 %v2423
    %3468 = vmatprep.subr.bf16.mxu0 %v2416
    %3469 = vmatpush1.bf16.msra.mxu0 %v2415
    %3470 = vmatprep.subr.bf16.mxu0 %v2408
    %3471 = vmatpush1.bf16.msra.mxu0 %v2407
    %3472 = vmatprep.subr.bf16.mxu0 %v2400
    %3473 = vmatpush1.bf16.msra.mxu0 %v2399
    %3474 = vmatprep.subr.bf16.mxu0 %v2392
    %3475 = vmatpush1.bf16.msra.mxu0 %v2391
    %3476 = vmatprep.subr.bf16.mxu0 %v2384
    %3477 = vmatpush1.bf16.msra.mxu0 %v2383
    %3478 = vmatprep.subr.bf16.mxu0 %v2376
    %3479 = vmatpush1.bf16.msra.mxu0 %v2375
    %3480 = vmatprep.subr.bf16.mxu0 %v2368
    %3481 = vmatpush1.bf16.msra.mxu0 %v2367
    %3482 = vmatprep.subr.bf16.mxu0 %v2488
    %3483 = vmatpush2.bf16.msra.mxu0 %v2487
    %3484 = vmatprep.subr.bf16.mxu0 %v2480
    %3485 = vmatpush2.bf16.msra.mxu0 %v2479
    %3486 = vmatprep.subr.bf16.mxu0 %v2472
    %3487 = vmatpush2.bf16.msra.mxu0 %v2471
    %3488 = vmatprep.subr.bf16.mxu0 %v2464
    %3489 = vmatpush2.bf16.msra.mxu0 %v2463
    %3490 = vmatprep.subr.bf16.mxu0 %v2456
    %3491 = vmatpush2.bf16.msra.mxu0 %v2455
    %3492 = vmatprep.subr.bf16.mxu0 %v2448
    %3493 = vmatpush2.bf16.msra.mxu0 %v2447
    %3494 = vmatprep.subr.bf16.mxu0 %v2440
    %3495 = vmatpush2.bf16.msra.mxu0 %v2439
    %3496 = vmatprep.subr.bf16.mxu0 %v2432
    %3497 = vmatpush2.bf16.msra.mxu0 %v2431
    %3498 = vmatprep.mubr.bf16.mxu0 %v688
    %3499 = vmatmul.mubr.bf16.gmra.mxu0 %v687
    %v3500 = vpop.f32.mrf.mxu0
    %v3501 = vadd.f32 %v3460, %v3500
    %v3502 = vpop.f32.mrf.mxu0
    %v3503 = vadd.f32 %v3462, %v3502
    %v3504 = vpop.f32.mrf.mxu0
    %v3505 = vpop.f32.mrf.mxu0
    %3506 = vdwg.mxu0
    %3507 = vmatprep.subr.bf16.mxu0 %v2552
    %3508 = vmatpush1.bf16.msra.mxu0 %v2551
    %3509 = vmatprep.subr.bf16.mxu0 %v2544
    %3510 = vmatpush1.bf16.msra.mxu0 %v2543
    %3511 = vmatprep.subr.bf16.mxu0 %v2536
    %3512 = vmatpush1.bf16.msra.mxu0 %v2535
    %3513 = vmatprep.subr.bf16.mxu0 %v2528
    %3514 = vmatpush1.bf16.msra.mxu0 %v2527
    %3515 = vmatprep.subr.bf16.mxu0 %v2520
    %3516 = vmatpush1.bf16.msra.mxu0 %v2519
    %3517 = vmatprep.subr.bf16.mxu0 %v2512
    %3518 = vmatpush1.bf16.msra.mxu0 %v2511
    %3519 = vmatprep.subr.bf16.mxu0 %v2504
    %3520 = vmatpush1.bf16.msra.mxu0 %v2503
    %3521 = vmatprep.subr.bf16.mxu0 %v2496
    %3522 = vmatpush1.bf16.msra.mxu0 %v2495
    %3523 = vmatprep.subr.bf16.mxu0 %v2616
    %3524 = vmatpush2.bf16.msra.mxu0 %v2615
    %3525 = vmatprep.subr.bf16.mxu0 %v2608
    %3526 = vmatpush2.bf16.msra.mxu0 %v2607
    %3527 = vmatprep.subr.bf16.mxu0 %v2600
    %3528 = vmatpush2.bf16.msra.mxu0 %v2599
    %3529 = vmatprep.subr.bf16.mxu0 %v2592
    %3530 = vmatpush2.bf16.msra.mxu0 %v2591
    %3531 = vmatprep.subr.bf16.mxu0 %v2584
    %3532 = vmatpush2.bf16.msra.mxu0 %v2583
    %3533 = vmatprep.subr.bf16.mxu0 %v2576
    %3534 = vmatpush2.bf16.msra.mxu0 %v2575
    %3535 = vmatprep.subr.bf16.mxu0 %v2568
    %3536 = vmatpush2.bf16.msra.mxu0 %v2567
    %3537 = vmatprep.subr.bf16.mxu0 %v2560
    %3538 = vmatpush2.bf16.msra.mxu0 %v2559
    %3539 = vmatprep.mubr.bf16.mxu0 %v690
    %3540 = vmatmul.mubr.bf16.gmra.mxu0 %v689
    %v3541 = vpop.f32.mrf.mxu0
    %v3542 = vadd.f32 %v3501, %v3541
    %v3543 = vpop.f32.mrf.mxu0
    %v3544 = vadd.f32 %v3503, %v3543
    %v3545 = vpop.f32.mrf.mxu0
    %v3546 = vpop.f32.mrf.mxu0
    %3547 = vdwg.mxu0
    %3548 = vmatprep.subr.bf16.mxu0 %v2680
    %3549 = vmatpush1.bf16.msra.mxu0 %v2679
    %3550 = vmatprep.subr.bf16.mxu0 %v2672
    %3551 = vmatpush1.bf16.msra.mxu0 %v2671
    %3552 = vmatprep.subr.bf16.mxu0 %v2664
    %3553 = vmatpush1.bf16.msra.mxu0 %v2663
    %3554 = vmatprep.subr.bf16.mxu0 %v2656
    %3555 = vmatpush1.bf16.msra.mxu0 %v2655
    %3556 = vmatprep.subr.bf16.mxu0 %v2648
    %3557 = vmatpush1.bf16.msra.mxu0 %v2647
    %3558 = vmatprep.subr.bf16.mxu0 %v2640
    %3559 = vmatpush1.bf16.msra.mxu0 %v2639
    %3560 = vmatprep.subr.bf16.mxu0 %v2632
    %3561 = vmatpush1.bf16.msra.mxu0 %v2631
    %3562 = vmatprep.subr.bf16.mxu0 %v2624
    %3563 = vmatpush1.bf16.msra.mxu0 %v2623
    %3564 = vmatprep.subr.bf16.mxu0 %v2744
    %3565 = vmatpush2.bf16.msra.mxu0 %v2743
    %3566 = vmatprep.subr.bf16.mxu0 %v2736
    %3567 = vmatpush2.bf16.msra.mxu0 %v2735
    %3568 = vmatprep.subr.bf16.mxu0 %v2728
    %3569 = vmatpush2.bf16.msra.mxu0 %v2727
    %3570 = vmatprep.subr.bf16.mxu0 %v2720
    %3571 = vmatpush2.bf16.msra.mxu0 %v2719
    %3572 = vmatprep.subr.bf16.mxu0 %v2712
    %3573 = vmatpush2.bf16.msra.mxu0 %v2711
    %3574 = vmatprep.subr.bf16.mxu0 %v2704
    %3575 = vmatpush2.bf16.msra.mxu0 %v2703
    %3576 = vmatprep.subr.bf16.mxu0 %v2696
    %3577 = vmatpush2.bf16.msra.mxu0 %v2695
    %3578 = vmatprep.subr.bf16.mxu0 %v2688
    %3579 = vmatpush2.bf16.msra.mxu0 %v2687
    %3580 = vmatprep.mubr.bf16.mxu0 %v692
    %3581 = vmatmul.mubr.bf16.gmra.mxu0 %v691
    %v3582 = vpop.f32.mrf.mxu0
    %v3583 = vadd.f32 %v3542, %v3582
    %v3584 = vpop.f32.mrf.mxu0
    %v3585 = vadd.f32 %v3544, %v3584
    %v3586 = vpop.f32.mrf.mxu0
    %v3587 = vpop.f32.mrf.mxu0
    %3588 = vdwg.mxu0
    %3589 = vmatprep.subr.bf16.mxu0 %v2298
    %3590 = vmatpush1.bf16.msra.mxu0 %v2297
    %3591 = vmatprep.subr.bf16.mxu0 %v2290
    %3592 = vmatpush1.bf16.msra.mxu0 %v2289
    %3593 = vmatprep.subr.bf16.mxu0 %v2282
    %3594 = vmatpush1.bf16.msra.mxu0 %v2281
    %3595 = vmatprep.subr.bf16.mxu0 %v2274
    %3596 = vmatpush1.bf16.msra.mxu0 %v2273
    %3597 = vmatprep.subr.bf16.mxu0 %v2266
    %3598 = vmatpush1.bf16.msra.mxu0 %v2265
    %3599 = vmatprep.subr.bf16.mxu0 %v2258
    %3600 = vmatpush1.bf16.msra.mxu0 %v2257
    %3601 = vmatprep.subr.bf16.mxu0 %v2250
    %3602 = vmatpush1.bf16.msra.mxu0 %v2249
    %3603 = vmatprep.subr.bf16.mxu0 %v2242
    %3604 = vmatpush1.bf16.msra.mxu0 %v2241
    %3605 = vmatprep.subr.bf16.mxu0 %v2362
    %3606 = vmatpush2.bf16.msra.mxu0 %v2361
    %3607 = vmatprep.subr.bf16.mxu0 %v2354
    %3608 = vmatpush2.bf16.msra.mxu0 %v2353
    %3609 = vmatprep.subr.bf16.mxu0 %v2346
    %3610 = vmatpush2.bf16.msra.mxu0 %v2345
    %3611 = vmatprep.subr.bf16.mxu0 %v2338
    %3612 = vmatpush2.bf16.msra.mxu0 %v2337
    %3613 = vmatprep.subr.bf16.mxu0 %v2330
    %3614 = vmatpush2.bf16.msra.mxu0 %v2329
    %3615 = vmatprep.subr.bf16.mxu0 %v2322
    %3616 = vmatpush2.bf16.msra.mxu0 %v2321
    %3617 = vmatprep.subr.bf16.mxu0 %v2314
    %3618 = vmatpush2.bf16.msra.mxu0 %v2313
    %3619 = vmatprep.subr.bf16.mxu0 %v2306
    %3620 = vmatpush2.bf16.msra.mxu0 %v2305
    %3621 = vmatprep.mubr.bf16.mxu0 %v686
    %3622 = vmatmul.mubr.bf16.gmra.mxu0 %v685
    %v3623 = vpop.f32.mrf.mxu0
    %v3624 = vadd.f32 0.0, %v3623
    %v3625 = vpop.f32.mrf.mxu0
    %v3626 = vadd.f32 0.0, %v3625
    %v3627 = vpop.f32.mrf.mxu0
    %v3628 = vpop.f32.mrf.mxu0
    %3629 = vdwg.mxu0
    %3630 = vmatprep.subr.bf16.mxu0 %v2426
    %3631 = vmatpush1.bf16.msra.mxu0 %v2425
    %3632 = vmatprep.subr.bf16.mxu0 %v2418
    %3633 = vmatpush1.bf16.msra.mxu0 %v2417
    %3634 = vmatprep.subr.bf16.mxu0 %v2410
    %3635 = vmatpush1.bf16.msra.mxu0 %v2409
    %3636 = vmatprep.subr.bf16.mxu0 %v2402
    %3637 = vmatpush1.bf16.msra.mxu0 %v2401
    %3638 = vmatprep.subr.bf16.mxu0 %v2394
    %3639 = vmatpush1.bf16.msra.mxu0 %v2393
    %3640 = vmatprep.subr.bf16.mxu0 %v2386
    %3641 = vmatpush1.bf16.msra.mxu0 %v2385
    %3642 = vmatprep.subr.bf16.mxu0 %v2378
    %3643 = vmatpush1.bf16.msra.mxu0 %v2377
    %3644 = vmatprep.subr.bf16.mxu0 %v2370
    %3645 = vmatpush1.bf16.msra.mxu0 %v2369
    %3646 = vmatprep.subr.bf16.mxu0 %v2490
    %3647 = vmatpush2.bf16.msra.mxu0 %v2489
    %3648 = vmatprep.subr.bf16.mxu0 %v2482
    %3649 = vmatpush2.bf16.msra.mxu0 %v2481
    %3650 = vmatprep.subr.bf16.mxu0 %v2474
    %3651 = vmatpush2.bf16.msra.mxu0 %v2473
    %3652 = vmatprep.subr.bf16.mxu0 %v2466
    %3653 = vmatpush2.bf16.msra.mxu0 %v2465
    %3654 = vmatprep.subr.bf16.mxu0 %v2458
    %3655 = vmatpush2.bf16.msra.mxu0 %v2457
    %3656 = vmatprep.subr.bf16.mxu0 %v2450
    %3657 = vmatpush2.bf16.msra.mxu0 %v2449
    %3658 = vmatprep.subr.bf16.mxu0 %v2442
    %3659 = vmatpush2.bf16.msra.mxu0 %v2441
    %3660 = vmatprep.subr.bf16.mxu0 %v2434
    %3661 = vmatpush2.bf16.msra.mxu0 %v2433
    %3662 = vmatprep.mubr.bf16.mxu0 %v688
    %3663 = vmatmul.mubr.bf16.gmra.mxu0 %v687
    %v3664 = vpop.f32.mrf.mxu0
    %v3665 = vadd.f32 %v3624, %v3664
    %v3666 = vpop.f32.mrf.mxu0
    %v3667 = vadd.f32 %v3626, %v3666
    %v3668 = vpop.f32.mrf.mxu0
    %v3669 = vpop.f32.mrf.mxu0
    %3670 = vdwg.mxu0
    %3671 = vmatprep.subr.bf16.mxu0 %v2554
    %3672 = vmatpush1.bf16.msra.mxu0 %v2553
    %3673 = vmatprep.subr.bf16.mxu0 %v2546
    %3674 = vmatpush1.bf16.msra.mxu0 %v2545
    %3675 = vmatprep.subr.bf16.mxu0 %v2538
    %3676 = vmatpush1.bf16.msra.mxu0 %v2537
    %3677 = vmatprep.subr.bf16.mxu0 %v2530
    %3678 = vmatpush1.bf16.msra.mxu0 %v2529
    %3679 = vmatprep.subr.bf16.mxu0 %v2522
    %3680 = vmatpush1.bf16.msra.mxu0 %v2521
    %3681 = vmatprep.subr.bf16.mxu0 %v2514
    %3682 = vmatpush1.bf16.msra.mxu0 %v2513
    %3683 = vmatprep.subr.bf16.mxu0 %v2506
    %3684 = vmatpush1.bf16.msra.mxu0 %v2505
    %3685 = vmatprep.subr.bf16.mxu0 %v2498
    %3686 = vmatpush1.bf16.msra.mxu0 %v2497
    %3687 = vmatprep.subr.bf16.mxu0 %v2618
    %3688 = vmatpush2.bf16.msra.mxu0 %v2617
    %3689 = vmatprep.subr.bf16.mxu0 %v2610
    %3690 = vmatpush2.bf16.msra.mxu0 %v2609
    %3691 = vmatprep.subr.bf16.mxu0 %v2602
    %3692 = vmatpush2.bf16.msra.mxu0 %v2601
    %3693 = vmatprep.subr.bf16.mxu0 %v2594
    %3694 = vmatpush2.bf16.msra.mxu0 %v2593
    %3695 = vmatprep.subr.bf16.mxu0 %v2586
    %3696 = vmatpush2.bf16.msra.mxu0 %v2585
    %3697 = vmatprep.subr.bf16.mxu0 %v2578
    %3698 = vmatpush2.bf16.msra.mxu0 %v2577
    %3699 = vmatprep.subr.bf16.mxu0 %v2570
    %3700 = vmatpush2.bf16.msra.mxu0 %v2569
    %3701 = vmatprep.subr.bf16.mxu0 %v2562
    %3702 = vmatpush2.bf16.msra.mxu0 %v2561
    %3703 = vmatprep.mubr.bf16.mxu0 %v690
    %3704 = vmatmul.mubr.bf16.gmra.mxu0 %v689
    %v3705 = vpop.f32.mrf.mxu0
    %v3706 = vadd.f32 %v3665, %v3705
    %v3707 = vpop.f32.mrf.mxu0
    %v3708 = vadd.f32 %v3667, %v3707
    %v3709 = vpop.f32.mrf.mxu0
    %v3710 = vpop.f32.mrf.mxu0
    %3711 = vdwg.mxu0
    %3712 = vmatprep.subr.bf16.mxu0 %v2682
    %3713 = vmatpush1.bf16.msra.mxu0 %v2681
    %3714 = vmatprep.subr.bf16.mxu0 %v2674
    %3715 = vmatpush1.bf16.msra.mxu0 %v2673
    %3716 = vmatprep.subr.bf16.mxu0 %v2666
    %3717 = vmatpush1.bf16.msra.mxu0 %v2665
    %3718 = vmatprep.subr.bf16.mxu0 %v2658
    %3719 = vmatpush1.bf16.msra.mxu0 %v2657
    %3720 = vmatprep.subr.bf16.mxu0 %v2650
    %3721 = vmatpush1.bf16.msra.mxu0 %v2649
    %3722 = vmatprep.subr.bf16.mxu0 %v2642
    %3723 = vmatpush1.bf16.msra.mxu0 %v2641
    %3724 = vmatprep.subr.bf16.mxu0 %v2634
    %3725 = vmatpush1.bf16.msra.mxu0 %v2633
    %3726 = vmatprep.subr.bf16.mxu0 %v2626
    %3727 = vmatpush1.bf16.msra.mxu0 %v2625
    %3728 = vmatprep.subr.bf16.mxu0 %v2746
    %3729 = vmatpush2.bf16.msra.mxu0 %v2745
    %3730 = vmatprep.subr.bf16.mxu0 %v2738
    %3731 = vmatpush2.bf16.msra.mxu0 %v2737
    %3732 = vmatprep.subr.bf16.mxu0 %v2730
    %3733 = vmatpush2.bf16.msra.mxu0 %v2729
    %3734 = vmatprep.subr.bf16.mxu0 %v2722
    %3735 = vmatpush2.bf16.msra.mxu0 %v2721
    %3736 = vmatprep.subr.bf16.mxu0 %v2714
    %3737 = vmatpush2.bf16.msra.mxu0 %v2713
    %3738 = vmatprep.subr.bf16.mxu0 %v2706
    %3739 = vmatpush2.bf16.msra.mxu0 %v2705
    %3740 = vmatprep.subr.bf16.mxu0 %v2698
    %3741 = vmatpush2.bf16.msra.mxu0 %v2697
    %3742 = vmatprep.subr.bf16.mxu0 %v2690
    %3743 = vmatpush2.bf16.msra.mxu0 %v2689
    %3744 = vmatprep.mubr.bf16.mxu0 %v692
    %3745 = vmatmul.mubr.bf16.gmra.mxu0 %v691
    %v3746 = vpop.f32.mrf.mxu0
    %v3747 = vadd.f32 %v3706, %v3746
    %v3748 = vpop.f32.mrf.mxu0
    %v3749 = vadd.f32 %v3708, %v3748
    %v3750 = vpop.f32.mrf.mxu0
    %v3751 = vpop.f32.mrf.mxu0
    %3752 = vdwg.mxu0
    %3753 = vmatprep.subr.bf16.mxu0 %v2300
    %3754 = vmatpush1.bf16.msra.mxu0 %v2299
    %3755 = vmatprep.subr.bf16.mxu0 %v2292
    %3756 = vmatpush1.bf16.msra.mxu0 %v2291
    %3757 = vmatprep.subr.bf16.mxu0 %v2284
    %3758 = vmatpush1.bf16.msra.mxu0 %v2283
    %3759 = vmatprep.subr.bf16.mxu0 %v2276
    %3760 = vmatpush1.bf16.msra.mxu0 %v2275
    %3761 = vmatprep.subr.bf16.mxu0 %v2268
    %3762 = vmatpush1.bf16.msra.mxu0 %v2267
    %3763 = vmatprep.subr.bf16.mxu0 %v2260
    %3764 = vmatpush1.bf16.msra.mxu0 %v2259
    %3765 = vmatprep.subr.bf16.mxu0 %v2252
    %3766 = vmatpush1.bf16.msra.mxu0 %v2251
    %3767 = vmatprep.subr.bf16.mxu0 %v2244
    %3768 = vmatpush1.bf16.msra.mxu0 %v2243
    %3769 = vmatprep.subr.bf16.mxu0 %v2364
    %3770 = vmatpush2.bf16.msra.mxu0 %v2363
    %3771 = vmatprep.subr.bf16.mxu0 %v2356
    %3772 = vmatpush2.bf16.msra.mxu0 %v2355
    %3773 = vmatprep.subr.bf16.mxu0 %v2348
    %3774 = vmatpush2.bf16.msra.mxu0 %v2347
    %3775 = vmatprep.subr.bf16.mxu0 %v2340
    %3776 = vmatpush2.bf16.msra.mxu0 %v2339
    %3777 = vmatprep.subr.bf16.mxu0 %v2332
    %3778 = vmatpush2.bf16.msra.mxu0 %v2331
    %3779 = vmatprep.subr.bf16.mxu0 %v2324
    %3780 = vmatpush2.bf16.msra.mxu0 %v2323
    %3781 = vmatprep.subr.bf16.mxu0 %v2316
    %3782 = vmatpush2.bf16.msra.mxu0 %v2315
    %3783 = vmatprep.subr.bf16.mxu0 %v2308
    %3784 = vmatpush2.bf16.msra.mxu0 %v2307
    %3785 = vmatprep.mubr.bf16.mxu0 %v686
    %3786 = vmatmul.mubr.bf16.gmra.mxu0 %v685
    %v3787 = vpop.f32.mrf.mxu0
    %v3788 = vadd.f32 0.0, %v3787
    %v3789 = vpop.f32.mrf.mxu0
    %v3790 = vadd.f32 0.0, %v3789
    %v3791 = vpop.f32.mrf.mxu0
    %v3792 = vpop.f32.mrf.mxu0
    %3793 = vdwg.mxu0
    %3794 = vmatprep.subr.bf16.mxu0 %v2428
    %3795 = vmatpush1.bf16.msra.mxu0 %v2427
    %3796 = vmatprep.subr.bf16.mxu0 %v2420
    %3797 = vmatpush1.bf16.msra.mxu0 %v2419
    %3798 = vmatprep.subr.bf16.mxu0 %v2412
    %3799 = vmatpush1.bf16.msra.mxu0 %v2411
    %3800 = vmatprep.subr.bf16.mxu0 %v2404
    %3801 = vmatpush1.bf16.msra.mxu0 %v2403
    %3802 = vmatprep.subr.bf16.mxu0 %v2396
    %3803 = vmatpush1.bf16.msra.mxu0 %v2395
    %3804 = vmatprep.subr.bf16.mxu0 %v2388
    %3805 = vmatpush1.bf16.msra.mxu0 %v2387
    %3806 = vmatprep.subr.bf16.mxu0 %v2380
    %3807 = vmatpush1.bf16.msra.mxu0 %v2379
    %3808 = vmatprep.subr.bf16.mxu0 %v2372
    %3809 = vmatpush1.bf16.msra.mxu0 %v2371
    %3810 = vmatprep.subr.bf16.mxu0 %v2492
    %3811 = vmatpush2.bf16.msra.mxu0 %v2491
    %3812 = vmatprep.subr.bf16.mxu0 %v2484
    %3813 = vmatpush2.bf16.msra.mxu0 %v2483
    %3814 = vmatprep.subr.bf16.mxu0 %v2476
    %3815 = vmatpush2.bf16.msra.mxu0 %v2475
    %3816 = vmatprep.subr.bf16.mxu0 %v2468
    %3817 = vmatpush2.bf16.msra.mxu0 %v2467
    %3818 = vmatprep.subr.bf16.mxu0 %v2460
    %3819 = vmatpush2.bf16.msra.mxu0 %v2459
    %3820 = vmatprep.subr.bf16.mxu0 %v2452
    %3821 = vmatpush2.bf16.msra.mxu0 %v2451
    %3822 = vmatprep.subr.bf16.mxu0 %v2444
    %3823 = vmatpush2.bf16.msra.mxu0 %v2443
    %3824 = vmatprep.subr.bf16.mxu0 %v2436
    %3825 = vmatpush2.bf16.msra.mxu0 %v2435
    %3826 = vmatprep.mubr.bf16.mxu0 %v688
    %3827 = vmatmul.mubr.bf16.gmra.mxu0 %v687
    %v3828 = vpop.f32.mrf.mxu0
    %v3829 = vadd.f32 %v3788, %v3828
    %v3830 = vpop.f32.mrf.mxu0
    %v3831 = vadd.f32 %v3790, %v3830
    %v3832 = vpop.f32.mrf.mxu0
    %v3833 = vpop.f32.mrf.mxu0
    %3834 = vdwg.mxu0
    %3835 = vmatprep.subr.bf16.mxu0 %v2556
    %3836 = vmatpush1.bf16.msra.mxu0 %v2555
    %3837 = vmatprep.subr.bf16.mxu0 %v2548
    %3838 = vmatpush1.bf16.msra.mxu0 %v2547
    %3839 = vmatprep.subr.bf16.mxu0 %v2540
    %3840 = vmatpush1.bf16.msra.mxu0 %v2539
    %3841 = vmatprep.subr.bf16.mxu0 %v2532
    %3842 = vmatpush1.bf16.msra.mxu0 %v2531
    %3843 = vmatprep.subr.bf16.mxu0 %v2524
    %3844 = vmatpush1.bf16.msra.mxu0 %v2523
    %3845 = vmatprep.subr.bf16.mxu0 %v2516
    %3846 = vmatpush1.bf16.msra.mxu0 %v2515
    %3847 = vmatprep.subr.bf16.mxu0 %v2508
    %3848 = vmatpush1.bf16.msra.mxu0 %v2507
    %3849 = vmatprep.subr.bf16.mxu0 %v2500
    %3850 = vmatpush1.bf16.msra.mxu0 %v2499
    %3851 = vmatprep.subr.bf16.mxu0 %v2620
    %3852 = vmatpush2.bf16.msra.mxu0 %v2619
    %3853 = vmatprep.subr.bf16.mxu0 %v2612
    %3854 = vmatpush2.bf16.msra.mxu0 %v2611
    %3855 = vmatprep.subr.bf16.mxu0 %v2604
    %3856 = vmatpush2.bf16.msra.mxu0 %v2603
    %3857 = vmatprep.subr.bf16.mxu0 %v2596
    %3858 = vmatpush2.bf16.msra.mxu0 %v2595
    %3859 = vmatprep.subr.bf16.mxu0 %v2588
    %3860 = vmatpush2.bf16.msra.mxu0 %v2587
    %3861 = vmatprep.subr.bf16.mxu0 %v2580
    %3862 = vmatpush2.bf16.msra.mxu0 %v2579
    %3863 = vmatprep.subr.bf16.mxu0 %v2572
    %3864 = vmatpush2.bf16.msra.mxu0 %v2571
    %3865 = vmatprep.subr.bf16.mxu0 %v2564
    %3866 = vmatpush2.bf16.msra.mxu0 %v2563
    %3867 = vmatprep.mubr.bf16.mxu0 %v690
    %3868 = vmatmul.mubr.bf16.gmra.mxu0 %v689
    %v3869 = vpop.f32.mrf.mxu0
    %v3870 = vadd.f32 %v3829, %v3869
    %v3871 = vpop.f32.mrf.mxu0
    %v3872 = vadd.f32 %v3831, %v3871
    %v3873 = vpop.f32.mrf.mxu0
    %v3874 = vpop.f32.mrf.mxu0
    %3875 = vdwg.mxu0
    %3876 = vmatprep.subr.bf16.mxu0 %v2684
    %3877 = vmatpush1.bf16.msra.mxu0 %v2683
    %3878 = vmatprep.subr.bf16.mxu0 %v2676
    %3879 = vmatpush1.bf16.msra.mxu0 %v2675
    %3880 = vmatprep.subr.bf16.mxu0 %v2668
    %3881 = vmatpush1.bf16.msra.mxu0 %v2667
    %3882 = vmatprep.subr.bf16.mxu0 %v2660
    %3883 = vmatpush1.bf16.msra.mxu0 %v2659
    %3884 = vmatprep.subr.bf16.mxu0 %v2652
    %3885 = vmatpush1.bf16.msra.mxu0 %v2651
    %3886 = vmatprep.subr.bf16.mxu0 %v2644
    %3887 = vmatpush1.bf16.msra.mxu0 %v2643
    %3888 = vmatprep.subr.bf16.mxu0 %v2636
    %3889 = vmatpush1.bf16.msra.mxu0 %v2635
    %3890 = vmatprep.subr.bf16.mxu0 %v2628
    %3891 = vmatpush1.bf16.msra.mxu0 %v2627
    %3892 = vmatprep.subr.bf16.mxu0 %v2748
    %3893 = vmatpush2.bf16.msra.mxu0 %v2747
    %3894 = vmatprep.subr.bf16.mxu0 %v2740
    %3895 = vmatpush2.bf16.msra.mxu0 %v2739
    %3896 = vmatprep.subr.bf16.mxu0 %v2732
    %3897 = vmatpush2.bf16.msra.mxu0 %v2731
    %3898 = vmatprep.subr.bf16.mxu0 %v2724
    %3899 = vmatpush2.bf16.msra.mxu0 %v2723
    %3900 = vmatprep.subr.bf16.mxu0 %v2716
    %3901 = vmatpush2.bf16.msra.mxu0 %v2715
    %3902 = vmatprep.subr.bf16.mxu0 %v2708
    %3903 = vmatpush2.bf16.msra.mxu0 %v2707
    %3904 = vmatprep.subr.bf16.mxu0 %v2700
    %3905 = vmatpush2.bf16.msra.mxu0 %v2699
    %3906 = vmatprep.subr.bf16.mxu0 %v2692
    %3907 = vmatpush2.bf16.msra.mxu0 %v2691
    %3908 = vmatprep.mubr.bf16.mxu0 %v692
    %3909 = vmatmul.mubr.bf16.gmra.mxu0 %v691
    %v3910 = vpop.f32.mrf.mxu0
    %v3911 = vadd.f32 %v3870, %v3910
    %v3912 = vpop.f32.mrf.mxu0
    %v3913 = vadd.f32 %v3872, %v3912
    %v3914 = vpop.f32.mrf.mxu0
    %v3915 = vpop.f32.mrf.mxu0
    %3916 = vdwg.mxu0
    %v3917 = vld [vmem:[#allocation4] sm:$0xff]
    %v3918 = vld [vmem:[#allocation4 + $0x8] sm:$0xff]
    %v3919 = vld [vmem:[#allocation4 + $0x10] sm:$0xff]
    %v3920 = vld [vmem:[#allocation4 + $0x18] sm:$0xff]
    %v3921 = vld [vmem:[#allocation4 + $0x20] sm:$0xff]
    %v3922 = vld [vmem:[#allocation4 + $0x28] sm:$0xff]
    %v3923 = vld [vmem:[#allocation4 + $0x30] sm:$0xff]
    %v3924 = vld [vmem:[#allocation4 + $0x38] sm:$0xff]
    %v3925 = vld [vmem:[#allocation6] sm:$0xff]
    %v3927 = vlaneseq
    %v3928 = vshrl.u32 %v3927, 7
    %v3929 = vsub.s32 0, %v3928
    %v3930 = vrot.slane %v3925, %v3929
    %v3931 = vlaneseq
    %v3932 = vshrl.u32 %v3931, 7
    %v3933 = vsub.s32 1, %v3932
    %v3934 = vrot.slane %v3925, %v3933
    %v3935 = vlaneseq
    %v3936 = vshrl.u32 %v3935, 7
    %v3937 = vsub.s32 2, %v3936
    %v3938 = vrot.slane %v3925, %v3937
    %v3939 = vlaneseq
    %v3940 = vshrl.u32 %v3939, 7
    %v3941 = vsub.s32 3, %v3940
    %v3942 = vrot.slane %v3925, %v3941
    %v3943 = vlaneseq
    %v3944 = vshrl.u32 %v3943, 7
    %v3945 = vsub.s32 4, %v3944
    %v3946 = vrot.slane %v3925, %v3945
    %v3947 = vlaneseq
    %v3948 = vshrl.u32 %v3947, 7
    %v3949 = vsub.s32 5, %v3948
    %v3950 = vrot.slane %v3925, %v3949
    %v3951 = vlaneseq
    %v3952 = vshrl.u32 %v3951, 7
    %v3953 = vsub.s32 6, %v3952
    %v3954 = vrot.slane %v3925, %v3953
    %v3955 = vlaneseq
    %v3956 = vshrl.u32 %v3955, 7
    %v3957 = vsub.s32 7, %v3956
    %v3958 = vrot.slane %v3925, %v3957
    %v3967 = vsub.f32 %v3917, %v3930
    %v3968 = vsub.f32 %v3918, %v3934
    %v3969 = vsub.f32 %v3919, %v3938
    %v3970 = vsub.f32 %v3920, %v3942
    %v3971 = vsub.f32 %v3921, %v3946
    %v3972 = vsub.f32 %v3922, %v3950
    %v3973 = vsub.f32 %v3923, %v3954
    %v3974 = vsub.f32 %v3924, %v3958
    %v3975 = vld [vmem:[#allocation3] sm:$0xff]
    %v3976 = vmul.f32 %v3419, %v3967
    %v3977 = vmul.f32 %v3421, %v3968
    %v3978 = vmul.f32 %v3583, %v3969
    %v3979 = vmul.f32 %v3585, %v3970
    %v3980 = vmul.f32 %v3747, %v3971
    %v3981 = vmul.f32 %v3749, %v3972
    %v3982 = vmul.f32 %v3911, %v3973
    %v3983 = vmul.f32 %v3913, %v3974
    %v3984 = vadd.f32 %v3976, %v3977
    %v3985 = vadd.f32 %v3984, %v3978
    %v3986 = vadd.f32 %v3985, %v3979
    %v3987 = vadd.f32 %v3986, %v3980
    %v3988 = vadd.f32 %v3987, %v3981
    %v3989 = vadd.f32 %v3988, %v3982
    %v3990 = vadd.f32 %v3989, %v3983
    %3991 = vadd.xlane.f32.xlu0 %v3990
    %v3992 = vpop.xlane.xlu0 %3991
    %v3993 = vadd.f32 %v3975, %v3992
    %vm3994 = vcmask 7168
    %3995 = vst.msk [vmem:[#allocation3] sm:$0xff] %vm3994, %v3993
    // Predicated region
    $region30: #{tpu_custom_call.1} parent=1 // pred_check
      %p3996 = pneg %p57
    $region31: #{tpu_custom_call.1} parent=1 // pred_check_branch
      %3998 = sbr.rel (%p3996) target = $region33
    $region32: #{tpu_custom_call.1} parent=1 // pred_region
      %v3999 = vld [vmem:[#allocation3] sm:$0xff]
      %4000 = vst.msk [vmem:[%s3] sm:$0xff] %vm3994, %v3999
    $region33: #{tpu_custom_call.1} parent=1 // pred_fallthru
      _
    // Predicated region
    $region34: #{tpu_custom_call.1} parent=1 // pred_check
      _
    $region35: #{tpu_custom_call.1} parent=1 // pred_check_branch
      %4002 = sbr.rel (0) target = $region37
    $region36: #{tpu_custom_call.1} parent=1 // pred_region
      _
    $region37: #{tpu_custom_call.1} parent=1 // pred_fallthru
      _
    // Predicated region
    $region38: #{tpu_custom_call.1} parent=1 // pred_check
      _
    $region39: #{tpu_custom_call.1} parent=1 // pred_check_branch
      %4004 = sbr.rel (0) target = $region41
    $region40: #{tpu_custom_call.1} parent=1 // pred_region
      _
    $region41: #{tpu_custom_call.1} parent=1 // pred_fallthru
      _
    %4005 = vsyncpa [#allocation5], 1
    %4006 = vsyncpa [#allocation7], 1

</llo_original>
